<compile_context>
chip_gen: v7x
topology: tpu7x:2x2x1
jax: 0.10.0
libtpu: 0.0.40
codegen_flags: <defaults>
</compile_context>

<pallas_src>
import functools

import jax
import jax.numpy as jnp
from jax.experimental import pallas as pl
from jax.experimental.pallas import tpu as pltpu

INPUT_DIM = 1
HIDDEN_DIM = 32
NUM_LAYERS = 3
OUTPUT_DIM = 1

# Packed-slab row layout (lane width = 4*HIDDEN_DIM = 128, rows 8-aligned for
# the (H, 4H) matmul weight blocks so slices never straddle sublane tiles):
#   row 0            : layer-0 input weights w_ih0 (1, 4H)   [g-cols pre-scaled x2]
#   rows 1..3        : per-layer folded biases b_ih + b_hh   [g-cols pre-scaled x2]
#   row 4            : fc weight in lanes [0, H)
#   row 5            : fc bias in lane 0
#   rows 8 + 32*k    : (H, 4H) weight blocks, order [W_hh0, W_ih1, W_hh1, W_ih2, W_hh2]
_ROW_WIH0 = 0
_ROW_BIAS = 1
_ROW_WFC = 4
_ROW_BFC = 5
_ROW_WBASE = 8
_SLAB_ROWS = _ROW_WBASE + (2 * NUM_LAYERS - 1) * HIDDEN_DIM      # 168


def _lstm_kernel(x_ref, slab_ref, out_ref, *, seq_len, num_layers, hidden_dim):
    H, T, L = hidden_dim, seq_len, num_layers
    G = 4 * H
    B = x_ref.shape[0]

    x = x_ref[...]                                        # (B, T)

    # Float mask selecting the tanh ("g") quarter of the [i, f, g, o] gates,
    # used for the tanh(x) = 2*sigmoid(2x) - 1 fix-up (single masked FMA).
    lane = jax.lax.broadcasted_iota(jnp.int32, (B, G), 1)
    g_maskf = ((lane >= 2 * H) & (lane < 3 * H)).astype(jnp.float32)
    one_plus_g = 1.0 + g_maskf

    def w_block(k):
        # (H, 4H) weight block k, read at use site (keeps vreg pressure low).
        r = _ROW_WBASE + k * H
        return slab_ref[r:r + H, :]

    w_ih0 = slab_ref[_ROW_WIH0:_ROW_WIH0 + 1, :]          # (1, 4H), g-scaled
    b_layers = [slab_ref[_ROW_BIAS + l:_ROW_BIAS + l + 1, :] for l in range(L)]

    # Layer-0 input contribution for all timesteps: rank-1 VPU broadcast
    # (input_dim == 1), no loop-carried dependence -> fully off the chain.
    x_contrib = [x[:, t:t + 1] * w_ih0 + b_layers[0] for t in range(T)]

    h = [jnp.zeros((B, H), jnp.float32) for _ in range(L)]
    c = [jnp.zeros((B, H), jnp.float32) for _ in range(L)]

    def cell(gates, c_prev):
        # ONE sigmoid over the full (B, 4H) vreg; g quarter (pre-scaled by 2 in
        # the packed weights) becomes 2*sigmoid(2x) - 1 == tanh(x).
        sig = jax.nn.sigmoid(gates)
        act = sig * one_plus_g - g_maskf
        i_g = act[:, 0 * H:1 * H]
        f_g = act[:, 1 * H:2 * H]
        g_g = act[:, 2 * H:3 * H]
        o_g = act[:, 3 * H:4 * H]
        c_new = f_g * c_prev + i_g * g_g
        h_new = o_g * jnp.tanh(c_new)
        return h_new, c_new

    for t in range(T):                       # static full unroll (T is small)
        # ---- layer 0: only the W_hh0 @ h0 dot sits on the recurrence ----
        gates = x_contrib[t] + jnp.dot(h[0], w_block(0),
                                       preferred_element_type=jnp.float32)
        h[0], c[0] = cell(gates, c[0])
        inp = h[0]
        # ---- layers 1..L-1: two SEPARATE dots; the W_hh @ h_{t-1} term has
        # no dependence on this timestep's lower layers, so it can be hoisted
        # by the scheduler off the critical path. ----
        for layer in range(1, L):
            rec = jnp.dot(h[layer], w_block(2 * layer),
                          preferred_element_type=jnp.float32)
            gates = (jnp.dot(inp, w_block(2 * layer - 1),
                             preferred_element_type=jnp.float32)
                     + rec + b_layers[layer])
            h[layer], c[layer] = cell(gates, c[layer])
            inp = h[layer]

    # FC head: VPU multiply + lane reduction (no tiny MXU matmul).
    w_fc = slab_ref[_ROW_WFC:_ROW_WFC + 1, 0:H]           # (1, H)
    b_fc = slab_ref[_ROW_BFC:_ROW_BFC + 1, 0:1]           # (1, 1)
    out = jnp.sum(inp * w_fc, axis=-1, keepdims=True) + b_fc
    out_ref[...] = out.astype(out_ref.dtype)


def lstm_forward(x, slab):
    """x: (B, T, 1) float32, slab: packed params -> (B, OUTPUT_DIM) float32."""
    B, T, Din = x.shape
    assert Din == INPUT_DIM == 1
    x2 = x.reshape(B, T)            # drop size-1 feature dim (no pad/transpose)

    kernel = functools.partial(_lstm_kernel, seq_len=T,
                               num_layers=NUM_LAYERS, hidden_dim=HIDDEN_DIM)

    return pl.pallas_call(
        kernel,
        out_shape=jax.ShapeDtypeStruct((B, OUTPUT_DIM), jnp.float32),
        in_specs=[pl.BlockSpec(memory_space=pltpu.MemorySpace.VMEM)] * 2,
        out_specs=pl.BlockSpec(memory_space=pltpu.MemorySpace.VMEM),
    )(x2, slab)


def init_params(key):
    """Deterministic init mirroring nn.LSTM / nn.Linear shapes.

    Returns the 'natural' (unscaled, unfused) parameters:
      w_ih: list of (in_dim, 4H), w_hh: list of (H, 4H),
      b: list of (4H,) folded (b_ih + b_hh), w_fc: (O, H), b_fc: (O,).
    """
    H, L, Din, O = HIDDEN_DIM, NUM_LAYERS, INPUT_DIM, OUTPUT_DIM
    bound = 1.0 / jnp.sqrt(jnp.float32(H))
    keys = jax.random.split(key, 4 * L + 2)

    w_ih_list, w_hh_list, b_list = [], [], []
    for layer in range(L):
        k_ih, k_hh, k_bih, k_bhh = keys[4 * layer:4 * layer + 4]
        in_dim = Din if layer == 0 else H
        w_ih = jax.random.uniform(k_ih, (in_dim, 4 * H), jnp.float32,
                                  -bound, bound)
        w_hh = jax.random.uniform(k_hh, (H, 4 * H), jnp.float32, -bound, bound)
        b_ih = jax.random.uniform(k_bih, (4 * H,), jnp.float32, -bound, bound)
        b_hh = jax.random.uniform(k_bhh, (4 * H,), jnp.float32, -bound, bound)
        w_ih_list.append(w_ih)
        w_hh_list.append(w_hh)
        b_list.append(b_ih + b_hh)

    w_fc = jax.random.uniform(keys[-2], (O, H), jnp.float32, -bound, bound)
    b_fc = jax.random.uniform(keys[-1], (O,), jnp.float32, -bound, bound)
    return (w_ih_list, w_hh_list, b_list, w_fc, b_fc)


def pack_params(params):
    """Pack all weights/biases into one (168, 128) f32 slab (single DMA),
    with the g-gate columns pre-scaled by 2 for tanh(x) = 2*sigmoid(2x) - 1."""
    w_ih_list, w_hh_list, b_list, w_fc, b_fc = params
    H, L, G = HIDDEN_DIM, NUM_LAYERS, 4 * HIDDEN_DIM

    g_scale = jnp.ones((G,), jnp.float32).at[2 * H:3 * H].set(2.0)

    slab = jnp.zeros((_SLAB_ROWS, G), jnp.float32)
    slab = slab.at[_ROW_WIH0, :].set(w_ih_list[0][0] * g_scale)
    for l in range(L):
        slab = slab.at[_ROW_BIAS + l, :].set(b_list[l] * g_scale)
    slab = slab.at[_ROW_WFC, :H].set(w_fc[0])
    slab = slab.at[_ROW_BFC, 0].set(b_fc[0])

    blocks = [w_hh_list[0]]
    for l in range(1, L):
        blocks += [w_ih_list[l], w_hh_list[l]]
    for k, w in enumerate(blocks):
        r = _ROW_WBASE + k * H
        slab = slab.at[r:r + H, :].set(w * g_scale[None, :])
    return slab


def lstm_reference(x, params):
    """Pure-JAX reference of the same stacked-LSTM forward (for verification)."""
    w_ih_list, w_hh_list, b_list, w_fc, b_fc = params
    B, T, _ = x.shape
    H, L = HIDDEN_DIM, NUM_LAYERS
    x_tm = jnp.transpose(x, (1, 0, 2))                    # (T, B, 1)

    def step(carry, x_t):
        h, c = carry
        new_h, new_c = [], []
        inp = x_t
        for layer in range(L):
            gates = (inp @ w_ih_list[layer] + h[layer] @ w_hh_list[layer]
                     + b_list[layer])
            i_g = jax.nn.sigmoid(gates[:, 0 * H:1 * H])
            f_g = jax.nn.sigmoid(gates[:, 1 * H:2 * H])
            g_g = jnp.tanh(gates[:, 2 * H:3 * H])
            o_g = jax.nn.sigmoid(gates[:, 3 * H:4 * H])
            c_n = f_g * c[layer] + i_g * g_g
            h_n = o_g * jnp.tanh(c_n)
            new_h.append(h_n)
            new_c.append(c_n)
            inp = h_n
        return (new_h, new_c), inp

    h0 = [jnp.zeros((B, H), jnp.float32) for _ in range(L)]
    c0 = [jnp.zeros((B, H), jnp.float32) for _ in range(L)]
    (_, _), outs = jax.lax.scan(step, (h0, c0), x_tm)
    return outs[-1] @ w_fc.T + b_fc


if __name__ == "__main__":
    key = jax.random.PRNGKey(0)
    k_param, k_x = jax.random.split(key)

    B, T = 2, 8
    x = jax.random.normal(k_x, (B, T, INPUT_DIM), jnp.float32)
    params = init_params(k_param)
    slab = pack_params(params)

    fwd = jax.jit(lstm_forward)
    out = jax.block_until_ready(fwd(x, slab))

    ref = lstm_reference(x, params)
    assert out.shape == (B, OUTPUT_DIM)
    assert jnp.allclose(out, ref, atol=1e-5, rtol=1e-5), (out, ref)

    print("KERNEL_OK")
</pallas_src>

<mosaic_0001>
module attributes {stable_mosaic.version = 11 : i64} {
  func.func @_lstm_kernel(%arg0: memref<2x8xf32, #tpu.memory_space<vmem>>, %arg1: memref<168x128xf32, #tpu.memory_space<vmem>>, %arg2: memref<2x1xf32, #tpu.memory_space<vmem>>) attributes {dimension_semantics = [], scalar_prefetch = 0 : i64, scratch_operands = 0 : i64, tpu.core_type = #tpu.core_type<tc>} {
    %c0 = arith.constant 0 : index
    %c0_0 = arith.constant 0 : index
    %0 = vector.load %arg0[%c0, %c0_0] : memref<2x8xf32, #tpu.memory_space<vmem>>, vector<2x8xf32>
    %1 = tpu.iota {dimensions = array<i32: 1>} : vector<2x128xi32>
    %c64_i32 = arith.constant 64 : i32
    %2 = vector.broadcast %c64_i32 : i32 to vector<2x128xi32>
    %3 = arith.cmpi sge, %1, %2 : vector<2x128xi32>
    %c96_i32 = arith.constant 96 : i32
    %4 = vector.broadcast %c96_i32 : i32 to vector<2x128xi32>
    %5 = arith.cmpi slt, %1, %4 : vector<2x128xi32>
    %6 = arith.andi %3, %5 : vector<2x128xi1>
    %7 = arith.extui %6 : vector<2x128xi1> to vector<2x128xi32>
    %8 = arith.sitofp %7 : vector<2x128xi32> to vector<2x128xf32>
    %cst = arith.constant 1.000000e+00 : f32
    %9 = vector.broadcast %cst : f32 to vector<2x128xf32>
    %10 = arith.addf %9, %8 : vector<2x128xf32>
    %c0_1 = arith.constant 0 : index
    %c0_2 = arith.constant 0 : index
    %11 = vector.load %arg1[%c0_1, %c0_2] : memref<168x128xf32, #tpu.memory_space<vmem>>, vector<1x128xf32>
    %c1 = arith.constant 1 : index
    %c0_3 = arith.constant 0 : index
    %12 = vector.load %arg1[%c1, %c0_3] : memref<168x128xf32, #tpu.memory_space<vmem>>, vector<1x128xf32>
    %c2 = arith.constant 2 : index
    %c0_4 = arith.constant 0 : index
    %13 = vector.load %arg1[%c2, %c0_4] : memref<168x128xf32, #tpu.memory_space<vmem>>, vector<1x128xf32>
    %c3 = arith.constant 3 : index
    %c0_5 = arith.constant 0 : index
    %14 = vector.load %arg1[%c3, %c0_5] : memref<168x128xf32, #tpu.memory_space<vmem>>, vector<1x128xf32>
    %15 = vector.extract_strided_slice %0 {offsets = [0, 0], sizes = [2, 1], strides = [1, 1]} : vector<2x8xf32> to vector<2x1xf32>
    %16 = vector.broadcast %15 : vector<2x1xf32> to vector<2x128xf32>
    %17 = vector.broadcast %11 : vector<1x128xf32> to vector<2x128xf32>
    %18 = arith.mulf %16, %17 : vector<2x128xf32>
    %19 = vector.broadcast %12 : vector<1x128xf32> to vector<2x128xf32>
    %20 = arith.addf %18, %19 : vector<2x128xf32>
    %21 = vector.extract_strided_slice %0 {offsets = [0, 1], sizes = [2, 1], strides = [1, 1]} : vector<2x8xf32> to vector<2x1xf32>
    %22 = vector.broadcast %21 : vector<2x1xf32> to vector<2x128xf32>
    %23 = vector.broadcast %11 : vector<1x128xf32> to vector<2x128xf32>
    %24 = arith.mulf %22, %23 : vector<2x128xf32>
    %25 = vector.broadcast %12 : vector<1x128xf32> to vector<2x128xf32>
    %26 = arith.addf %24, %25 : vector<2x128xf32>
    %27 = vector.extract_strided_slice %0 {offsets = [0, 2], sizes = [2, 1], strides = [1, 1]} : vector<2x8xf32> to vector<2x1xf32>
    %28 = vector.broadcast %27 : vector<2x1xf32> to vector<2x128xf32>
    %29 = vector.broadcast %11 : vector<1x128xf32> to vector<2x128xf32>
    %30 = arith.mulf %28, %29 : vector<2x128xf32>
    %31 = vector.broadcast %12 : vector<1x128xf32> to vector<2x128xf32>
    %32 = arith.addf %30, %31 : vector<2x128xf32>
    %33 = vector.extract_strided_slice %0 {offsets = [0, 3], sizes = [2, 1], strides = [1, 1]} : vector<2x8xf32> to vector<2x1xf32>
    %34 = vector.broadcast %33 : vector<2x1xf32> to vector<2x128xf32>
    %35 = vector.broadcast %11 : vector<1x128xf32> to vector<2x128xf32>
    %36 = arith.mulf %34, %35 : vector<2x128xf32>
    %37 = vector.broadcast %12 : vector<1x128xf32> to vector<2x128xf32>
    %38 = arith.addf %36, %37 : vector<2x128xf32>
    %39 = vector.extract_strided_slice %0 {offsets = [0, 4], sizes = [2, 1], strides = [1, 1]} : vector<2x8xf32> to vector<2x1xf32>
    %40 = vector.broadcast %39 : vector<2x1xf32> to vector<2x128xf32>
    %41 = vector.broadcast %11 : vector<1x128xf32> to vector<2x128xf32>
    %42 = arith.mulf %40, %41 : vector<2x128xf32>
    %43 = vector.broadcast %12 : vector<1x128xf32> to vector<2x128xf32>
    %44 = arith.addf %42, %43 : vector<2x128xf32>
    %45 = vector.extract_strided_slice %0 {offsets = [0, 5], sizes = [2, 1], strides = [1, 1]} : vector<2x8xf32> to vector<2x1xf32>
    %46 = vector.broadcast %45 : vector<2x1xf32> to vector<2x128xf32>
    %47 = vector.broadcast %11 : vector<1x128xf32> to vector<2x128xf32>
    %48 = arith.mulf %46, %47 : vector<2x128xf32>
    %49 = vector.broadcast %12 : vector<1x128xf32> to vector<2x128xf32>
    %50 = arith.addf %48, %49 : vector<2x128xf32>
    %51 = vector.extract_strided_slice %0 {offsets = [0, 6], sizes = [2, 1], strides = [1, 1]} : vector<2x8xf32> to vector<2x1xf32>
    %52 = vector.broadcast %51 : vector<2x1xf32> to vector<2x128xf32>
    %53 = vector.broadcast %11 : vector<1x128xf32> to vector<2x128xf32>
    %54 = arith.mulf %52, %53 : vector<2x128xf32>
    %55 = vector.broadcast %12 : vector<1x128xf32> to vector<2x128xf32>
    %56 = arith.addf %54, %55 : vector<2x128xf32>
    %57 = vector.extract_strided_slice %0 {offsets = [0, 7], sizes = [2, 1], strides = [1, 1]} : vector<2x8xf32> to vector<2x1xf32>
    %58 = vector.broadcast %57 : vector<2x1xf32> to vector<2x128xf32>
    %59 = vector.broadcast %11 : vector<1x128xf32> to vector<2x128xf32>
    %60 = arith.mulf %58, %59 : vector<2x128xf32>
    %61 = vector.broadcast %12 : vector<1x128xf32> to vector<2x128xf32>
    %62 = arith.addf %60, %61 : vector<2x128xf32>
    %cst_6 = arith.constant 0.000000e+00 : f32
    %63 = vector.broadcast %cst_6 : f32 to vector<2x32xf32>
    %cst_7 = arith.constant 0.000000e+00 : f32
    %64 = vector.broadcast %cst_7 : f32 to vector<2x32xf32>
    %cst_8 = arith.constant 0.000000e+00 : f32
    %65 = vector.broadcast %cst_8 : f32 to vector<2x32xf32>
    %cst_9 = arith.constant 0.000000e+00 : f32
    %66 = vector.broadcast %cst_9 : f32 to vector<2x32xf32>
    %cst_10 = arith.constant 0.000000e+00 : f32
    %67 = vector.broadcast %cst_10 : f32 to vector<2x32xf32>
    %cst_11 = arith.constant 0.000000e+00 : f32
    %68 = vector.broadcast %cst_11 : f32 to vector<2x32xf32>
    %c8 = arith.constant 8 : index
    %c0_12 = arith.constant 0 : index
    %69 = vector.load %arg1[%c8, %c0_12] : memref<168x128xf32, #tpu.memory_space<vmem>>, vector<32x128xf32>
    %cst_13 = arith.constant dense<0.000000e+00> : vector<2x128xf32>
    %70 = tpu.matmul %63, %69, %cst_13 {dimension_numbers = #tpu.dot_dimension_numbers<[1], [0], [0], [1], [0, 0, 1, 1], [], []>} : vector<2x32xf32>, vector<32x128xf32>, vector<2x128xf32> -> vector<2x128xf32>
    %71 = arith.addf %20, %70 : vector<2x128xf32>
    %72 = arith.negf %71 : vector<2x128xf32>
    %73 = math.exp %72 : vector<2x128xf32>
    %cst_14 = arith.constant 1.000000e+00 : f32
    %74 = vector.broadcast %cst_14 : f32 to vector<2x128xf32>
    %75 = arith.addf %74, %73 : vector<2x128xf32>
    %76 = arith.divf %74, %75 : vector<2x128xf32>
    %77 = arith.mulf %76, %10 : vector<2x128xf32>
    %78 = arith.subf %77, %8 : vector<2x128xf32>
    %79 = vector.extract_strided_slice %78 {offsets = [0, 0], sizes = [2, 32], strides = [1, 1]} : vector<2x128xf32> to vector<2x32xf32>
    %80 = vector.extract_strided_slice %78 {offsets = [0, 32], sizes = [2, 32], strides = [1, 1]} : vector<2x128xf32> to vector<2x32xf32>
    %81 = vector.extract_strided_slice %78 {offsets = [0, 64], sizes = [2, 32], strides = [1, 1]} : vector<2x128xf32> to vector<2x32xf32>
    %82 = vector.extract_strided_slice %78 {offsets = [0, 96], sizes = [2, 32], strides = [1, 1]} : vector<2x128xf32> to vector<2x32xf32>
    %83 = arith.mulf %80, %66 : vector<2x32xf32>
    %84 = arith.mulf %79, %81 : vector<2x32xf32>
    %85 = arith.addf %83, %84 : vector<2x32xf32>
    %86 = math.tanh %85 : vector<2x32xf32>
    %87 = arith.mulf %82, %86 : vector<2x32xf32>
    %c72 = arith.constant 72 : index
    %c0_15 = arith.constant 0 : index
    %88 = vector.load %arg1[%c72, %c0_15] : memref<168x128xf32, #tpu.memory_space<vmem>>, vector<32x128xf32>
    %cst_16 = arith.constant dense<0.000000e+00> : vector<2x128xf32>
    %89 = tpu.matmul %64, %88, %cst_16 {dimension_numbers = #tpu.dot_dimension_numbers<[1], [0], [0], [1], [0, 0, 1, 1], [], []>} : vector<2x32xf32>, vector<32x128xf32>, vector<2x128xf32> -> vector<2x128xf32>
    %c40 = arith.constant 40 : index
    %c0_17 = arith.constant 0 : index
    %90 = vector.load %arg1[%c40, %c0_17] : memref<168x128xf32, #tpu.memory_space<vmem>>, vector<32x128xf32>
    %cst_18 = arith.constant dense<0.000000e+00> : vector<2x128xf32>
    %91 = tpu.matmul %87, %90, %cst_18 {dimension_numbers = #tpu.dot_dimension_numbers<[1], [0], [0], [1], [0, 0, 1, 1], [], []>} : vector<2x32xf32>, vector<32x128xf32>, vector<2x128xf32> -> vector<2x128xf32>
    %92 = arith.addf %91, %89 : vector<2x128xf32>
    %93 = vector.broadcast %13 : vector<1x128xf32> to vector<2x128xf32>
    %94 = arith.addf %92, %93 : vector<2x128xf32>
    %95 = arith.negf %94 : vector<2x128xf32>
    %96 = math.exp %95 : vector<2x128xf32>
    %cst_19 = arith.constant 1.000000e+00 : f32
    %97 = vector.broadcast %cst_19 : f32 to vector<2x128xf32>
    %98 = arith.addf %97, %96 : vector<2x128xf32>
    %99 = arith.divf %97, %98 : vector<2x128xf32>
    %100 = arith.mulf %99, %10 : vector<2x128xf32>
    %101 = arith.subf %100, %8 : vector<2x128xf32>
    %102 = vector.extract_strided_slice %101 {offsets = [0, 0], sizes = [2, 32], strides = [1, 1]} : vector<2x128xf32> to vector<2x32xf32>
    %103 = vector.extract_strided_slice %101 {offsets = [0, 32], sizes = [2, 32], strides = [1, 1]} : vector<2x128xf32> to vector<2x32xf32>
    %104 = vector.extract_strided_slice %101 {offsets = [0, 64], sizes = [2, 32], strides = [1, 1]} : vector<2x128xf32> to vector<2x32xf32>
    %105 = vector.extract_strided_slice %101 {offsets = [0, 96], sizes = [2, 32], strides = [1, 1]} : vector<2x128xf32> to vector<2x32xf32>
    %106 = arith.mulf %103, %67 : vector<2x32xf32>
    %107 = arith.mulf %102, %104 : vector<2x32xf32>
    %108 = arith.addf %106, %107 : vector<2x32xf32>
    %109 = math.tanh %108 : vector<2x32xf32>
    %110 = arith.mulf %105, %109 : vector<2x32xf32>
    %c136 = arith.constant 136 : index
    %c0_20 = arith.constant 0 : index
    %111 = vector.load %arg1[%c136, %c0_20] : memref<168x128xf32, #tpu.memory_space<vmem>>, vector<32x128xf32>
    %cst_21 = arith.constant dense<0.000000e+00> : vector<2x128xf32>
    %112 = tpu.matmul %65, %111, %cst_21 {dimension_numbers = #tpu.dot_dimension_numbers<[1], [0], [0], [1], [0, 0, 1, 1], [], []>} : vector<2x32xf32>, vector<32x128xf32>, vector<2x128xf32> -> vector<2x128xf32>
    %c104 = arith.constant 104 : index
    %c0_22 = arith.constant 0 : index
    %113 = vector.load %arg1[%c104, %c0_22] : memref<168x128xf32, #tpu.memory_space<vmem>>, vector<32x128xf32>
    %cst_23 = arith.constant dense<0.000000e+00> : vector<2x128xf32>
    %114 = tpu.matmul %110, %113, %cst_23 {dimension_numbers = #tpu.dot_dimension_numbers<[1], [0], [0], [1], [0, 0, 1, 1], [], []>} : vector<2x32xf32>, vector<32x128xf32>, vector<2x128xf32> -> vector<2x128xf32>
    %115 = arith.addf %114, %112 : vector<2x128xf32>
    %116 = vector.broadcast %14 : vector<1x128xf32> to vector<2x128xf32>
    %117 = arith.addf %115, %116 : vector<2x128xf32>
    %118 = arith.negf %117 : vector<2x128xf32>
    %119 = math.exp %118 : vector<2x128xf32>
    %cst_24 = arith.constant 1.000000e+00 : f32
    %120 = vector.broadcast %cst_24 : f32 to vector<2x128xf32>
    %121 = arith.addf %120, %119 : vector<2x128xf32>
    %122 = arith.divf %120, %121 : vector<2x128xf32>
    %123 = arith.mulf %122, %10 : vector<2x128xf32>
    %124 = arith.subf %123, %8 : vector<2x128xf32>
    %125 = vector.extract_strided_slice %124 {offsets = [0, 0], sizes = [2, 32], strides = [1, 1]} : vector<2x128xf32> to vector<2x32xf32>
    %126 = vector.extract_strided_slice %124 {offsets = [0, 32], sizes = [2, 32], strides = [1, 1]} : vector<2x128xf32> to vector<2x32xf32>
    %127 = vector.extract_strided_slice %124 {offsets = [0, 64], sizes = [2, 32], strides = [1, 1]} : vector<2x128xf32> to vector<2x32xf32>
    %128 = vector.extract_strided_slice %124 {offsets = [0, 96], sizes = [2, 32], strides = [1, 1]} : vector<2x128xf32> to vector<2x32xf32>
    %129 = arith.mulf %126, %68 : vector<2x32xf32>
    %130 = arith.mulf %125, %127 : vector<2x32xf32>
    %131 = arith.addf %129, %130 : vector<2x32xf32>
    %132 = math.tanh %131 : vector<2x32xf32>
    %133 = arith.mulf %128, %132 : vector<2x32xf32>
    %c8_25 = arith.constant 8 : index
    %c0_26 = arith.constant 0 : index
    %134 = vector.load %arg1[%c8_25, %c0_26] : memref<168x128xf32, #tpu.memory_space<vmem>>, vector<32x128xf32>
    %cst_27 = arith.constant dense<0.000000e+00> : vector<2x128xf32>
    %135 = tpu.matmul %87, %134, %cst_27 {dimension_numbers = #tpu.dot_dimension_numbers<[1], [0], [0], [1], [0, 0, 1, 1], [], []>} : vector<2x32xf32>, vector<32x128xf32>, vector<2x128xf32> -> vector<2x128xf32>
    %136 = arith.addf %26, %135 : vector<2x128xf32>
    %137 = arith.negf %136 : vector<2x128xf32>
    %138 = math.exp %137 : vector<2x128xf32>
    %cst_28 = arith.constant 1.000000e+00 : f32
    %139 = vector.broadcast %cst_28 : f32 to vector<2x128xf32>
    %140 = arith.addf %139, %138 : vector<2x128xf32>
    %141 = arith.divf %139, %140 : vector<2x128xf32>
    %142 = arith.mulf %141, %10 : vector<2x128xf32>
    %143 = arith.subf %142, %8 : vector<2x128xf32>
    %144 = vector.extract_strided_slice %143 {offsets = [0, 0], sizes = [2, 32], strides = [1, 1]} : vector<2x128xf32> to vector<2x32xf32>
    %145 = vector.extract_strided_slice %143 {offsets = [0, 32], sizes = [2, 32], strides = [1, 1]} : vector<2x128xf32> to vector<2x32xf32>
    %146 = vector.extract_strided_slice %143 {offsets = [0, 64], sizes = [2, 32], strides = [1, 1]} : vector<2x128xf32> to vector<2x32xf32>
    %147 = vector.extract_strided_slice %143 {offsets = [0, 96], sizes = [2, 32], strides = [1, 1]} : vector<2x128xf32> to vector<2x32xf32>
    %148 = arith.mulf %145, %85 : vector<2x32xf32>
    %149 = arith.mulf %144, %146 : vector<2x32xf32>
    %150 = arith.addf %148, %149 : vector<2x32xf32>
    %151 = math.tanh %150 : vector<2x32xf32>
    %152 = arith.mulf %147, %151 : vector<2x32xf32>
    %c72_29 = arith.constant 72 : index
    %c0_30 = arith.constant 0 : index
    %153 = vector.load %arg1[%c72_29, %c0_30] : memref<168x128xf32, #tpu.memory_space<vmem>>, vector<32x128xf32>
    %cst_31 = arith.constant dense<0.000000e+00> : vector<2x128xf32>
    %154 = tpu.matmul %110, %153, %cst_31 {dimension_numbers = #tpu.dot_dimension_numbers<[1], [0], [0], [1], [0, 0, 1, 1], [], []>} : vector<2x32xf32>, vector<32x128xf32>, vector<2x128xf32> -> vector<2x128xf32>
    %c40_32 = arith.constant 40 : index
    %c0_33 = arith.constant 0 : index
    %155 = vector.load %arg1[%c40_32, %c0_33] : memref<168x128xf32, #tpu.memory_space<vmem>>, vector<32x128xf32>
    %cst_34 = arith.constant dense<0.000000e+00> : vector<2x128xf32>
    %156 = tpu.matmul %152, %155, %cst_34 {dimension_numbers = #tpu.dot_dimension_numbers<[1], [0], [0], [1], [0, 0, 1, 1], [], []>} : vector<2x32xf32>, vector<32x128xf32>, vector<2x128xf32> -> vector<2x128xf32>
    %157 = arith.addf %156, %154 : vector<2x128xf32>
    %158 = vector.broadcast %13 : vector<1x128xf32> to vector<2x128xf32>
    %159 = arith.addf %157, %158 : vector<2x128xf32>
    %160 = arith.negf %159 : vector<2x128xf32>
    %161 = math.exp %160 : vector<2x128xf32>
    %cst_35 = arith.constant 1.000000e+00 : f32
    %162 = vector.broadcast %cst_35 : f32 to vector<2x128xf32>
    %163 = arith.addf %162, %161 : vector<2x128xf32>
    %164 = arith.divf %162, %163 : vector<2x128xf32>
    %165 = arith.mulf %164, %10 : vector<2x128xf32>
    %166 = arith.subf %165, %8 : vector<2x128xf32>
    %167 = vector.extract_strided_slice %166 {offsets = [0, 0], sizes = [2, 32], strides = [1, 1]} : vector<2x128xf32> to vector<2x32xf32>
    %168 = vector.extract_strided_slice %166 {offsets = [0, 32], sizes = [2, 32], strides = [1, 1]} : vector<2x128xf32> to vector<2x32xf32>
    %169 = vector.extract_strided_slice %166 {offsets = [0, 64], sizes = [2, 32], strides = [1, 1]} : vector<2x128xf32> to vector<2x32xf32>
    %170 = vector.extract_strided_slice %166 {offsets = [0, 96], sizes = [2, 32], strides = [1, 1]} : vector<2x128xf32> to vector<2x32xf32>
    %171 = arith.mulf %168, %108 : vector<2x32xf32>
    %172 = arith.mulf %167, %169 : vector<2x32xf32>
    %173 = arith.addf %171, %172 : vector<2x32xf32>
    %174 = math.tanh %173 : vector<2x32xf32>
    %175 = arith.mulf %170, %174 : vector<2x32xf32>
    %c136_36 = arith.constant 136 : index
    %c0_37 = arith.constant 0 : index
    %176 = vector.load %arg1[%c136_36, %c0_37] : memref<168x128xf32, #tpu.memory_space<vmem>>, vector<32x128xf32>
    %cst_38 = arith.constant dense<0.000000e+00> : vector<2x128xf32>
    %177 = tpu.matmul %133, %176, %cst_38 {dimension_numbers = #tpu.dot_dimension_numbers<[1], [0], [0], [1], [0, 0, 1, 1], [], []>} : vector<2x32xf32>, vector<32x128xf32>, vector<2x128xf32> -> vector<2x128xf32>
    %c104_39 = arith.constant 104 : index
    %c0_40 = arith.constant 0 : index
    %178 = vector.load %arg1[%c104_39, %c0_40] : memref<168x128xf32, #tpu.memory_space<vmem>>, vector<32x128xf32>
    %cst_41 = arith.constant dense<0.000000e+00> : vector<2x128xf32>
    %179 = tpu.matmul %175, %178, %cst_41 {dimension_numbers = #tpu.dot_dimension_numbers<[1], [0], [0], [1], [0, 0, 1, 1], [], []>} : vector<2x32xf32>, vector<32x128xf32>, vector<2x128xf32> -> vector<2x128xf32>
    %180 = arith.addf %179, %177 : vector<2x128xf32>
    %181 = vector.broadcast %14 : vector<1x128xf32> to vector<2x128xf32>
    %182 = arith.addf %180, %181 : vector<2x128xf32>
    %183 = arith.negf %182 : vector<2x128xf32>
    %184 = math.exp %183 : vector<2x128xf32>
    %cst_42 = arith.constant 1.000000e+00 : f32
    %185 = vector.broadcast %cst_42 : f32 to vector<2x128xf32>
    %186 = arith.addf %185, %184 : vector<2x128xf32>
    %187 = arith.divf %185, %186 : vector<2x128xf32>
    %188 = arith.mulf %187, %10 : vector<2x128xf32>
    %189 = arith.subf %188, %8 : vector<2x128xf32>
    %190 = vector.extract_strided_slice %189 {offsets = [0, 0], sizes = [2, 32], strides = [1, 1]} : vector<2x128xf32> to vector<2x32xf32>
    %191 = vector.extract_strided_slice %189 {offsets = [0, 32], sizes = [2, 32], strides = [1, 1]} : vector<2x128xf32> to vector<2x32xf32>
    %192 = vector.extract_strided_slice %189 {offsets = [0, 64], sizes = [2, 32], strides = [1, 1]} : vector<2x128xf32> to vector<2x32xf32>
    %193 = vector.extract_strided_slice %189 {offsets = [0, 96], sizes = [2, 32], strides = [1, 1]} : vector<2x128xf32> to vector<2x32xf32>
    %194 = arith.mulf %191, %131 : vector<2x32xf32>
    %195 = arith.mulf %190, %192 : vector<2x32xf32>
    %196 = arith.addf %194, %195 : vector<2x32xf32>
    %197 = math.tanh %196 : vector<2x32xf32>
    %198 = arith.mulf %193, %197 : vector<2x32xf32>
    %c8_43 = arith.constant 8 : index
    %c0_44 = arith.constant 0 : index
    %199 = vector.load %arg1[%c8_43, %c0_44] : memref<168x128xf32, #tpu.memory_space<vmem>>, vector<32x128xf32>
    %cst_45 = arith.constant dense<0.000000e+00> : vector<2x128xf32>
    %200 = tpu.matmul %152, %199, %cst_45 {dimension_numbers = #tpu.dot_dimension_numbers<[1], [0], [0], [1], [0, 0, 1, 1], [], []>} : vector<2x32xf32>, vector<32x128xf32>, vector<2x128xf32> -> vector<2x128xf32>
    %201 = arith.addf %32, %200 : vector<2x128xf32>
    %202 = arith.negf %201 : vector<2x128xf32>
    %203 = math.exp %202 : vector<2x128xf32>
    %cst_46 = arith.constant 1.000000e+00 : f32
    %204 = vector.broadcast %cst_46 : f32 to vector<2x128xf32>
    %205 = arith.addf %204, %203 : vector<2x128xf32>
    %206 = arith.divf %204, %205 : vector<2x128xf32>
    %207 = arith.mulf %206, %10 : vector<2x128xf32>
    %208 = arith.subf %207, %8 : vector<2x128xf32>
    %209 = vector.extract_strided_slice %208 {offsets = [0, 0], sizes = [2, 32], strides = [1, 1]} : vector<2x128xf32> to vector<2x32xf32>
    %210 = vector.extract_strided_slice %208 {offsets = [0, 32], sizes = [2, 32], strides = [1, 1]} : vector<2x128xf32> to vector<2x32xf32>
    %211 = vector.extract_strided_slice %208 {offsets = [0, 64], sizes = [2, 32], strides = [1, 1]} : vector<2x128xf32> to vector<2x32xf32>
    %212 = vector.extract_strided_slice %208 {offsets = [0, 96], sizes = [2, 32], strides = [1, 1]} : vector<2x128xf32> to vector<2x32xf32>
    %213 = arith.mulf %210, %150 : vector<2x32xf32>
    %214 = arith.mulf %209, %211 : vector<2x32xf32>
    %215 = arith.addf %213, %214 : vector<2x32xf32>
    %216 = math.tanh %215 : vector<2x32xf32>
    %217 = arith.mulf %212, %216 : vector<2x32xf32>
    %c72_47 = arith.constant 72 : index
    %c0_48 = arith.constant 0 : index
    %218 = vector.load %arg1[%c72_47, %c0_48] : memref<168x128xf32, #tpu.memory_space<vmem>>, vector<32x128xf32>
    %cst_49 = arith.constant dense<0.000000e+00> : vector<2x128xf32>
    %219 = tpu.matmul %175, %218, %cst_49 {dimension_numbers = #tpu.dot_dimension_numbers<[1], [0], [0], [1], [0, 0, 1, 1], [], []>} : vector<2x32xf32>, vector<32x128xf32>, vector<2x128xf32> -> vector<2x128xf32>
    %c40_50 = arith.constant 40 : index
    %c0_51 = arith.constant 0 : index
    %220 = vector.load %arg1[%c40_50, %c0_51] : memref<168x128xf32, #tpu.memory_space<vmem>>, vector<32x128xf32>
    %cst_52 = arith.constant dense<0.000000e+00> : vector<2x128xf32>
    %221 = tpu.matmul %217, %220, %cst_52 {dimension_numbers = #tpu.dot_dimension_numbers<[1], [0], [0], [1], [0, 0, 1, 1], [], []>} : vector<2x32xf32>, vector<32x128xf32>, vector<2x128xf32> -> vector<2x128xf32>
    %222 = arith.addf %221, %219 : vector<2x128xf32>
    %223 = vector.broadcast %13 : vector<1x128xf32> to vector<2x128xf32>
    %224 = arith.addf %222, %223 : vector<2x128xf32>
    %225 = arith.negf %224 : vector<2x128xf32>
    %226 = math.exp %225 : vector<2x128xf32>
    %cst_53 = arith.constant 1.000000e+00 : f32
    %227 = vector.broadcast %cst_53 : f32 to vector<2x128xf32>
    %228 = arith.addf %227, %226 : vector<2x128xf32>
    %229 = arith.divf %227, %228 : vector<2x128xf32>
    %230 = arith.mulf %229, %10 : vector<2x128xf32>
    %231 = arith.subf %230, %8 : vector<2x128xf32>
    %232 = vector.extract_strided_slice %231 {offsets = [0, 0], sizes = [2, 32], strides = [1, 1]} : vector<2x128xf32> to vector<2x32xf32>
    %233 = vector.extract_strided_slice %231 {offsets = [0, 32], sizes = [2, 32], strides = [1, 1]} : vector<2x128xf32> to vector<2x32xf32>
    %234 = vector.extract_strided_slice %231 {offsets = [0, 64], sizes = [2, 32], strides = [1, 1]} : vector<2x128xf32> to vector<2x32xf32>
    %235 = vector.extract_strided_slice %231 {offsets = [0, 96], sizes = [2, 32], strides = [1, 1]} : vector<2x128xf32> to vector<2x32xf32>
    %236 = arith.mulf %233, %173 : vector<2x32xf32>
    %237 = arith.mulf %232, %234 : vector<2x32xf32>
    %238 = arith.addf %236, %237 : vector<2x32xf32>
    %239 = math.tanh %238 : vector<2x32xf32>
    %240 = arith.mulf %235, %239 : vector<2x32xf32>
    %c136_54 = arith.constant 136 : index
    %c0_55 = arith.constant 0 : index
    %241 = vector.load %arg1[%c136_54, %c0_55] : memref<168x128xf32, #tpu.memory_space<vmem>>, vector<32x128xf32>
    %cst_56 = arith.constant dense<0.000000e+00> : vector<2x128xf32>
    %242 = tpu.matmul %198, %241, %cst_56 {dimension_numbers = #tpu.dot_dimension_numbers<[1], [0], [0], [1], [0, 0, 1, 1], [], []>} : vector<2x32xf32>, vector<32x128xf32>, vector<2x128xf32> -> vector<2x128xf32>
    %c104_57 = arith.constant 104 : index
    %c0_58 = arith.constant 0 : index
    %243 = vector.load %arg1[%c104_57, %c0_58] : memref<168x128xf32, #tpu.memory_space<vmem>>, vector<32x128xf32>
    %cst_59 = arith.constant dense<0.000000e+00> : vector<2x128xf32>
    %244 = tpu.matmul %240, %243, %cst_59 {dimension_numbers = #tpu.dot_dimension_numbers<[1], [0], [0], [1], [0, 0, 1, 1], [], []>} : vector<2x32xf32>, vector<32x128xf32>, vector<2x128xf32> -> vector<2x128xf32>
    %245 = arith.addf %244, %242 : vector<2x128xf32>
    %246 = vector.broadcast %14 : vector<1x128xf32> to vector<2x128xf32>
    %247 = arith.addf %245, %246 : vector<2x128xf32>
    %248 = arith.negf %247 : vector<2x128xf32>
    %249 = math.exp %248 : vector<2x128xf32>
    %cst_60 = arith.constant 1.000000e+00 : f32
    %250 = vector.broadcast %cst_60 : f32 to vector<2x128xf32>
    %251 = arith.addf %250, %249 : vector<2x128xf32>
    %252 = arith.divf %250, %251 : vector<2x128xf32>
    %253 = arith.mulf %252, %10 : vector<2x128xf32>
    %254 = arith.subf %253, %8 : vector<2x128xf32>
    %255 = vector.extract_strided_slice %254 {offsets = [0, 0], sizes = [2, 32], strides = [1, 1]} : vector<2x128xf32> to vector<2x32xf32>
    %256 = vector.extract_strided_slice %254 {offsets = [0, 32], sizes = [2, 32], strides = [1, 1]} : vector<2x128xf32> to vector<2x32xf32>
    %257 = vector.extract_strided_slice %254 {offsets = [0, 64], sizes = [2, 32], strides = [1, 1]} : vector<2x128xf32> to vector<2x32xf32>
    %258 = vector.extract_strided_slice %254 {offsets = [0, 96], sizes = [2, 32], strides = [1, 1]} : vector<2x128xf32> to vector<2x32xf32>
    %259 = arith.mulf %256, %196 : vector<2x32xf32>
    %260 = arith.mulf %255, %257 : vector<2x32xf32>
    %261 = arith.addf %259, %260 : vector<2x32xf32>
    %262 = math.tanh %261 : vector<2x32xf32>
    %263 = arith.mulf %258, %262 : vector<2x32xf32>
    %c8_61 = arith.constant 8 : index
    %c0_62 = arith.constant 0 : index
    %264 = vector.load %arg1[%c8_61, %c0_62] : memref<168x128xf32, #tpu.memory_space<vmem>>, vector<32x128xf32>
    %cst_63 = arith.constant dense<0.000000e+00> : vector<2x128xf32>
    %265 = tpu.matmul %217, %264, %cst_63 {dimension_numbers = #tpu.dot_dimension_numbers<[1], [0], [0], [1], [0, 0, 1, 1], [], []>} : vector<2x32xf32>, vector<32x128xf32>, vector<2x128xf32> -> vector<2x128xf32>
    %266 = arith.addf %38, %265 : vector<2x128xf32>
    %267 = arith.negf %266 : vector<2x128xf32>
    %268 = math.exp %267 : vector<2x128xf32>
    %cst_64 = arith.constant 1.000000e+00 : f32
    %269 = vector.broadcast %cst_64 : f32 to vector<2x128xf32>
    %270 = arith.addf %269, %268 : vector<2x128xf32>
    %271 = arith.divf %269, %270 : vector<2x128xf32>
    %272 = arith.mulf %271, %10 : vector<2x128xf32>
    %273 = arith.subf %272, %8 : vector<2x128xf32>
    %274 = vector.extract_strided_slice %273 {offsets = [0, 0], sizes = [2, 32], strides = [1, 1]} : vector<2x128xf32> to vector<2x32xf32>
    %275 = vector.extract_strided_slice %273 {offsets = [0, 32], sizes = [2, 32], strides = [1, 1]} : vector<2x128xf32> to vector<2x32xf32>
    %276 = vector.extract_strided_slice %273 {offsets = [0, 64], sizes = [2, 32], strides = [1, 1]} : vector<2x128xf32> to vector<2x32xf32>
    %277 = vector.extract_strided_slice %273 {offsets = [0, 96], sizes = [2, 32], strides = [1, 1]} : vector<2x128xf32> to vector<2x32xf32>
    %278 = arith.mulf %275, %215 : vector<2x32xf32>
    %279 = arith.mulf %274, %276 : vector<2x32xf32>
    %280 = arith.addf %278, %279 : vector<2x32xf32>
    %281 = math.tanh %280 : vector<2x32xf32>
    %282 = arith.mulf %277, %281 : vector<2x32xf32>
    %c72_65 = arith.constant 72 : index
    %c0_66 = arith.constant 0 : index
    %283 = vector.load %arg1[%c72_65, %c0_66] : memref<168x128xf32, #tpu.memory_space<vmem>>, vector<32x128xf32>
    %cst_67 = arith.constant dense<0.000000e+00> : vector<2x128xf32>
    %284 = tpu.matmul %240, %283, %cst_67 {dimension_numbers = #tpu.dot_dimension_numbers<[1], [0], [0], [1], [0, 0, 1, 1], [], []>} : vector<2x32xf32>, vector<32x128xf32>, vector<2x128xf32> -> vector<2x128xf32>
    %c40_68 = arith.constant 40 : index
    %c0_69 = arith.constant 0 : index
    %285 = vector.load %arg1[%c40_68, %c0_69] : memref<168x128xf32, #tpu.memory_space<vmem>>, vector<32x128xf32>
    %cst_70 = arith.constant dense<0.000000e+00> : vector<2x128xf32>
    %286 = tpu.matmul %282, %285, %cst_70 {dimension_numbers = #tpu.dot_dimension_numbers<[1], [0], [0], [1], [0, 0, 1, 1], [], []>} : vector<2x32xf32>, vector<32x128xf32>, vector<2x128xf32> -> vector<2x128xf32>
    %287 = arith.addf %286, %284 : vector<2x128xf32>
    %288 = vector.broadcast %13 : vector<1x128xf32> to vector<2x128xf32>
    %289 = arith.addf %287, %288 : vector<2x128xf32>
    %290 = arith.negf %289 : vector<2x128xf32>
    %291 = math.exp %290 : vector<2x128xf32>
    %cst_71 = arith.constant 1.000000e+00 : f32
    %292 = vector.broadcast %cst_71 : f32 to vector<2x128xf32>
    %293 = arith.addf %292, %291 : vector<2x128xf32>
    %294 = arith.divf %292, %293 : vector<2x128xf32>
    %295 = arith.mulf %294, %10 : vector<2x128xf32>
    %296 = arith.subf %295, %8 : vector<2x128xf32>
    %297 = vector.extract_strided_slice %296 {offsets = [0, 0], sizes = [2, 32], strides = [1, 1]} : vector<2x128xf32> to vector<2x32xf32>
    %298 = vector.extract_strided_slice %296 {offsets = [0, 32], sizes = [2, 32], strides = [1, 1]} : vector<2x128xf32> to vector<2x32xf32>
    %299 = vector.extract_strided_slice %296 {offsets = [0, 64], sizes = [2, 32], strides = [1, 1]} : vector<2x128xf32> to vector<2x32xf32>
    %300 = vector.extract_strided_slice %296 {offsets = [0, 96], sizes = [2, 32], strides = [1, 1]} : vector<2x128xf32> to vector<2x32xf32>
    %301 = arith.mulf %298, %238 : vector<2x32xf32>
    %302 = arith.mulf %297, %299 : vector<2x32xf32>
    %303 = arith.addf %301, %302 : vector<2x32xf32>
    %304 = math.tanh %303 : vector<2x32xf32>
    %305 = arith.mulf %300, %304 : vector<2x32xf32>
    %c136_72 = arith.constant 136 : index
    %c0_73 = arith.constant 0 : index
    %306 = vector.load %arg1[%c136_72, %c0_73] : memref<168x128xf32, #tpu.memory_space<vmem>>, vector<32x128xf32>
    %cst_74 = arith.constant dense<0.000000e+00> : vector<2x128xf32>
    %307 = tpu.matmul %263, %306, %cst_74 {dimension_numbers = #tpu.dot_dimension_numbers<[1], [0], [0], [1], [0, 0, 1, 1], [], []>} : vector<2x32xf32>, vector<32x128xf32>, vector<2x128xf32> -> vector<2x128xf32>
    %c104_75 = arith.constant 104 : index
    %c0_76 = arith.constant 0 : index
    %308 = vector.load %arg1[%c104_75, %c0_76] : memref<168x128xf32, #tpu.memory_space<vmem>>, vector<32x128xf32>
    %cst_77 = arith.constant dense<0.000000e+00> : vector<2x128xf32>
    %309 = tpu.matmul %305, %308, %cst_77 {dimension_numbers = #tpu.dot_dimension_numbers<[1], [0], [0], [1], [0, 0, 1, 1], [], []>} : vector<2x32xf32>, vector<32x128xf32>, vector<2x128xf32> -> vector<2x128xf32>
    %310 = arith.addf %309, %307 : vector<2x128xf32>
    %311 = vector.broadcast %14 : vector<1x128xf32> to vector<2x128xf32>
    %312 = arith.addf %310, %311 : vector<2x128xf32>
    %313 = arith.negf %312 : vector<2x128xf32>
    %314 = math.exp %313 : vector<2x128xf32>
    %cst_78 = arith.constant 1.000000e+00 : f32
    %315 = vector.broadcast %cst_78 : f32 to vector<2x128xf32>
    %316 = arith.addf %315, %314 : vector<2x128xf32>
    %317 = arith.divf %315, %316 : vector<2x128xf32>
    %318 = arith.mulf %317, %10 : vector<2x128xf32>
    %319 = arith.subf %318, %8 : vector<2x128xf32>
    %320 = vector.extract_strided_slice %319 {offsets = [0, 0], sizes = [2, 32], strides = [1, 1]} : vector<2x128xf32> to vector<2x32xf32>
    %321 = vector.extract_strided_slice %319 {offsets = [0, 32], sizes = [2, 32], strides = [1, 1]} : vector<2x128xf32> to vector<2x32xf32>
    %322 = vector.extract_strided_slice %319 {offsets = [0, 64], sizes = [2, 32], strides = [1, 1]} : vector<2x128xf32> to vector<2x32xf32>
    %323 = vector.extract_strided_slice %319 {offsets = [0, 96], sizes = [2, 32], strides = [1, 1]} : vector<2x128xf32> to vector<2x32xf32>
    %324 = arith.mulf %321, %261 : vector<2x32xf32>
    %325 = arith.mulf %320, %322 : vector<2x32xf32>
    %326 = arith.addf %324, %325 : vector<2x32xf32>
    %327 = math.tanh %326 : vector<2x32xf32>
    %328 = arith.mulf %323, %327 : vector<2x32xf32>
    %c8_79 = arith.constant 8 : index
    %c0_80 = arith.constant 0 : index
    %329 = vector.load %arg1[%c8_79, %c0_80] : memref<168x128xf32, #tpu.memory_space<vmem>>, vector<32x128xf32>
    %cst_81 = arith.constant dense<0.000000e+00> : vector<2x128xf32>
    %330 = tpu.matmul %282, %329, %cst_81 {dimension_numbers = #tpu.dot_dimension_numbers<[1], [0], [0], [1], [0, 0, 1, 1], [], []>} : vector<2x32xf32>, vector<32x128xf32>, vector<2x128xf32> -> vector<2x128xf32>
    %331 = arith.addf %44, %330 : vector<2x128xf32>
    %332 = arith.negf %331 : vector<2x128xf32>
    %333 = math.exp %332 : vector<2x128xf32>
    %cst_82 = arith.constant 1.000000e+00 : f32
    %334 = vector.broadcast %cst_82 : f32 to vector<2x128xf32>
    %335 = arith.addf %334, %333 : vector<2x128xf32>
    %336 = arith.divf %334, %335 : vector<2x128xf32>
    %337 = arith.mulf %336, %10 : vector<2x128xf32>
    %338 = arith.subf %337, %8 : vector<2x128xf32>
    %339 = vector.extract_strided_slice %338 {offsets = [0, 0], sizes = [2, 32], strides = [1, 1]} : vector<2x128xf32> to vector<2x32xf32>
    %340 = vector.extract_strided_slice %338 {offsets = [0, 32], sizes = [2, 32], strides = [1, 1]} : vector<2x128xf32> to vector<2x32xf32>
    %341 = vector.extract_strided_slice %338 {offsets = [0, 64], sizes = [2, 32], strides = [1, 1]} : vector<2x128xf32> to vector<2x32xf32>
    %342 = vector.extract_strided_slice %338 {offsets = [0, 96], sizes = [2, 32], strides = [1, 1]} : vector<2x128xf32> to vector<2x32xf32>
    %343 = arith.mulf %340, %280 : vector<2x32xf32>
    %344 = arith.mulf %339, %341 : vector<2x32xf32>
    %345 = arith.addf %343, %344 : vector<2x32xf32>
    %346 = math.tanh %345 : vector<2x32xf32>
    %347 = arith.mulf %342, %346 : vector<2x32xf32>
    %c72_83 = arith.constant 72 : index
    %c0_84 = arith.constant 0 : index
    %348 = vector.load %arg1[%c72_83, %c0_84] : memref<168x128xf32, #tpu.memory_space<vmem>>, vector<32x128xf32>
    %cst_85 = arith.constant dense<0.000000e+00> : vector<2x128xf32>
    %349 = tpu.matmul %305, %348, %cst_85 {dimension_numbers = #tpu.dot_dimension_numbers<[1], [0], [0], [1], [0, 0, 1, 1], [], []>} : vector<2x32xf32>, vector<32x128xf32>, vector<2x128xf32> -> vector<2x128xf32>
    %c40_86 = arith.constant 40 : index
    %c0_87 = arith.constant 0 : index
    %350 = vector.load %arg1[%c40_86, %c0_87] : memref<168x128xf32, #tpu.memory_space<vmem>>, vector<32x128xf32>
    %cst_88 = arith.constant dense<0.000000e+00> : vector<2x128xf32>
    %351 = tpu.matmul %347, %350, %cst_88 {dimension_numbers = #tpu.dot_dimension_numbers<[1], [0], [0], [1], [0, 0, 1, 1], [], []>} : vector<2x32xf32>, vector<32x128xf32>, vector<2x128xf32> -> vector<2x128xf32>
    %352 = arith.addf %351, %349 : vector<2x128xf32>
    %353 = vector.broadcast %13 : vector<1x128xf32> to vector<2x128xf32>
    %354 = arith.addf %352, %353 : vector<2x128xf32>
    %355 = arith.negf %354 : vector<2x128xf32>
    %356 = math.exp %355 : vector<2x128xf32>
    %cst_89 = arith.constant 1.000000e+00 : f32
    %357 = vector.broadcast %cst_89 : f32 to vector<2x128xf32>
    %358 = arith.addf %357, %356 : vector<2x128xf32>
    %359 = arith.divf %357, %358 : vector<2x128xf32>
    %360 = arith.mulf %359, %10 : vector<2x128xf32>
    %361 = arith.subf %360, %8 : vector<2x128xf32>
    %362 = vector.extract_strided_slice %361 {offsets = [0, 0], sizes = [2, 32], strides = [1, 1]} : vector<2x128xf32> to vector<2x32xf32>
    %363 = vector.extract_strided_slice %361 {offsets = [0, 32], sizes = [2, 32], strides = [1, 1]} : vector<2x128xf32> to vector<2x32xf32>
    %364 = vector.extract_strided_slice %361 {offsets = [0, 64], sizes = [2, 32], strides = [1, 1]} : vector<2x128xf32> to vector<2x32xf32>
    %365 = vector.extract_strided_slice %361 {offsets = [0, 96], sizes = [2, 32], strides = [1, 1]} : vector<2x128xf32> to vector<2x32xf32>
    %366 = arith.mulf %363, %303 : vector<2x32xf32>
    %367 = arith.mulf %362, %364 : vector<2x32xf32>
    %368 = arith.addf %366, %367 : vector<2x32xf32>
    %369 = math.tanh %368 : vector<2x32xf32>
    %370 = arith.mulf %365, %369 : vector<2x32xf32>
    %c136_90 = arith.constant 136 : index
    %c0_91 = arith.constant 0 : index
    %371 = vector.load %arg1[%c136_90, %c0_91] : memref<168x128xf32, #tpu.memory_space<vmem>>, vector<32x128xf32>
    %cst_92 = arith.constant dense<0.000000e+00> : vector<2x128xf32>
    %372 = tpu.matmul %328, %371, %cst_92 {dimension_numbers = #tpu.dot_dimension_numbers<[1], [0], [0], [1], [0, 0, 1, 1], [], []>} : vector<2x32xf32>, vector<32x128xf32>, vector<2x128xf32> -> vector<2x128xf32>
    %c104_93 = arith.constant 104 : index
    %c0_94 = arith.constant 0 : index
    %373 = vector.load %arg1[%c104_93, %c0_94] : memref<168x128xf32, #tpu.memory_space<vmem>>, vector<32x128xf32>
    %cst_95 = arith.constant dense<0.000000e+00> : vector<2x128xf32>
    %374 = tpu.matmul %370, %373, %cst_95 {dimension_numbers = #tpu.dot_dimension_numbers<[1], [0], [0], [1], [0, 0, 1, 1], [], []>} : vector<2x32xf32>, vector<32x128xf32>, vector<2x128xf32> -> vector<2x128xf32>
    %375 = arith.addf %374, %372 : vector<2x128xf32>
    %376 = vector.broadcast %14 : vector<1x128xf32> to vector<2x128xf32>
    %377 = arith.addf %375, %376 : vector<2x128xf32>
    %378 = arith.negf %377 : vector<2x128xf32>
    %379 = math.exp %378 : vector<2x128xf32>
    %cst_96 = arith.constant 1.000000e+00 : f32
    %380 = vector.broadcast %cst_96 : f32 to vector<2x128xf32>
    %381 = arith.addf %380, %379 : vector<2x128xf32>
    %382 = arith.divf %380, %381 : vector<2x128xf32>
    %383 = arith.mulf %382, %10 : vector<2x128xf32>
    %384 = arith.subf %383, %8 : vector<2x128xf32>
    %385 = vector.extract_strided_slice %384 {offsets = [0, 0], sizes = [2, 32], strides = [1, 1]} : vector<2x128xf32> to vector<2x32xf32>
    %386 = vector.extract_strided_slice %384 {offsets = [0, 32], sizes = [2, 32], strides = [1, 1]} : vector<2x128xf32> to vector<2x32xf32>
    %387 = vector.extract_strided_slice %384 {offsets = [0, 64], sizes = [2, 32], strides = [1, 1]} : vector<2x128xf32> to vector<2x32xf32>
    %388 = vector.extract_strided_slice %384 {offsets = [0, 96], sizes = [2, 32], strides = [1, 1]} : vector<2x128xf32> to vector<2x32xf32>
    %389 = arith.mulf %386, %326 : vector<2x32xf32>
    %390 = arith.mulf %385, %387 : vector<2x32xf32>
    %391 = arith.addf %389, %390 : vector<2x32xf32>
    %392 = math.tanh %391 : vector<2x32xf32>
    %393 = arith.mulf %388, %392 : vector<2x32xf32>
    %c8_97 = arith.constant 8 : index
    %c0_98 = arith.constant 0 : index
    %394 = vector.load %arg1[%c8_97, %c0_98] : memref<168x128xf32, #tpu.memory_space<vmem>>, vector<32x128xf32>
    %cst_99 = arith.constant dense<0.000000e+00> : vector<2x128xf32>
    %395 = tpu.matmul %347, %394, %cst_99 {dimension_numbers = #tpu.dot_dimension_numbers<[1], [0], [0], [1], [0, 0, 1, 1], [], []>} : vector<2x32xf32>, vector<32x128xf32>, vector<2x128xf32> -> vector<2x128xf32>
    %396 = arith.addf %50, %395 : vector<2x128xf32>
    %397 = arith.negf %396 : vector<2x128xf32>
    %398 = math.exp %397 : vector<2x128xf32>
    %cst_100 = arith.constant 1.000000e+00 : f32
    %399 = vector.broadcast %cst_100 : f32 to vector<2x128xf32>
    %400 = arith.addf %399, %398 : vector<2x128xf32>
    %401 = arith.divf %399, %400 : vector<2x128xf32>
    %402 = arith.mulf %401, %10 : vector<2x128xf32>
    %403 = arith.subf %402, %8 : vector<2x128xf32>
    %404 = vector.extract_strided_slice %403 {offsets = [0, 0], sizes = [2, 32], strides = [1, 1]} : vector<2x128xf32> to vector<2x32xf32>
    %405 = vector.extract_strided_slice %403 {offsets = [0, 32], sizes = [2, 32], strides = [1, 1]} : vector<2x128xf32> to vector<2x32xf32>
    %406 = vector.extract_strided_slice %403 {offsets = [0, 64], sizes = [2, 32], strides = [1, 1]} : vector<2x128xf32> to vector<2x32xf32>
    %407 = vector.extract_strided_slice %403 {offsets = [0, 96], sizes = [2, 32], strides = [1, 1]} : vector<2x128xf32> to vector<2x32xf32>
    %408 = arith.mulf %405, %345 : vector<2x32xf32>
    %409 = arith.mulf %404, %406 : vector<2x32xf32>
    %410 = arith.addf %408, %409 : vector<2x32xf32>
    %411 = math.tanh %410 : vector<2x32xf32>
    %412 = arith.mulf %407, %411 : vector<2x32xf32>
    %c72_101 = arith.constant 72 : index
    %c0_102 = arith.constant 0 : index
    %413 = vector.load %arg1[%c72_101, %c0_102] : memref<168x128xf32, #tpu.memory_space<vmem>>, vector<32x128xf32>
    %cst_103 = arith.constant dense<0.000000e+00> : vector<2x128xf32>
    %414 = tpu.matmul %370, %413, %cst_103 {dimension_numbers = #tpu.dot_dimension_numbers<[1], [0], [0], [1], [0, 0, 1, 1], [], []>} : vector<2x32xf32>, vector<32x128xf32>, vector<2x128xf32> -> vector<2x128xf32>
    %c40_104 = arith.constant 40 : index
    %c0_105 = arith.constant 0 : index
    %415 = vector.load %arg1[%c40_104, %c0_105] : memref<168x128xf32, #tpu.memory_space<vmem>>, vector<32x128xf32>
    %cst_106 = arith.constant dense<0.000000e+00> : vector<2x128xf32>
    %416 = tpu.matmul %412, %415, %cst_106 {dimension_numbers = #tpu.dot_dimension_numbers<[1], [0], [0], [1], [0, 0, 1, 1], [], []>} : vector<2x32xf32>, vector<32x128xf32>, vector<2x128xf32> -> vector<2x128xf32>
    %417 = arith.addf %416, %414 : vector<2x128xf32>
    %418 = vector.broadcast %13 : vector<1x128xf32> to vector<2x128xf32>
    %419 = arith.addf %417, %418 : vector<2x128xf32>
    %420 = arith.negf %419 : vector<2x128xf32>
    %421 = math.exp %420 : vector<2x128xf32>
    %cst_107 = arith.constant 1.000000e+00 : f32
    %422 = vector.broadcast %cst_107 : f32 to vector<2x128xf32>
    %423 = arith.addf %422, %421 : vector<2x128xf32>
    %424 = arith.divf %422, %423 : vector<2x128xf32>
    %425 = arith.mulf %424, %10 : vector<2x128xf32>
    %426 = arith.subf %425, %8 : vector<2x128xf32>
    %427 = vector.extract_strided_slice %426 {offsets = [0, 0], sizes = [2, 32], strides = [1, 1]} : vector<2x128xf32> to vector<2x32xf32>
    %428 = vector.extract_strided_slice %426 {offsets = [0, 32], sizes = [2, 32], strides = [1, 1]} : vector<2x128xf32> to vector<2x32xf32>
    %429 = vector.extract_strided_slice %426 {offsets = [0, 64], sizes = [2, 32], strides = [1, 1]} : vector<2x128xf32> to vector<2x32xf32>
    %430 = vector.extract_strided_slice %426 {offsets = [0, 96], sizes = [2, 32], strides = [1, 1]} : vector<2x128xf32> to vector<2x32xf32>
    %431 = arith.mulf %428, %368 : vector<2x32xf32>
    %432 = arith.mulf %427, %429 : vector<2x32xf32>
    %433 = arith.addf %431, %432 : vector<2x32xf32>
    %434 = math.tanh %433 : vector<2x32xf32>
    %435 = arith.mulf %430, %434 : vector<2x32xf32>
    %c136_108 = arith.constant 136 : index
    %c0_109 = arith.constant 0 : index
    %436 = vector.load %arg1[%c136_108, %c0_109] : memref<168x128xf32, #tpu.memory_space<vmem>>, vector<32x128xf32>
    %cst_110 = arith.constant dense<0.000000e+00> : vector<2x128xf32>
    %437 = tpu.matmul %393, %436, %cst_110 {dimension_numbers = #tpu.dot_dimension_numbers<[1], [0], [0], [1], [0, 0, 1, 1], [], []>} : vector<2x32xf32>, vector<32x128xf32>, vector<2x128xf32> -> vector<2x128xf32>
    %c104_111 = arith.constant 104 : index
    %c0_112 = arith.constant 0 : index
    %438 = vector.load %arg1[%c104_111, %c0_112] : memref<168x128xf32, #tpu.memory_space<vmem>>, vector<32x128xf32>
    %cst_113 = arith.constant dense<0.000000e+00> : vector<2x128xf32>
    %439 = tpu.matmul %435, %438, %cst_113 {dimension_numbers = #tpu.dot_dimension_numbers<[1], [0], [0], [1], [0, 0, 1, 1], [], []>} : vector<2x32xf32>, vector<32x128xf32>, vector<2x128xf32> -> vector<2x128xf32>
    %440 = arith.addf %439, %437 : vector<2x128xf32>
    %441 = vector.broadcast %14 : vector<1x128xf32> to vector<2x128xf32>
    %442 = arith.addf %440, %441 : vector<2x128xf32>
    %443 = arith.negf %442 : vector<2x128xf32>
    %444 = math.exp %443 : vector<2x128xf32>
    %cst_114 = arith.constant 1.000000e+00 : f32
    %445 = vector.broadcast %cst_114 : f32 to vector<2x128xf32>
    %446 = arith.addf %445, %444 : vector<2x128xf32>
    %447 = arith.divf %445, %446 : vector<2x128xf32>
    %448 = arith.mulf %447, %10 : vector<2x128xf32>
    %449 = arith.subf %448, %8 : vector<2x128xf32>
    %450 = vector.extract_strided_slice %449 {offsets = [0, 0], sizes = [2, 32], strides = [1, 1]} : vector<2x128xf32> to vector<2x32xf32>
    %451 = vector.extract_strided_slice %449 {offsets = [0, 32], sizes = [2, 32], strides = [1, 1]} : vector<2x128xf32> to vector<2x32xf32>
    %452 = vector.extract_strided_slice %449 {offsets = [0, 64], sizes = [2, 32], strides = [1, 1]} : vector<2x128xf32> to vector<2x32xf32>
    %453 = vector.extract_strided_slice %449 {offsets = [0, 96], sizes = [2, 32], strides = [1, 1]} : vector<2x128xf32> to vector<2x32xf32>
    %454 = arith.mulf %451, %391 : vector<2x32xf32>
    %455 = arith.mulf %450, %452 : vector<2x32xf32>
    %456 = arith.addf %454, %455 : vector<2x32xf32>
    %457 = math.tanh %456 : vector<2x32xf32>
    %458 = arith.mulf %453, %457 : vector<2x32xf32>
    %c8_115 = arith.constant 8 : index
    %c0_116 = arith.constant 0 : index
    %459 = vector.load %arg1[%c8_115, %c0_116] : memref<168x128xf32, #tpu.memory_space<vmem>>, vector<32x128xf32>
    %cst_117 = arith.constant dense<0.000000e+00> : vector<2x128xf32>
    %460 = tpu.matmul %412, %459, %cst_117 {dimension_numbers = #tpu.dot_dimension_numbers<[1], [0], [0], [1], [0, 0, 1, 1], [], []>} : vector<2x32xf32>, vector<32x128xf32>, vector<2x128xf32> -> vector<2x128xf32>
    %461 = arith.addf %56, %460 : vector<2x128xf32>
    %462 = arith.negf %461 : vector<2x128xf32>
    %463 = math.exp %462 : vector<2x128xf32>
    %cst_118 = arith.constant 1.000000e+00 : f32
    %464 = vector.broadcast %cst_118 : f32 to vector<2x128xf32>
    %465 = arith.addf %464, %463 : vector<2x128xf32>
    %466 = arith.divf %464, %465 : vector<2x128xf32>
    %467 = arith.mulf %466, %10 : vector<2x128xf32>
    %468 = arith.subf %467, %8 : vector<2x128xf32>
    %469 = vector.extract_strided_slice %468 {offsets = [0, 0], sizes = [2, 32], strides = [1, 1]} : vector<2x128xf32> to vector<2x32xf32>
    %470 = vector.extract_strided_slice %468 {offsets = [0, 32], sizes = [2, 32], strides = [1, 1]} : vector<2x128xf32> to vector<2x32xf32>
    %471 = vector.extract_strided_slice %468 {offsets = [0, 64], sizes = [2, 32], strides = [1, 1]} : vector<2x128xf32> to vector<2x32xf32>
    %472 = vector.extract_strided_slice %468 {offsets = [0, 96], sizes = [2, 32], strides = [1, 1]} : vector<2x128xf32> to vector<2x32xf32>
    %473 = arith.mulf %470, %410 : vector<2x32xf32>
    %474 = arith.mulf %469, %471 : vector<2x32xf32>
    %475 = arith.addf %473, %474 : vector<2x32xf32>
    %476 = math.tanh %475 : vector<2x32xf32>
    %477 = arith.mulf %472, %476 : vector<2x32xf32>
    %c72_119 = arith.constant 72 : index
    %c0_120 = arith.constant 0 : index
    %478 = vector.load %arg1[%c72_119, %c0_120] : memref<168x128xf32, #tpu.memory_space<vmem>>, vector<32x128xf32>
    %cst_121 = arith.constant dense<0.000000e+00> : vector<2x128xf32>
    %479 = tpu.matmul %435, %478, %cst_121 {dimension_numbers = #tpu.dot_dimension_numbers<[1], [0], [0], [1], [0, 0, 1, 1], [], []>} : vector<2x32xf32>, vector<32x128xf32>, vector<2x128xf32> -> vector<2x128xf32>
    %c40_122 = arith.constant 40 : index
    %c0_123 = arith.constant 0 : index
    %480 = vector.load %arg1[%c40_122, %c0_123] : memref<168x128xf32, #tpu.memory_space<vmem>>, vector<32x128xf32>
    %cst_124 = arith.constant dense<0.000000e+00> : vector<2x128xf32>
    %481 = tpu.matmul %477, %480, %cst_124 {dimension_numbers = #tpu.dot_dimension_numbers<[1], [0], [0], [1], [0, 0, 1, 1], [], []>} : vector<2x32xf32>, vector<32x128xf32>, vector<2x128xf32> -> vector<2x128xf32>
    %482 = arith.addf %481, %479 : vector<2x128xf32>
    %483 = vector.broadcast %13 : vector<1x128xf32> to vector<2x128xf32>
    %484 = arith.addf %482, %483 : vector<2x128xf32>
    %485 = arith.negf %484 : vector<2x128xf32>
    %486 = math.exp %485 : vector<2x128xf32>
    %cst_125 = arith.constant 1.000000e+00 : f32
    %487 = vector.broadcast %cst_125 : f32 to vector<2x128xf32>
    %488 = arith.addf %487, %486 : vector<2x128xf32>
    %489 = arith.divf %487, %488 : vector<2x128xf32>
    %490 = arith.mulf %489, %10 : vector<2x128xf32>
    %491 = arith.subf %490, %8 : vector<2x128xf32>
    %492 = vector.extract_strided_slice %491 {offsets = [0, 0], sizes = [2, 32], strides = [1, 1]} : vector<2x128xf32> to vector<2x32xf32>
    %493 = vector.extract_strided_slice %491 {offsets = [0, 32], sizes = [2, 32], strides = [1, 1]} : vector<2x128xf32> to vector<2x32xf32>
    %494 = vector.extract_strided_slice %491 {offsets = [0, 64], sizes = [2, 32], strides = [1, 1]} : vector<2x128xf32> to vector<2x32xf32>
    %495 = vector.extract_strided_slice %491 {offsets = [0, 96], sizes = [2, 32], strides = [1, 1]} : vector<2x128xf32> to vector<2x32xf32>
    %496 = arith.mulf %493, %433 : vector<2x32xf32>
    %497 = arith.mulf %492, %494 : vector<2x32xf32>
    %498 = arith.addf %496, %497 : vector<2x32xf32>
    %499 = math.tanh %498 : vector<2x32xf32>
    %500 = arith.mulf %495, %499 : vector<2x32xf32>
    %c136_126 = arith.constant 136 : index
    %c0_127 = arith.constant 0 : index
    %501 = vector.load %arg1[%c136_126, %c0_127] : memref<168x128xf32, #tpu.memory_space<vmem>>, vector<32x128xf32>
    %cst_128 = arith.constant dense<0.000000e+00> : vector<2x128xf32>
    %502 = tpu.matmul %458, %501, %cst_128 {dimension_numbers = #tpu.dot_dimension_numbers<[1], [0], [0], [1], [0, 0, 1, 1], [], []>} : vector<2x32xf32>, vector<32x128xf32>, vector<2x128xf32> -> vector<2x128xf32>
    %c104_129 = arith.constant 104 : index
    %c0_130 = arith.constant 0 : index
    %503 = vector.load %arg1[%c104_129, %c0_130] : memref<168x128xf32, #tpu.memory_space<vmem>>, vector<32x128xf32>
    %cst_131 = arith.constant dense<0.000000e+00> : vector<2x128xf32>
    %504 = tpu.matmul %500, %503, %cst_131 {dimension_numbers = #tpu.dot_dimension_numbers<[1], [0], [0], [1], [0, 0, 1, 1], [], []>} : vector<2x32xf32>, vector<32x128xf32>, vector<2x128xf32> -> vector<2x128xf32>
    %505 = arith.addf %504, %502 : vector<2x128xf32>
    %506 = vector.broadcast %14 : vector<1x128xf32> to vector<2x128xf32>
    %507 = arith.addf %505, %506 : vector<2x128xf32>
    %508 = arith.negf %507 : vector<2x128xf32>
    %509 = math.exp %508 : vector<2x128xf32>
    %cst_132 = arith.constant 1.000000e+00 : f32
    %510 = vector.broadcast %cst_132 : f32 to vector<2x128xf32>
    %511 = arith.addf %510, %509 : vector<2x128xf32>
    %512 = arith.divf %510, %511 : vector<2x128xf32>
    %513 = arith.mulf %512, %10 : vector<2x128xf32>
    %514 = arith.subf %513, %8 : vector<2x128xf32>
    %515 = vector.extract_strided_slice %514 {offsets = [0, 0], sizes = [2, 32], strides = [1, 1]} : vector<2x128xf32> to vector<2x32xf32>
    %516 = vector.extract_strided_slice %514 {offsets = [0, 32], sizes = [2, 32], strides = [1, 1]} : vector<2x128xf32> to vector<2x32xf32>
    %517 = vector.extract_strided_slice %514 {offsets = [0, 64], sizes = [2, 32], strides = [1, 1]} : vector<2x128xf32> to vector<2x32xf32>
    %518 = vector.extract_strided_slice %514 {offsets = [0, 96], sizes = [2, 32], strides = [1, 1]} : vector<2x128xf32> to vector<2x32xf32>
    %519 = arith.mulf %516, %456 : vector<2x32xf32>
    %520 = arith.mulf %515, %517 : vector<2x32xf32>
    %521 = arith.addf %519, %520 : vector<2x32xf32>
    %522 = math.tanh %521 : vector<2x32xf32>
    %523 = arith.mulf %518, %522 : vector<2x32xf32>
    %c8_133 = arith.constant 8 : index
    %c0_134 = arith.constant 0 : index
    %524 = vector.load %arg1[%c8_133, %c0_134] : memref<168x128xf32, #tpu.memory_space<vmem>>, vector<32x128xf32>
    %cst_135 = arith.constant dense<0.000000e+00> : vector<2x128xf32>
    %525 = tpu.matmul %477, %524, %cst_135 {dimension_numbers = #tpu.dot_dimension_numbers<[1], [0], [0], [1], [0, 0, 1, 1], [], []>} : vector<2x32xf32>, vector<32x128xf32>, vector<2x128xf32> -> vector<2x128xf32>
    %526 = arith.addf %62, %525 : vector<2x128xf32>
    %527 = arith.negf %526 : vector<2x128xf32>
    %528 = math.exp %527 : vector<2x128xf32>
    %cst_136 = arith.constant 1.000000e+00 : f32
    %529 = vector.broadcast %cst_136 : f32 to vector<2x128xf32>
    %530 = arith.addf %529, %528 : vector<2x128xf32>
    %531 = arith.divf %529, %530 : vector<2x128xf32>
    %532 = arith.mulf %531, %10 : vector<2x128xf32>
    %533 = arith.subf %532, %8 : vector<2x128xf32>
    %534 = vector.extract_strided_slice %533 {offsets = [0, 0], sizes = [2, 32], strides = [1, 1]} : vector<2x128xf32> to vector<2x32xf32>
    %535 = vector.extract_strided_slice %533 {offsets = [0, 32], sizes = [2, 32], strides = [1, 1]} : vector<2x128xf32> to vector<2x32xf32>
    %536 = vector.extract_strided_slice %533 {offsets = [0, 64], sizes = [2, 32], strides = [1, 1]} : vector<2x128xf32> to vector<2x32xf32>
    %537 = vector.extract_strided_slice %533 {offsets = [0, 96], sizes = [2, 32], strides = [1, 1]} : vector<2x128xf32> to vector<2x32xf32>
    %538 = arith.mulf %535, %475 : vector<2x32xf32>
    %539 = arith.mulf %534, %536 : vector<2x32xf32>
    %540 = arith.addf %538, %539 : vector<2x32xf32>
    %541 = math.tanh %540 : vector<2x32xf32>
    %542 = arith.mulf %537, %541 : vector<2x32xf32>
    %c72_137 = arith.constant 72 : index
    %c0_138 = arith.constant 0 : index
    %543 = vector.load %arg1[%c72_137, %c0_138] : memref<168x128xf32, #tpu.memory_space<vmem>>, vector<32x128xf32>
    %cst_139 = arith.constant dense<0.000000e+00> : vector<2x128xf32>
    %544 = tpu.matmul %500, %543, %cst_139 {dimension_numbers = #tpu.dot_dimension_numbers<[1], [0], [0], [1], [0, 0, 1, 1], [], []>} : vector<2x32xf32>, vector<32x128xf32>, vector<2x128xf32> -> vector<2x128xf32>
    %c40_140 = arith.constant 40 : index
    %c0_141 = arith.constant 0 : index
    %545 = vector.load %arg1[%c40_140, %c0_141] : memref<168x128xf32, #tpu.memory_space<vmem>>, vector<32x128xf32>
    %cst_142 = arith.constant dense<0.000000e+00> : vector<2x128xf32>
    %546 = tpu.matmul %542, %545, %cst_142 {dimension_numbers = #tpu.dot_dimension_numbers<[1], [0], [0], [1], [0, 0, 1, 1], [], []>} : vector<2x32xf32>, vector<32x128xf32>, vector<2x128xf32> -> vector<2x128xf32>
    %547 = arith.addf %546, %544 : vector<2x128xf32>
    %548 = vector.broadcast %13 : vector<1x128xf32> to vector<2x128xf32>
    %549 = arith.addf %547, %548 : vector<2x128xf32>
    %550 = arith.negf %549 : vector<2x128xf32>
    %551 = math.exp %550 : vector<2x128xf32>
    %cst_143 = arith.constant 1.000000e+00 : f32
    %552 = vector.broadcast %cst_143 : f32 to vector<2x128xf32>
    %553 = arith.addf %552, %551 : vector<2x128xf32>
    %554 = arith.divf %552, %553 : vector<2x128xf32>
    %555 = arith.mulf %554, %10 : vector<2x128xf32>
    %556 = arith.subf %555, %8 : vector<2x128xf32>
    %557 = vector.extract_strided_slice %556 {offsets = [0, 0], sizes = [2, 32], strides = [1, 1]} : vector<2x128xf32> to vector<2x32xf32>
    %558 = vector.extract_strided_slice %556 {offsets = [0, 32], sizes = [2, 32], strides = [1, 1]} : vector<2x128xf32> to vector<2x32xf32>
    %559 = vector.extract_strided_slice %556 {offsets = [0, 64], sizes = [2, 32], strides = [1, 1]} : vector<2x128xf32> to vector<2x32xf32>
    %560 = vector.extract_strided_slice %556 {offsets = [0, 96], sizes = [2, 32], strides = [1, 1]} : vector<2x128xf32> to vector<2x32xf32>
    %561 = arith.mulf %558, %498 : vector<2x32xf32>
    %562 = arith.mulf %557, %559 : vector<2x32xf32>
    %563 = arith.addf %561, %562 : vector<2x32xf32>
    %564 = math.tanh %563 : vector<2x32xf32>
    %565 = arith.mulf %560, %564 : vector<2x32xf32>
    %c136_144 = arith.constant 136 : index
    %c0_145 = arith.constant 0 : index
    %566 = vector.load %arg1[%c136_144, %c0_145] : memref<168x128xf32, #tpu.memory_space<vmem>>, vector<32x128xf32>
    %cst_146 = arith.constant dense<0.000000e+00> : vector<2x128xf32>
    %567 = tpu.matmul %523, %566, %cst_146 {dimension_numbers = #tpu.dot_dimension_numbers<[1], [0], [0], [1], [0, 0, 1, 1], [], []>} : vector<2x32xf32>, vector<32x128xf32>, vector<2x128xf32> -> vector<2x128xf32>
    %c104_147 = arith.constant 104 : index
    %c0_148 = arith.constant 0 : index
    %568 = vector.load %arg1[%c104_147, %c0_148] : memref<168x128xf32, #tpu.memory_space<vmem>>, vector<32x128xf32>
    %cst_149 = arith.constant dense<0.000000e+00> : vector<2x128xf32>
    %569 = tpu.matmul %565, %568, %cst_149 {dimension_numbers = #tpu.dot_dimension_numbers<[1], [0], [0], [1], [0, 0, 1, 1], [], []>} : vector<2x32xf32>, vector<32x128xf32>, vector<2x128xf32> -> vector<2x128xf32>
    %570 = arith.addf %569, %567 : vector<2x128xf32>
    %571 = vector.broadcast %14 : vector<1x128xf32> to vector<2x128xf32>
    %572 = arith.addf %570, %571 : vector<2x128xf32>
    %573 = arith.negf %572 : vector<2x128xf32>
    %574 = math.exp %573 : vector<2x128xf32>
    %cst_150 = arith.constant 1.000000e+00 : f32
    %575 = vector.broadcast %cst_150 : f32 to vector<2x128xf32>
    %576 = arith.addf %575, %574 : vector<2x128xf32>
    %577 = arith.divf %575, %576 : vector<2x128xf32>
    %578 = arith.mulf %577, %10 : vector<2x128xf32>
    %579 = arith.subf %578, %8 : vector<2x128xf32>
    %580 = vector.extract_strided_slice %579 {offsets = [0, 0], sizes = [2, 32], strides = [1, 1]} : vector<2x128xf32> to vector<2x32xf32>
    %581 = vector.extract_strided_slice %579 {offsets = [0, 32], sizes = [2, 32], strides = [1, 1]} : vector<2x128xf32> to vector<2x32xf32>
    %582 = vector.extract_strided_slice %579 {offsets = [0, 64], sizes = [2, 32], strides = [1, 1]} : vector<2x128xf32> to vector<2x32xf32>
    %583 = vector.extract_strided_slice %579 {offsets = [0, 96], sizes = [2, 32], strides = [1, 1]} : vector<2x128xf32> to vector<2x32xf32>
    %584 = arith.mulf %581, %521 : vector<2x32xf32>
    %585 = arith.mulf %580, %582 : vector<2x32xf32>
    %586 = arith.addf %584, %585 : vector<2x32xf32>
    %587 = math.tanh %586 : vector<2x32xf32>
    %588 = arith.mulf %583, %587 : vector<2x32xf32>
    %c4 = arith.constant 4 : index
    %c0_151 = arith.constant 0 : index
    %589 = vector.load %arg1[%c4, %c0_151] : memref<168x128xf32, #tpu.memory_space<vmem>>, vector<1x32xf32>
    %c5 = arith.constant 5 : index
    %c0_152 = arith.constant 0 : index
    %590 = vector.load %arg1[%c5, %c0_152] : memref<168x128xf32, #tpu.memory_space<vmem>>, vector<1x1xf32>
    %591 = vector.broadcast %589 : vector<1x32xf32> to vector<2x32xf32>
    %592 = arith.mulf %588, %591 : vector<2x32xf32>
    %cst_153 = arith.constant dense<0.000000e+00> : vector<2xf32>
    %593 = vector.multi_reduction <add>, %592, %cst_153 [1] : vector<2x32xf32> to vector<2xf32>
    %594 = vector.shape_cast %593 : vector<2xf32> to vector<2x1xf32>
    %595 = vector.broadcast %590 : vector<1x1xf32> to vector<2x1xf32>
    %596 = arith.addf %594, %595 : vector<2x1xf32>
    %c0_154 = arith.constant 0 : index
    %c0_155 = arith.constant 0 : index
    %597 = vector.load %arg2[%c0_154, %c0_155] : memref<2x1xf32, #tpu.memory_space<vmem>>, vector<2x1xf32>
    tpu.vector_store %arg2[%c0_154, %c0_155], %596 {strides = array<i32>} : memref<2x1xf32, #tpu.memory_space<vmem>>, vector<2x1xf32>,
    return
  }
}

</mosaic_0001>

<llo_original>
// kernel: lstm_forward.1
$region0: #{lstm_forward.1}
  #allocation0 [shape = 'u32[]', space=smem, size = 0x4, offset = 0x4, fixed_abs, tag = 'smem constant byte address 0x4 - core index']
  #allocation1 [shape = 'u32[144,128]{1,0:T(1,128)}', space=vmem, size = 0x12000, scoped, tag = 'internal scratch']
  %s0 = inlined_call_operand.vmem [shape: f32[2,8], index: 0, kind: input, shape index: {}]
  %s1 = inlined_call_operand.hbm [shape: f32[168,128], index: 1, kind: input, shape index: {}]
  %s2 = inlined_call_operand.vmem [shape: f32[2,1], index: 2, kind: output, shape index: {}]
  %s3 = sld [smem:[#allocation0]]
  $region22: #{lstm_forward.1} parent=0
    _
  %s5 = ssub.s32 1, %s3
  %s6 = scalar_select 0, %s5, %s3
  $region1: #{lstm_forward.1} parent=0
    #allocation2 [shape = 'u8[86016]{0}', space=vmem, size = 0x15000, scoped, tag = 'input window, operand 1, single buffered']
    #allocation3 [shape = 's32[1]{0}', space=sflag, size = 0x4, scoped, tag = 'scoped memory for lstm_forward.1']
    %7 = vsyncpa [#allocation3], 0
    // Predicated region
    $region2: #{lstm_forward.1} parent=1 // pred_check
      _
    $region3: #{lstm_forward.1} parent=1 // pred_check_branch
      %9 = sbr.rel (0) target = $region5
    $region4: #{lstm_forward.1} parent=1 // pred_region
      _
    $region5: #{lstm_forward.1} parent=1 // pred_fallthru
      _
    // Predicated region
    $region6: #{lstm_forward.1} parent=1 // pred_check
      _
    $region7: #{lstm_forward.1} parent=1 // pred_check_branch
      %11 = sbr.rel (0) target = $region9
    $region8: #{lstm_forward.1} parent=1 // pred_region
      %s13 = ssub.s32 2688, 2688
      %14 = vsyncadd [#allocation3], %s13
      %s15 = sshll.u32 [#allocation2], 4
      %s16 = int_to_ptr.vmem [resolvable:$true] %s15
      %21 = dma.hbm_to_vmem [thread:$0]  %s1, 2688, %s16, [#allocation3], 128, 128, 8
    $region9: #{lstm_forward.1} parent=1 // pred_fallthru
      _
    // Predicated region
    $region10: #{lstm_forward.1} parent=1 // pred_check
      _
    $region11: #{lstm_forward.1} parent=1 // pred_check_branch
      %23 = sbr.rel (0) target = $region13
    $region12: #{lstm_forward.1} parent=1 // pred_region
      %24 = dma.done [#allocation3], 2688
    $region13: #{lstm_forward.1} parent=1 // pred_fallthru
      _
    %v25 = vld [vmem:[%s0] sm:$0x3]
    %v26 = vlaneseq
    %v27 = vand.u32 %v26, 127
    %vm28 = vcmp.ge.s32.totalorder %v27, 64
    %vm29 = vcmp.lt.s32.totalorder %v27, 96
    %vm30 = vmand %vm28, %vm29
    %v31 = vsel %vm30, 1, 0
    %v32 = vcvt.s32.f32 %v31
    %v33 = vadd.f32 %v32, 1.0
    %v34 = vld [vmem:[#allocation2] sm:$0x1]
    %v35 = vld [vmem:[#allocation2 + $0x1] sm:$0x1]
    %v36 = vld [vmem:[#allocation2 + $0x2] sm:$0x1]
    %v37 = vld [vmem:[#allocation2 + $0x3] sm:$0x1]
    %39 = vset.pattern.permute.xlu0 0
    %40 = vperm.xlu0 %39, %v25
    %v41 = vpop.permute.xlu0 %40
    %v43 = vlaneseq
    %v44 = vshrl.u32 %v43, 7
    %v45 = vsub.s32 0, %v44
    %v46 = vrot.slane %v34, %v45
    %v47 = vmul.f32 %v41, %v46
    %v48 = vlaneseq
    %v49 = vshrl.u32 %v48, 7
    %v50 = vsub.s32 0, %v49
    %v51 = vrot.slane %v35, %v50
    %v52 = vadd.f32 %v47, %v51
    %53 = vset.pattern.permute.xlu0 1
    %54 = vperm.xlu0 %53, %v25
    %v55 = vpop.permute.xlu0 %54
    %v57 = vmul.f32 %v55, %v46
    %v58 = vadd.f32 %v57, %v51
    %59 = vset.pattern.permute.xlu0 2
    %60 = vperm.xlu0 %59, %v25
    %v61 = vpop.permute.xlu0 %60
    %v63 = vmul.f32 %v61, %v46
    %v64 = vadd.f32 %v63, %v51
    %65 = vset.pattern.permute.xlu0 3
    %66 = vperm.xlu0 %65, %v25
    %v67 = vpop.permute.xlu0 %66
    %v69 = vmul.f32 %v67, %v46
    %v70 = vadd.f32 %v69, %v51
    %71 = vset.pattern.permute.xlu0 4
    %72 = vperm.xlu0 %71, %v25
    %v73 = vpop.permute.xlu0 %72
    %v75 = vmul.f32 %v73, %v46
    %v76 = vadd.f32 %v75, %v51
    %77 = vset.pattern.permute.xlu0 5
    %78 = vperm.xlu0 %77, %v25
    %v79 = vpop.permute.xlu0 %78
    %v81 = vmul.f32 %v79, %v46
    %v82 = vadd.f32 %v81, %v51
    %83 = vset.pattern.permute.xlu0 6
    %84 = vperm.xlu0 %83, %v25
    %v85 = vpop.permute.xlu0 %84
    %v87 = vmul.f32 %v85, %v46
    %v88 = vadd.f32 %v87, %v51
    %89 = vset.pattern.permute.xlu0 7
    %90 = vperm.xlu0 %89, %v25
    %v91 = vpop.permute.xlu0 %90
    %v93 = vmul.f32 %v91, %v46
    %v94 = vadd.f32 %v93, %v51
    %v95 = vld [vmem:[#allocation2 + $0x8] sm:$0xff]
    %v96 = vld [vmem:[#allocation2 + $0x10] sm:$0xff]
    %v97 = vld [vmem:[#allocation2 + $0x18] sm:$0xff]
    %v98 = vld [vmem:[#allocation2 + $0x20] sm:$0xff]
    %vm99 = vcmask 261120
    %v101 = vsel %vm99, 0.0, 0
    %103 = vmatprep.subr.mxu0 0.0
    %104 = vmatpush1.msra.mxu0 %v95
    %105 = vmatprep.subr.mxu0 0.0
    %106 = vmatpush1.msra.mxu0 %v96
    %107 = vmatprep.subr.mxu0 0.0
    %108 = vmatpush1.msra.mxu0 %v97
    %109 = vmatprep.subr.mxu0 0.0
    %110 = vmatpush1.msra.mxu0 %v98
    %111 = vmatprep.subr.mxu0 0.0
    %112 = vmatpush1.msra.mxu0 0.0
    %113 = vmatprep.subr.mxu0 0.0
    %114 = vmatpush1.msra.mxu0 0.0
    %115 = vmatprep.subr.mxu0 0.0
    %116 = vmatpush1.msra.mxu0 0.0
    %117 = vmatprep.subr.mxu0 0.0
    %118 = vmatpush1.msra.mxu0 0.0
    %119 = vmatprep.subr.mxu0 0.0
    %120 = vmatpush1.msra.mxu0 0.0
    %121 = vmatprep.subr.mxu0 0.0
    %122 = vmatpush1.msra.mxu0 0.0
    %123 = vmatprep.subr.mxu0 0.0
    %124 = vmatpush1.msra.mxu0 0.0
    %125 = vmatprep.subr.mxu0 0.0
    %126 = vmatpush1.msra.mxu0 0.0
    %127 = vmatprep.subr.mxu0 0.0
    %128 = vmatpush1.msra.mxu0 0.0
    %129 = vmatprep.subr.mxu0 0.0
    %130 = vmatpush1.msra.mxu0 0.0
    %131 = vmatprep.subr.mxu0 0.0
    %132 = vmatpush1.msra.mxu0 0.0
    %133 = vmatprep.subr.mxu0 0.0
    %134 = vmatpush1.msra.mxu0 0.0
    %135 = vmatprep.subr.mxu0 0.0
    %136 = vmatpush1.msra.mxu0 0.0
    %137 = vmatprep.subr.mxu0 0.0
    %138 = vmatpush1.msra.mxu0 0.0
    %139 = vmatprep.subr.mxu0 0.0
    %140 = vmatpush1.msra.mxu0 0.0
    %141 = vmatprep.subr.mxu0 0.0
    %142 = vmatpush1.msra.mxu0 0.0
    %143 = vmatprep.subr.mxu0 0.0
    %144 = vmatpush1.msra.mxu0 0.0
    %145 = vmatprep.subr.mxu0 0.0
    %146 = vmatpush1.msra.mxu0 0.0
    %147 = vmatprep.subr.mxu0 0.0
    %148 = vmatpush1.msra.mxu0 0.0
    %149 = vmatprep.subr.mxu0 0.0
    %150 = vmatpush1.msra.mxu0 0.0
    %151 = vmatprep.subr.mxu0 0.0
    %152 = vmatpush1.msra.mxu0 0.0
    %153 = vmatprep.subr.mxu0 0.0
    %154 = vmatpush1.msra.mxu0 0.0
    %155 = vmatprep.subr.mxu0 0.0
    %156 = vmatpush1.msra.mxu0 0.0
    %157 = vmatprep.subr.mxu0 0.0
    %158 = vmatpush1.msra.mxu0 0.0
    %159 = vmatprep.subr.mxu0 0.0
    %160 = vmatpush1.msra.mxu0 0.0
    %161 = vmatprep.subr.mxu0 0.0
    %162 = vmatpush1.msra.mxu0 0.0
    %163 = vmatprep.subr.mxu0 0.0
    %164 = vmatpush1.msra.mxu0 0.0
    %165 = vmatprep.subr.mxu0 0.0
    %166 = vmatpush1.msra.mxu0 0.0
    %167 = vmatprep.mubr.f32.mxu0 0.0
    %168 = vmatmul.mubr.f32.gmra.mrb[0].mxu0 %v101
    %v169 = vpop.f32.mrb[0].mxu0
    %v170 = vadd.f32 0.0, %v169
    %v171 = vpop.f32.mrb[0].mxu0
    %172 = vdwg.mxu0
    %v173 = vadd.f32 %v52, %v170
    %v174 = vxor.u32 %v173, 2147483648
    %v175 = vmul.f32 %v174, 1.442695
    %v176 = vpow.pop %v175
    %v177 = vadd.f32 %v176, 1.0
    %v178 = vrcp.pop %v177
    %v179 = vmul.f32 1.0, %v178
    %v180 = vmul.f32 %v179, %v33
    %v181 = vsub.f32 %v180, %v32
    %v182 = vmul.f32 %v181, 0.0
    %184 = vrot.lane.b32.xlu0 %v181, 64
    %v185 = vpop.permute.xlu0 %184
    %v187 = vmul.f32 %v181, %v185
    %189 = vrot.lane.b32.xlu0 %v187, 32
    %v190 = vpop.permute.xlu0 %189
    %v192 = vadd.f32 %v182, %v190
    %v193 = vtanh.pop %v192
    %195 = vrot.lane.b32.xlu0 %v193, 64
    %v196 = vpop.permute.xlu0 %195
    %v198 = vmul.f32 %v181, %v196
    %v199 = vld [vmem:[#allocation2 + $0x48] sm:$0xff]
    %v200 = vld [vmem:[#allocation2 + $0x50] sm:$0xff]
    %v201 = vld [vmem:[#allocation2 + $0x58] sm:$0xff]
    %v202 = vld [vmem:[#allocation2 + $0x60] sm:$0xff]
    %203 = vmatprep.subr.mxu0 0.0
    %204 = vmatpush1.msra.mxu0 %v199
    %205 = vmatprep.subr.mxu0 0.0
    %206 = vmatpush1.msra.mxu0 %v200
    %207 = vmatprep.subr.mxu0 0.0
    %208 = vmatpush1.msra.mxu0 %v201
    %209 = vmatprep.subr.mxu0 0.0
    %210 = vmatpush1.msra.mxu0 %v202
    %211 = vmatprep.subr.mxu0 0.0
    %212 = vmatpush1.msra.mxu0 0.0
    %213 = vmatprep.subr.mxu0 0.0
    %214 = vmatpush1.msra.mxu0 0.0
    %215 = vmatprep.subr.mxu0 0.0
    %216 = vmatpush1.msra.mxu0 0.0
    %217 = vmatprep.subr.mxu0 0.0
    %218 = vmatpush1.msra.mxu0 0.0
    %219 = vmatprep.subr.mxu0 0.0
    %220 = vmatpush1.msra.mxu0 0.0
    %221 = vmatprep.subr.mxu0 0.0
    %222 = vmatpush1.msra.mxu0 0.0
    %223 = vmatprep.subr.mxu0 0.0
    %224 = vmatpush1.msra.mxu0 0.0
    %225 = vmatprep.subr.mxu0 0.0
    %226 = vmatpush1.msra.mxu0 0.0
    %227 = vmatprep.subr.mxu0 0.0
    %228 = vmatpush1.msra.mxu0 0.0
    %229 = vmatprep.subr.mxu0 0.0
    %230 = vmatpush1.msra.mxu0 0.0
    %231 = vmatprep.subr.mxu0 0.0
    %232 = vmatpush1.msra.mxu0 0.0
    %233 = vmatprep.subr.mxu0 0.0
    %234 = vmatpush1.msra.mxu0 0.0
    %235 = vmatprep.subr.mxu0 0.0
    %236 = vmatpush1.msra.mxu0 0.0
    %237 = vmatprep.subr.mxu0 0.0
    %238 = vmatpush1.msra.mxu0 0.0
    %239 = vmatprep.subr.mxu0 0.0
    %240 = vmatpush1.msra.mxu0 0.0
    %241 = vmatprep.subr.mxu0 0.0
    %242 = vmatpush1.msra.mxu0 0.0
    %243 = vmatprep.subr.mxu0 0.0
    %244 = vmatpush1.msra.mxu0 0.0
    %245 = vmatprep.subr.mxu0 0.0
    %246 = vmatpush1.msra.mxu0 0.0
    %247 = vmatprep.subr.mxu0 0.0
    %248 = vmatpush1.msra.mxu0 0.0
    %249 = vmatprep.subr.mxu0 0.0
    %250 = vmatpush1.msra.mxu0 0.0
    %251 = vmatprep.subr.mxu0 0.0
    %252 = vmatpush1.msra.mxu0 0.0
    %253 = vmatprep.subr.mxu0 0.0
    %254 = vmatpush1.msra.mxu0 0.0
    %255 = vmatprep.subr.mxu0 0.0
    %256 = vmatpush1.msra.mxu0 0.0
    %257 = vmatprep.subr.mxu0 0.0
    %258 = vmatpush1.msra.mxu0 0.0
    %259 = vmatprep.subr.mxu0 0.0
    %260 = vmatpush1.msra.mxu0 0.0
    %261 = vmatprep.subr.mxu0 0.0
    %262 = vmatpush1.msra.mxu0 0.0
    %263 = vmatprep.subr.mxu0 0.0
    %264 = vmatpush1.msra.mxu0 0.0
    %265 = vmatprep.subr.mxu0 0.0
    %266 = vmatpush1.msra.mxu0 0.0
    %267 = vmatprep.mubr.f32.mxu0 0.0
    %268 = vmatmul.mubr.f32.gmra.mrb[0].mxu0 %v101
    %v269 = vpop.f32.mrb[0].mxu0
    %v270 = vadd.f32 0.0, %v269
    %v271 = vpop.f32.mrb[0].mxu0
    %272 = vdwg.mxu0
    %v273 = vld [vmem:[#allocation2 + $0x28] sm:$0xff]
    %v274 = vld [vmem:[#allocation2 + $0x30] sm:$0xff]
    %v275 = vld [vmem:[#allocation2 + $0x38] sm:$0xff]
    %v276 = vld [vmem:[#allocation2 + $0x40] sm:$0xff]
    %278 = vrot.lane.b32.xlu0 %v198, 32
    %v279 = vpop.permute.xlu0 %278
    %v280 = vsel %vm99, %v279, 0
    %282 = vmatprep.subr.mxu0 0.0
    %283 = vmatpush1.msra.mxu0 %v273
    %284 = vmatprep.subr.mxu0 0.0
    %285 = vmatpush1.msra.mxu0 %v274
    %286 = vmatprep.subr.mxu0 0.0
    %287 = vmatpush1.msra.mxu0 %v275
    %288 = vmatprep.subr.mxu0 0.0
    %289 = vmatpush1.msra.mxu0 %v276
    %290 = vmatprep.subr.mxu0 0.0
    %291 = vmatpush1.msra.mxu0 0.0
    %292 = vmatprep.subr.mxu0 0.0
    %293 = vmatpush1.msra.mxu0 0.0
    %294 = vmatprep.subr.mxu0 0.0
    %295 = vmatpush1.msra.mxu0 0.0
    %296 = vmatprep.subr.mxu0 0.0
    %297 = vmatpush1.msra.mxu0 0.0
    %298 = vmatprep.subr.mxu0 0.0
    %299 = vmatpush1.msra.mxu0 0.0
    %300 = vmatprep.subr.mxu0 0.0
    %301 = vmatpush1.msra.mxu0 0.0
    %302 = vmatprep.subr.mxu0 0.0
    %303 = vmatpush1.msra.mxu0 0.0
    %304 = vmatprep.subr.mxu0 0.0
    %305 = vmatpush1.msra.mxu0 0.0
    %306 = vmatprep.subr.mxu0 0.0
    %307 = vmatpush1.msra.mxu0 0.0
    %308 = vmatprep.subr.mxu0 0.0
    %309 = vmatpush1.msra.mxu0 0.0
    %310 = vmatprep.subr.mxu0 0.0
    %311 = vmatpush1.msra.mxu0 0.0
    %312 = vmatprep.subr.mxu0 0.0
    %313 = vmatpush1.msra.mxu0 0.0
    %314 = vmatprep.subr.mxu0 0.0
    %315 = vmatpush1.msra.mxu0 0.0
    %316 = vmatprep.subr.mxu0 0.0
    %317 = vmatpush1.msra.mxu0 0.0
    %318 = vmatprep.subr.mxu0 0.0
    %319 = vmatpush1.msra.mxu0 0.0
    %320 = vmatprep.subr.mxu0 0.0
    %321 = vmatpush1.msra.mxu0 0.0
    %322 = vmatprep.subr.mxu0 0.0
    %323 = vmatpush1.msra.mxu0 0.0
    %324 = vmatprep.subr.mxu0 0.0
    %325 = vmatpush1.msra.mxu0 0.0
    %326 = vmatprep.subr.mxu0 0.0
    %327 = vmatpush1.msra.mxu0 0.0
    %328 = vmatprep.subr.mxu0 0.0
    %329 = vmatpush1.msra.mxu0 0.0
    %330 = vmatprep.subr.mxu0 0.0
    %331 = vmatpush1.msra.mxu0 0.0
    %332 = vmatprep.subr.mxu0 0.0
    %333 = vmatpush1.msra.mxu0 0.0
    %334 = vmatprep.subr.mxu0 0.0
    %335 = vmatpush1.msra.mxu0 0.0
    %336 = vmatprep.subr.mxu0 0.0
    %337 = vmatpush1.msra.mxu0 0.0
    %338 = vmatprep.subr.mxu0 0.0
    %339 = vmatpush1.msra.mxu0 0.0
    %340 = vmatprep.subr.mxu0 0.0
    %341 = vmatpush1.msra.mxu0 0.0
    %342 = vmatprep.subr.mxu0 0.0
    %343 = vmatpush1.msra.mxu0 0.0
    %344 = vmatprep.subr.mxu0 0.0
    %345 = vmatpush1.msra.mxu0 0.0
    %346 = vmatprep.mubr.f32.mxu0 0.0
    %347 = vmatmul.mubr.f32.gmra.mrb[0].mxu0 %v280
    %v348 = vpop.f32.mrb[0].mxu0
    %v349 = vadd.f32 %v270, %v348
    %v350 = vpop.f32.mrb[0].mxu0
    %351 = vdwg.mxu0
    %v352 = vlaneseq
    %v353 = vshrl.u32 %v352, 7
    %v354 = vsub.s32 0, %v353
    %v355 = vrot.slane %v36, %v354
    %v356 = vadd.f32 %v349, %v355
    %v357 = vxor.u32 %v356, 2147483648
    %v358 = vmul.f32 %v357, 1.442695
    %v359 = vpow.pop %v358
    %v360 = vadd.f32 %v359, 1.0
    %v361 = vrcp.pop %v360
    %v362 = vmul.f32 1.0, %v361
    %v363 = vmul.f32 %v362, %v33
    %v364 = vsub.f32 %v363, %v32
    %v365 = vmul.f32 %v364, 0.0
    %367 = vrot.lane.b32.xlu0 %v364, 64
    %v368 = vpop.permute.xlu0 %367
    %v370 = vmul.f32 %v364, %v368
    %372 = vrot.lane.b32.xlu0 %v370, 32
    %v373 = vpop.permute.xlu0 %372
    %v375 = vadd.f32 %v365, %v373
    %v376 = vtanh.pop %v375
    %378 = vrot.lane.b32.xlu0 %v376, 64
    %v379 = vpop.permute.xlu0 %378
    %v381 = vmul.f32 %v364, %v379
    %v382 = vld [vmem:[#allocation2 + $0x88] sm:$0xff]
    %v383 = vld [vmem:[#allocation2 + $0x90] sm:$0xff]
    %v384 = vld [vmem:[#allocation2 + $0x98] sm:$0xff]
    %v385 = vld [vmem:[#allocation2 + $0xa0] sm:$0xff]
    %386 = vmatprep.subr.mxu0 0.0
    %387 = vmatpush1.msra.mxu0 %v382
    %388 = vmatprep.subr.mxu0 0.0
    %389 = vmatpush1.msra.mxu0 %v383
    %390 = vmatprep.subr.mxu0 0.0
    %391 = vmatpush1.msra.mxu0 %v384
    %392 = vmatprep.subr.mxu0 0.0
    %393 = vmatpush1.msra.mxu0 %v385
    %394 = vmatprep.subr.mxu0 0.0
    %395 = vmatpush1.msra.mxu0 0.0
    %396 = vmatprep.subr.mxu0 0.0
    %397 = vmatpush1.msra.mxu0 0.0
    %398 = vmatprep.subr.mxu0 0.0
    %399 = vmatpush1.msra.mxu0 0.0
    %400 = vmatprep.subr.mxu0 0.0
    %401 = vmatpush1.msra.mxu0 0.0
    %402 = vmatprep.subr.mxu0 0.0
    %403 = vmatpush1.msra.mxu0 0.0
    %404 = vmatprep.subr.mxu0 0.0
    %405 = vmatpush1.msra.mxu0 0.0
    %406 = vmatprep.subr.mxu0 0.0
    %407 = vmatpush1.msra.mxu0 0.0
    %408 = vmatprep.subr.mxu0 0.0
    %409 = vmatpush1.msra.mxu0 0.0
    %410 = vmatprep.subr.mxu0 0.0
    %411 = vmatpush1.msra.mxu0 0.0
    %412 = vmatprep.subr.mxu0 0.0
    %413 = vmatpush1.msra.mxu0 0.0
    %414 = vmatprep.subr.mxu0 0.0
    %415 = vmatpush1.msra.mxu0 0.0
    %416 = vmatprep.subr.mxu0 0.0
    %417 = vmatpush1.msra.mxu0 0.0
    %418 = vmatprep.subr.mxu0 0.0
    %419 = vmatpush1.msra.mxu0 0.0
    %420 = vmatprep.subr.mxu0 0.0
    %421 = vmatpush1.msra.mxu0 0.0
    %422 = vmatprep.subr.mxu0 0.0
    %423 = vmatpush1.msra.mxu0 0.0
    %424 = vmatprep.subr.mxu0 0.0
    %425 = vmatpush1.msra.mxu0 0.0
    %426 = vmatprep.subr.mxu0 0.0
    %427 = vmatpush1.msra.mxu0 0.0
    %428 = vmatprep.subr.mxu0 0.0
    %429 = vmatpush1.msra.mxu0 0.0
    %430 = vmatprep.subr.mxu0 0.0
    %431 = vmatpush1.msra.mxu0 0.0
    %432 = vmatprep.subr.mxu0 0.0
    %433 = vmatpush1.msra.mxu0 0.0
    %434 = vmatprep.subr.mxu0 0.0
    %435 = vmatpush1.msra.mxu0 0.0
    %436 = vmatprep.subr.mxu0 0.0
    %437 = vmatpush1.msra.mxu0 0.0
    %438 = vmatprep.subr.mxu0 0.0
    %439 = vmatpush1.msra.mxu0 0.0
    %440 = vmatprep.subr.mxu0 0.0
    %441 = vmatpush1.msra.mxu0 0.0
    %442 = vmatprep.subr.mxu0 0.0
    %443 = vmatpush1.msra.mxu0 0.0
    %444 = vmatprep.subr.mxu0 0.0
    %445 = vmatpush1.msra.mxu0 0.0
    %446 = vmatprep.subr.mxu0 0.0
    %447 = vmatpush1.msra.mxu0 0.0
    %448 = vmatprep.subr.mxu0 0.0
    %449 = vmatpush1.msra.mxu0 0.0
    %450 = vmatprep.mubr.f32.mxu0 0.0
    %451 = vmatmul.mubr.f32.gmra.mrb[0].mxu0 %v101
    %v452 = vpop.f32.mrb[0].mxu0
    %v453 = vadd.f32 0.0, %v452
    %v454 = vpop.f32.mrb[0].mxu0
    %455 = vdwg.mxu0
    %v456 = vld [vmem:[#allocation2 + $0x68] sm:$0xff]
    %v457 = vld [vmem:[#allocation2 + $0x70] sm:$0xff]
    %v458 = vld [vmem:[#allocation2 + $0x78] sm:$0xff]
    %v459 = vld [vmem:[#allocation2 + $0x80] sm:$0xff]
    %461 = vrot.lane.b32.xlu0 %v381, 32
    %v462 = vpop.permute.xlu0 %461
    %v463 = vsel %vm99, %v462, 0
    %465 = vmatprep.subr.mxu0 0.0
    %466 = vmatpush1.msra.mxu0 %v456
    %467 = vmatprep.subr.mxu0 0.0
    %468 = vmatpush1.msra.mxu0 %v457
    %469 = vmatprep.subr.mxu0 0.0
    %470 = vmatpush1.msra.mxu0 %v458
    %471 = vmatprep.subr.mxu0 0.0
    %472 = vmatpush1.msra.mxu0 %v459
    %473 = vmatprep.subr.mxu0 0.0
    %474 = vmatpush1.msra.mxu0 0.0
    %475 = vmatprep.subr.mxu0 0.0
    %476 = vmatpush1.msra.mxu0 0.0
    %477 = vmatprep.subr.mxu0 0.0
    %478 = vmatpush1.msra.mxu0 0.0
    %479 = vmatprep.subr.mxu0 0.0
    %480 = vmatpush1.msra.mxu0 0.0
    %481 = vmatprep.subr.mxu0 0.0
    %482 = vmatpush1.msra.mxu0 0.0
    %483 = vmatprep.subr.mxu0 0.0
    %484 = vmatpush1.msra.mxu0 0.0
    %485 = vmatprep.subr.mxu0 0.0
    %486 = vmatpush1.msra.mxu0 0.0
    %487 = vmatprep.subr.mxu0 0.0
    %488 = vmatpush1.msra.mxu0 0.0
    %489 = vmatprep.subr.mxu0 0.0
    %490 = vmatpush1.msra.mxu0 0.0
    %491 = vmatprep.subr.mxu0 0.0
    %492 = vmatpush1.msra.mxu0 0.0
    %493 = vmatprep.subr.mxu0 0.0
    %494 = vmatpush1.msra.mxu0 0.0
    %495 = vmatprep.subr.mxu0 0.0
    %496 = vmatpush1.msra.mxu0 0.0
    %497 = vmatprep.subr.mxu0 0.0
    %498 = vmatpush1.msra.mxu0 0.0
    %499 = vmatprep.subr.mxu0 0.0
    %500 = vmatpush1.msra.mxu0 0.0
    %501 = vmatprep.subr.mxu0 0.0
    %502 = vmatpush1.msra.mxu0 0.0
    %503 = vmatprep.subr.mxu0 0.0
    %504 = vmatpush1.msra.mxu0 0.0
    %505 = vmatprep.subr.mxu0 0.0
    %506 = vmatpush1.msra.mxu0 0.0
    %507 = vmatprep.subr.mxu0 0.0
    %508 = vmatpush1.msra.mxu0 0.0
    %509 = vmatprep.subr.mxu0 0.0
    %510 = vmatpush1.msra.mxu0 0.0
    %511 = vmatprep.subr.mxu0 0.0
    %512 = vmatpush1.msra.mxu0 0.0
    %513 = vmatprep.subr.mxu0 0.0
    %514 = vmatpush1.msra.mxu0 0.0
    %515 = vmatprep.subr.mxu0 0.0
    %516 = vmatpush1.msra.mxu0 0.0
    %517 = vmatprep.subr.mxu0 0.0
    %518 = vmatpush1.msra.mxu0 0.0
    %519 = vmatprep.subr.mxu0 0.0
    %520 = vmatpush1.msra.mxu0 0.0
    %521 = vmatprep.subr.mxu0 0.0
    %522 = vmatpush1.msra.mxu0 0.0
    %523 = vmatprep.subr.mxu0 0.0
    %524 = vmatpush1.msra.mxu0 0.0
    %525 = vmatprep.subr.mxu0 0.0
    %526 = vmatpush1.msra.mxu0 0.0
    %527 = vmatprep.subr.mxu0 0.0
    %528 = vmatpush1.msra.mxu0 0.0
    %529 = vmatprep.mubr.f32.mxu0 0.0
    %530 = vmatmul.mubr.f32.gmra.mrb[0].mxu0 %v463
    %v531 = vpop.f32.mrb[0].mxu0
    %v532 = vadd.f32 %v453, %v531
    %v533 = vpop.f32.mrb[0].mxu0
    %534 = vdwg.mxu0
    %v535 = vlaneseq
    %v536 = vshrl.u32 %v535, 7
    %v537 = vsub.s32 0, %v536
    %v538 = vrot.slane %v37, %v537
    %v539 = vadd.f32 %v532, %v538
    %v540 = vxor.u32 %v539, 2147483648
    %v541 = vmul.f32 %v540, 1.442695
    %v542 = vpow.pop %v541
    %v543 = vadd.f32 %v542, 1.0
    %v544 = vrcp.pop %v543
    %v545 = vmul.f32 1.0, %v544
    %v546 = vmul.f32 %v545, %v33
    %v547 = vsub.f32 %v546, %v32
    %v548 = vmul.f32 %v547, 0.0
    %550 = vrot.lane.b32.xlu0 %v547, 64
    %v551 = vpop.permute.xlu0 %550
    %v553 = vmul.f32 %v547, %v551
    %555 = vrot.lane.b32.xlu0 %v553, 32
    %v556 = vpop.permute.xlu0 %555
    %v558 = vadd.f32 %v548, %v556
    %v559 = vtanh.pop %v558
    %561 = vrot.lane.b32.xlu0 %v559, 64
    %v562 = vpop.permute.xlu0 %561
    %v564 = vmul.f32 %v547, %v562
    %565 = vmatprep.subr.mxu0 0.0
    %566 = vmatpush1.msra.mxu0 %v95
    %567 = vmatprep.subr.mxu0 0.0
    %568 = vmatpush1.msra.mxu0 %v96
    %569 = vmatprep.subr.mxu0 0.0
    %570 = vmatpush1.msra.mxu0 %v97
    %571 = vmatprep.subr.mxu0 0.0
    %572 = vmatpush1.msra.mxu0 %v98
    %573 = vmatprep.subr.mxu0 0.0
    %574 = vmatpush1.msra.mxu0 0.0
    %575 = vmatprep.subr.mxu0 0.0
    %576 = vmatpush1.msra.mxu0 0.0
    %577 = vmatprep.subr.mxu0 0.0
    %578 = vmatpush1.msra.mxu0 0.0
    %579 = vmatprep.subr.mxu0 0.0
    %580 = vmatpush1.msra.mxu0 0.0
    %581 = vmatprep.subr.mxu0 0.0
    %582 = vmatpush1.msra.mxu0 0.0
    %583 = vmatprep.subr.mxu0 0.0
    %584 = vmatpush1.msra.mxu0 0.0
    %585 = vmatprep.subr.mxu0 0.0
    %586 = vmatpush1.msra.mxu0 0.0
    %587 = vmatprep.subr.mxu0 0.0
    %588 = vmatpush1.msra.mxu0 0.0
    %589 = vmatprep.subr.mxu0 0.0
    %590 = vmatpush1.msra.mxu0 0.0
    %591 = vmatprep.subr.mxu0 0.0
    %592 = vmatpush1.msra.mxu0 0.0
    %593 = vmatprep.subr.mxu0 0.0
    %594 = vmatpush1.msra.mxu0 0.0
    %595 = vmatprep.subr.mxu0 0.0
    %596 = vmatpush1.msra.mxu0 0.0
    %597 = vmatprep.subr.mxu0 0.0
    %598 = vmatpush1.msra.mxu0 0.0
    %599 = vmatprep.subr.mxu0 0.0
    %600 = vmatpush1.msra.mxu0 0.0
    %601 = vmatprep.subr.mxu0 0.0
    %602 = vmatpush1.msra.mxu0 0.0
    %603 = vmatprep.subr.mxu0 0.0
    %604 = vmatpush1.msra.mxu0 0.0
    %605 = vmatprep.subr.mxu0 0.0
    %606 = vmatpush1.msra.mxu0 0.0
    %607 = vmatprep.subr.mxu0 0.0
    %608 = vmatpush1.msra.mxu0 0.0
    %609 = vmatprep.subr.mxu0 0.0
    %610 = vmatpush1.msra.mxu0 0.0
    %611 = vmatprep.subr.mxu0 0.0
    %612 = vmatpush1.msra.mxu0 0.0
    %613 = vmatprep.subr.mxu0 0.0
    %614 = vmatpush1.msra.mxu0 0.0
    %615 = vmatprep.subr.mxu0 0.0
    %616 = vmatpush1.msra.mxu0 0.0
    %617 = vmatprep.subr.mxu0 0.0
    %618 = vmatpush1.msra.mxu0 0.0
    %619 = vmatprep.subr.mxu0 0.0
    %620 = vmatpush1.msra.mxu0 0.0
    %621 = vmatprep.subr.mxu0 0.0
    %622 = vmatpush1.msra.mxu0 0.0
    %623 = vmatprep.subr.mxu0 0.0
    %624 = vmatpush1.msra.mxu0 0.0
    %625 = vmatprep.subr.mxu0 0.0
    %626 = vmatpush1.msra.mxu0 0.0
    %627 = vmatprep.subr.mxu0 0.0
    %628 = vmatpush1.msra.mxu0 0.0
    %629 = vmatprep.mubr.f32.mxu0 0.0
    %630 = vmatmul.mubr.f32.gmra.mrb[0].mxu0 %v280
    %v631 = vpop.f32.mrb[0].mxu0
    %v632 = vadd.f32 0.0, %v631
    %v633 = vpop.f32.mrb[0].mxu0
    %634 = vdwg.mxu0
    %v635 = vadd.f32 %v58, %v632
    %v636 = vxor.u32 %v635, 2147483648
    %v637 = vmul.f32 %v636, 1.442695
    %v638 = vpow.pop %v637
    %v639 = vadd.f32 %v638, 1.0
    %v640 = vrcp.pop %v639
    %v641 = vmul.f32 1.0, %v640
    %v642 = vmul.f32 %v641, %v33
    %v643 = vsub.f32 %v642, %v32
    %v644 = vmul.f32 %v643, %v192
    %646 = vrot.lane.b32.xlu0 %v643, 64
    %v647 = vpop.permute.xlu0 %646
    %v649 = vmul.f32 %v643, %v647
    %651 = vrot.lane.b32.xlu0 %v649, 32
    %v652 = vpop.permute.xlu0 %651
    %v654 = vadd.f32 %v644, %v652
    %v655 = vtanh.pop %v654
    %657 = vrot.lane.b32.xlu0 %v655, 64
    %v658 = vpop.permute.xlu0 %657
    %v660 = vmul.f32 %v643, %v658
    %661 = vmatprep.subr.mxu0 0.0
    %662 = vmatpush1.msra.mxu0 %v199
    %663 = vmatprep.subr.mxu0 0.0
    %664 = vmatpush1.msra.mxu0 %v200
    %665 = vmatprep.subr.mxu0 0.0
    %666 = vmatpush1.msra.mxu0 %v201
    %667 = vmatprep.subr.mxu0 0.0
    %668 = vmatpush1.msra.mxu0 %v202
    %669 = vmatprep.subr.mxu0 0.0
    %670 = vmatpush1.msra.mxu0 0.0
    %671 = vmatprep.subr.mxu0 0.0
    %672 = vmatpush1.msra.mxu0 0.0
    %673 = vmatprep.subr.mxu0 0.0
    %674 = vmatpush1.msra.mxu0 0.0
    %675 = vmatprep.subr.mxu0 0.0
    %676 = vmatpush1.msra.mxu0 0.0
    %677 = vmatprep.subr.mxu0 0.0
    %678 = vmatpush1.msra.mxu0 0.0
    %679 = vmatprep.subr.mxu0 0.0
    %680 = vmatpush1.msra.mxu0 0.0
    %681 = vmatprep.subr.mxu0 0.0
    %682 = vmatpush1.msra.mxu0 0.0
    %683 = vmatprep.subr.mxu0 0.0
    %684 = vmatpush1.msra.mxu0 0.0
    %685 = vmatprep.subr.mxu0 0.0
    %686 = vmatpush1.msra.mxu0 0.0
    %687 = vmatprep.subr.mxu0 0.0
    %688 = vmatpush1.msra.mxu0 0.0
    %689 = vmatprep.subr.mxu0 0.0
    %690 = vmatpush1.msra.mxu0 0.0
    %691 = vmatprep.subr.mxu0 0.0
    %692 = vmatpush1.msra.mxu0 0.0
    %693 = vmatprep.subr.mxu0 0.0
    %694 = vmatpush1.msra.mxu0 0.0
    %695 = vmatprep.subr.mxu0 0.0
    %696 = vmatpush1.msra.mxu0 0.0
    %697 = vmatprep.subr.mxu0 0.0
    %698 = vmatpush1.msra.mxu0 0.0
    %699 = vmatprep.subr.mxu0 0.0
    %700 = vmatpush1.msra.mxu0 0.0
    %701 = vmatprep.subr.mxu0 0.0
    %702 = vmatpush1.msra.mxu0 0.0
    %703 = vmatprep.subr.mxu0 0.0
    %704 = vmatpush1.msra.mxu0 0.0
    %705 = vmatprep.subr.mxu0 0.0
    %706 = vmatpush1.msra.mxu0 0.0
    %707 = vmatprep.subr.mxu0 0.0
    %708 = vmatpush1.msra.mxu0 0.0
    %709 = vmatprep.subr.mxu0 0.0
    %710 = vmatpush1.msra.mxu0 0.0
    %711 = vmatprep.subr.mxu0 0.0
    %712 = vmatpush1.msra.mxu0 0.0
    %713 = vmatprep.subr.mxu0 0.0
    %714 = vmatpush1.msra.mxu0 0.0
    %715 = vmatprep.subr.mxu0 0.0
    %716 = vmatpush1.msra.mxu0 0.0
    %717 = vmatprep.subr.mxu0 0.0
    %718 = vmatpush1.msra.mxu0 0.0
    %719 = vmatprep.subr.mxu0 0.0
    %720 = vmatpush1.msra.mxu0 0.0
    %721 = vmatprep.subr.mxu0 0.0
    %722 = vmatpush1.msra.mxu0 0.0
    %723 = vmatprep.subr.mxu0 0.0
    %724 = vmatpush1.msra.mxu0 0.0
    %725 = vmatprep.mubr.f32.mxu0 0.0
    %726 = vmatmul.mubr.f32.gmra.mrb[0].mxu0 %v463
    %v727 = vpop.f32.mrb[0].mxu0
    %v728 = vadd.f32 0.0, %v727
    %v729 = vpop.f32.mrb[0].mxu0
    %730 = vdwg.mxu0
    %732 = vrot.lane.b32.xlu0 %v660, 32
    %v733 = vpop.permute.xlu0 %732
    %v734 = vsel %vm99, %v733, 0
    %736 = vmatprep.subr.mxu0 0.0
    %737 = vmatpush1.msra.mxu0 %v273
    %738 = vmatprep.subr.mxu0 0.0
    %739 = vmatpush1.msra.mxu0 %v274
    %740 = vmatprep.subr.mxu0 0.0
    %741 = vmatpush1.msra.mxu0 %v275
    %742 = vmatprep.subr.mxu0 0.0
    %743 = vmatpush1.msra.mxu0 %v276
    %744 = vmatprep.subr.mxu0 0.0
    %745 = vmatpush1.msra.mxu0 0.0
    %746 = vmatprep.subr.mxu0 0.0
    %747 = vmatpush1.msra.mxu0 0.0
    %748 = vmatprep.subr.mxu0 0.0
    %749 = vmatpush1.msra.mxu0 0.0
    %750 = vmatprep.subr.mxu0 0.0
    %751 = vmatpush1.msra.mxu0 0.0
    %752 = vmatprep.subr.mxu0 0.0
    %753 = vmatpush1.msra.mxu0 0.0
    %754 = vmatprep.subr.mxu0 0.0
    %755 = vmatpush1.msra.mxu0 0.0
    %756 = vmatprep.subr.mxu0 0.0
    %757 = vmatpush1.msra.mxu0 0.0
    %758 = vmatprep.subr.mxu0 0.0
    %759 = vmatpush1.msra.mxu0 0.0
    %760 = vmatprep.subr.mxu0 0.0
    %761 = vmatpush1.msra.mxu0 0.0
    %762 = vmatprep.subr.mxu0 0.0
    %763 = vmatpush1.msra.mxu0 0.0
    %764 = vmatprep.subr.mxu0 0.0
    %765 = vmatpush1.msra.mxu0 0.0
    %766 = vmatprep.subr.mxu0 0.0
    %767 = vmatpush1.msra.mxu0 0.0
    %768 = vmatprep.subr.mxu0 0.0
    %769 = vmatpush1.msra.mxu0 0.0
    %770 = vmatprep.subr.mxu0 0.0
    %771 = vmatpush1.msra.mxu0 0.0
    %772 = vmatprep.subr.mxu0 0.0
    %773 = vmatpush1.msra.mxu0 0.0
    %774 = vmatprep.subr.mxu0 0.0
    %775 = vmatpush1.msra.mxu0 0.0
    %776 = vmatprep.subr.mxu0 0.0
    %777 = vmatpush1.msra.mxu0 0.0
    %778 = vmatprep.subr.mxu0 0.0
    %779 = vmatpush1.msra.mxu0 0.0
    %780 = vmatprep.subr.mxu0 0.0
    %781 = vmatpush1.msra.mxu0 0.0
    %782 = vmatprep.subr.mxu0 0.0
    %783 = vmatpush1.msra.mxu0 0.0
    %784 = vmatprep.subr.mxu0 0.0
    %785 = vmatpush1.msra.mxu0 0.0
    %786 = vmatprep.subr.mxu0 0.0
    %787 = vmatpush1.msra.mxu0 0.0
    %788 = vmatprep.subr.mxu0 0.0
    %789 = vmatpush1.msra.mxu0 0.0
    %790 = vmatprep.subr.mxu0 0.0
    %791 = vmatpush1.msra.mxu0 0.0
    %792 = vmatprep.subr.mxu0 0.0
    %793 = vmatpush1.msra.mxu0 0.0
    %794 = vmatprep.subr.mxu0 0.0
    %795 = vmatpush1.msra.mxu0 0.0
    %796 = vmatprep.subr.mxu0 0.0
    %797 = vmatpush1.msra.mxu0 0.0
    %798 = vmatprep.subr.mxu0 0.0
    %799 = vmatpush1.msra.mxu0 0.0
    %800 = vmatprep.mubr.f32.mxu0 0.0
    %801 = vmatmul.mubr.f32.gmra.mrb[0].mxu0 %v734
    %v802 = vpop.f32.mrb[0].mxu0
    %v803 = vadd.f32 %v728, %v802
    %v804 = vpop.f32.mrb[0].mxu0
    %805 = vdwg.mxu0
    %v806 = vadd.f32 %v803, %v355
    %v807 = vxor.u32 %v806, 2147483648
    %v808 = vmul.f32 %v807, 1.442695
    %v809 = vpow.pop %v808
    %v810 = vadd.f32 %v809, 1.0
    %v811 = vrcp.pop %v810
    %v812 = vmul.f32 1.0, %v811
    %v813 = vmul.f32 %v812, %v33
    %v814 = vsub.f32 %v813, %v32
    %v815 = vmul.f32 %v814, %v375
    %817 = vrot.lane.b32.xlu0 %v814, 64
    %v818 = vpop.permute.xlu0 %817
    %v820 = vmul.f32 %v814, %v818
    %822 = vrot.lane.b32.xlu0 %v820, 32
    %v823 = vpop.permute.xlu0 %822
    %v825 = vadd.f32 %v815, %v823
    %v826 = vtanh.pop %v825
    %828 = vrot.lane.b32.xlu0 %v826, 64
    %v829 = vpop.permute.xlu0 %828
    %v831 = vmul.f32 %v814, %v829
    %833 = vrot.lane.b32.xlu0 %v564, 32
    %v834 = vpop.permute.xlu0 %833
    %v835 = vsel %vm99, %v834, 0
    %837 = vmatprep.subr.mxu0 0.0
    %838 = vmatpush1.msra.mxu0 %v382
    %839 = vmatprep.subr.mxu0 0.0
    %840 = vmatpush1.msra.mxu0 %v383
    %841 = vmatprep.subr.mxu0 0.0
    %842 = vmatpush1.msra.mxu0 %v384
    %843 = vmatprep.subr.mxu0 0.0
    %844 = vmatpush1.msra.mxu0 %v385
    %845 = vmatprep.subr.mxu0 0.0
    %846 = vmatpush1.msra.mxu0 0.0
    %847 = vmatprep.subr.mxu0 0.0
    %848 = vmatpush1.msra.mxu0 0.0
    %849 = vmatprep.subr.mxu0 0.0
    %850 = vmatpush1.msra.mxu0 0.0
    %851 = vmatprep.subr.mxu0 0.0
    %852 = vmatpush1.msra.mxu0 0.0
    %853 = vmatprep.subr.mxu0 0.0
    %854 = vmatpush1.msra.mxu0 0.0
    %855 = vmatprep.subr.mxu0 0.0
    %856 = vmatpush1.msra.mxu0 0.0
    %857 = vmatprep.subr.mxu0 0.0
    %858 = vmatpush1.msra.mxu0 0.0
    %859 = vmatprep.subr.mxu0 0.0
    %860 = vmatpush1.msra.mxu0 0.0
    %861 = vmatprep.subr.mxu0 0.0
    %862 = vmatpush1.msra.mxu0 0.0
    %863 = vmatprep.subr.mxu0 0.0
    %864 = vmatpush1.msra.mxu0 0.0
    %865 = vmatprep.subr.mxu0 0.0
    %866 = vmatpush1.msra.mxu0 0.0
    %867 = vmatprep.subr.mxu0 0.0
    %868 = vmatpush1.msra.mxu0 0.0
    %869 = vmatprep.subr.mxu0 0.0
    %870 = vmatpush1.msra.mxu0 0.0
    %871 = vmatprep.subr.mxu0 0.0
    %872 = vmatpush1.msra.mxu0 0.0
    %873 = vmatprep.subr.mxu0 0.0
    %874 = vmatpush1.msra.mxu0 0.0
    %875 = vmatprep.subr.mxu0 0.0
    %876 = vmatpush1.msra.mxu0 0.0
    %877 = vmatprep.subr.mxu0 0.0
    %878 = vmatpush1.msra.mxu0 0.0
    %879 = vmatprep.subr.mxu0 0.0
    %880 = vmatpush1.msra.mxu0 0.0
    %881 = vmatprep.subr.mxu0 0.0
    %882 = vmatpush1.msra.mxu0 0.0
    %883 = vmatprep.subr.mxu0 0.0
    %884 = vmatpush1.msra.mxu0 0.0
    %885 = vmatprep.subr.mxu0 0.0
    %886 = vmatpush1.msra.mxu0 0.0
    %887 = vmatprep.subr.mxu0 0.0
    %888 = vmatpush1.msra.mxu0 0.0
    %889 = vmatprep.subr.mxu0 0.0
    %890 = vmatpush1.msra.mxu0 0.0
    %891 = vmatprep.subr.mxu0 0.0
    %892 = vmatpush1.msra.mxu0 0.0
    %893 = vmatprep.subr.mxu0 0.0
    %894 = vmatpush1.msra.mxu0 0.0
    %895 = vmatprep.subr.mxu0 0.0
    %896 = vmatpush1.msra.mxu0 0.0
    %897 = vmatprep.subr.mxu0 0.0
    %898 = vmatpush1.msra.mxu0 0.0
    %899 = vmatprep.subr.mxu0 0.0
    %900 = vmatpush1.msra.mxu0 0.0
    %901 = vmatprep.mubr.f32.mxu0 0.0
    %902 = vmatmul.mubr.f32.gmra.mrb[0].mxu0 %v835
    %v903 = vpop.f32.mrb[0].mxu0
    %v904 = vadd.f32 0.0, %v903
    %v905 = vpop.f32.mrb[0].mxu0
    %906 = vdwg.mxu0
    %908 = vrot.lane.b32.xlu0 %v831, 32
    %v909 = vpop.permute.xlu0 %908
    %v910 = vsel %vm99, %v909, 0
    %912 = vmatprep.subr.mxu0 0.0
    %913 = vmatpush1.msra.mxu0 %v456
    %914 = vmatprep.subr.mxu0 0.0
    %915 = vmatpush1.msra.mxu0 %v457
    %916 = vmatprep.subr.mxu0 0.0
    %917 = vmatpush1.msra.mxu0 %v458
    %918 = vmatprep.subr.mxu0 0.0
    %919 = vmatpush1.msra.mxu0 %v459
    %920 = vmatprep.subr.mxu0 0.0
    %921 = vmatpush1.msra.mxu0 0.0
    %922 = vmatprep.subr.mxu0 0.0
    %923 = vmatpush1.msra.mxu0 0.0
    %924 = vmatprep.subr.mxu0 0.0
    %925 = vmatpush1.msra.mxu0 0.0
    %926 = vmatprep.subr.mxu0 0.0
    %927 = vmatpush1.msra.mxu0 0.0
    %928 = vmatprep.subr.mxu0 0.0
    %929 = vmatpush1.msra.mxu0 0.0
    %930 = vmatprep.subr.mxu0 0.0
    %931 = vmatpush1.msra.mxu0 0.0
    %932 = vmatprep.subr.mxu0 0.0
    %933 = vmatpush1.msra.mxu0 0.0
    %934 = vmatprep.subr.mxu0 0.0
    %935 = vmatpush1.msra.mxu0 0.0
    %936 = vmatprep.subr.mxu0 0.0
    %937 = vmatpush1.msra.mxu0 0.0
    %938 = vmatprep.subr.mxu0 0.0
    %939 = vmatpush1.msra.mxu0 0.0
    %940 = vmatprep.subr.mxu0 0.0
    %941 = vmatpush1.msra.mxu0 0.0
    %942 = vmatprep.subr.mxu0 0.0
    %943 = vmatpush1.msra.mxu0 0.0
    %944 = vmatprep.subr.mxu0 0.0
    %945 = vmatpush1.msra.mxu0 0.0
    %946 = vmatprep.subr.mxu0 0.0
    %947 = vmatpush1.msra.mxu0 0.0
    %948 = vmatprep.subr.mxu0 0.0
    %949 = vmatpush1.msra.mxu0 0.0
    %950 = vmatprep.subr.mxu0 0.0
    %951 = vmatpush1.msra.mxu0 0.0
    %952 = vmatprep.subr.mxu0 0.0
    %953 = vmatpush1.msra.mxu0 0.0
    %954 = vmatprep.subr.mxu0 0.0
    %955 = vmatpush1.msra.mxu0 0.0
    %956 = vmatprep.subr.mxu0 0.0
    %957 = vmatpush1.msra.mxu0 0.0
    %958 = vmatprep.subr.mxu0 0.0
    %959 = vmatpush1.msra.mxu0 0.0
    %960 = vmatprep.subr.mxu0 0.0
    %961 = vmatpush1.msra.mxu0 0.0
    %962 = vmatprep.subr.mxu0 0.0
    %963 = vmatpush1.msra.mxu0 0.0
    %964 = vmatprep.subr.mxu0 0.0
    %965 = vmatpush1.msra.mxu0 0.0
    %966 = vmatprep.subr.mxu0 0.0
    %967 = vmatpush1.msra.mxu0 0.0
    %968 = vmatprep.subr.mxu0 0.0
    %969 = vmatpush1.msra.mxu0 0.0
    %970 = vmatprep.subr.mxu0 0.0
    %971 = vmatpush1.msra.mxu0 0.0
    %972 = vmatprep.subr.mxu0 0.0
    %973 = vmatpush1.msra.mxu0 0.0
    %974 = vmatprep.subr.mxu0 0.0
    %975 = vmatpush1.msra.mxu0 0.0
    %976 = vmatprep.mubr.f32.mxu0 0.0
    %977 = vmatmul.mubr.f32.gmra.mrb[0].mxu0 %v910
    %v978 = vpop.f32.mrb[0].mxu0
    %v979 = vadd.f32 %v904, %v978
    %v980 = vpop.f32.mrb[0].mxu0
    %981 = vdwg.mxu0
    %v982 = vadd.f32 %v979, %v538
    %v983 = vxor.u32 %v982, 2147483648
    %v984 = vmul.f32 %v983, 1.442695
    %v985 = vpow.pop %v984
    %v986 = vadd.f32 %v985, 1.0
    %v987 = vrcp.pop %v986
    %v988 = vmul.f32 1.0, %v987
    %v989 = vmul.f32 %v988, %v33
    %v990 = vsub.f32 %v989, %v32
    %v991 = vmul.f32 %v990, %v558
    %993 = vrot.lane.b32.xlu0 %v990, 64
    %v994 = vpop.permute.xlu0 %993
    %v996 = vmul.f32 %v990, %v994
    %998 = vrot.lane.b32.xlu0 %v996, 32
    %v999 = vpop.permute.xlu0 %998
    %v1001 = vadd.f32 %v991, %v999
    %v1002 = vtanh.pop %v1001
    %1004 = vrot.lane.b32.xlu0 %v1002, 64
    %v1005 = vpop.permute.xlu0 %1004
    %v1007 = vmul.f32 %v990, %v1005
    %1008 = vmatprep.subr.mxu0 0.0
    %1009 = vmatpush1.msra.mxu0 %v95
    %1010 = vmatprep.subr.mxu0 0.0
    %1011 = vmatpush1.msra.mxu0 %v96
    %1012 = vmatprep.subr.mxu0 0.0
    %1013 = vmatpush1.msra.mxu0 %v97
    %1014 = vmatprep.subr.mxu0 0.0
    %1015 = vmatpush1.msra.mxu0 %v98
    %1016 = vmatprep.subr.mxu0 0.0
    %1017 = vmatpush1.msra.mxu0 0.0
    %1018 = vmatprep.subr.mxu0 0.0
    %1019 = vmatpush1.msra.mxu0 0.0
    %1020 = vmatprep.subr.mxu0 0.0
    %1021 = vmatpush1.msra.mxu0 0.0
    %1022 = vmatprep.subr.mxu0 0.0
    %1023 = vmatpush1.msra.mxu0 0.0
    %1024 = vmatprep.subr.mxu0 0.0
    %1025 = vmatpush1.msra.mxu0 0.0
    %1026 = vmatprep.subr.mxu0 0.0
    %1027 = vmatpush1.msra.mxu0 0.0
    %1028 = vmatprep.subr.mxu0 0.0
    %1029 = vmatpush1.msra.mxu0 0.0
    %1030 = vmatprep.subr.mxu0 0.0
    %1031 = vmatpush1.msra.mxu0 0.0
    %1032 = vmatprep.subr.mxu0 0.0
    %1033 = vmatpush1.msra.mxu0 0.0
    %1034 = vmatprep.subr.mxu0 0.0
    %1035 = vmatpush1.msra.mxu0 0.0
    %1036 = vmatprep.subr.mxu0 0.0
    %1037 = vmatpush1.msra.mxu0 0.0
    %1038 = vmatprep.subr.mxu0 0.0
    %1039 = vmatpush1.msra.mxu0 0.0
    %1040 = vmatprep.subr.mxu0 0.0
    %1041 = vmatpush1.msra.mxu0 0.0
    %1042 = vmatprep.subr.mxu0 0.0
    %1043 = vmatpush1.msra.mxu0 0.0
    %1044 = vmatprep.subr.mxu0 0.0
    %1045 = vmatpush1.msra.mxu0 0.0
    %1046 = vmatprep.subr.mxu0 0.0
    %1047 = vmatpush1.msra.mxu0 0.0
    %1048 = vmatprep.subr.mxu0 0.0
    %1049 = vmatpush1.msra.mxu0 0.0
    %1050 = vmatprep.subr.mxu0 0.0
    %1051 = vmatpush1.msra.mxu0 0.0
    %1052 = vmatprep.subr.mxu0 0.0
    %1053 = vmatpush1.msra.mxu0 0.0
    %1054 = vmatprep.subr.mxu0 0.0
    %1055 = vmatpush1.msra.mxu0 0.0
    %1056 = vmatprep.subr.mxu0 0.0
    %1057 = vmatpush1.msra.mxu0 0.0
    %1058 = vmatprep.subr.mxu0 0.0
    %1059 = vmatpush1.msra.mxu0 0.0
    %1060 = vmatprep.subr.mxu0 0.0
    %1061 = vmatpush1.msra.mxu0 0.0
    %1062 = vmatprep.subr.mxu0 0.0
    %1063 = vmatpush1.msra.mxu0 0.0
    %1064 = vmatprep.subr.mxu0 0.0
    %1065 = vmatpush1.msra.mxu0 0.0
    %1066 = vmatprep.subr.mxu0 0.0
    %1067 = vmatpush1.msra.mxu0 0.0
    %1068 = vmatprep.subr.mxu0 0.0
    %1069 = vmatpush1.msra.mxu0 0.0
    %1070 = vmatprep.subr.mxu0 0.0
    %1071 = vmatpush1.msra.mxu0 0.0
    %1072 = vmatprep.mubr.f32.mxu0 0.0
    %1073 = vmatmul.mubr.f32.gmra.mrb[0].mxu0 %v734
    %v1074 = vpop.f32.mrb[0].mxu0
    %v1075 = vadd.f32 0.0, %v1074
    %v1076 = vpop.f32.mrb[0].mxu0
    %1077 = vdwg.mxu0
    %v1078 = vadd.f32 %v64, %v1075
    %v1079 = vxor.u32 %v1078, 2147483648
    %v1080 = vmul.f32 %v1079, 1.442695
    %v1081 = vpow.pop %v1080
    %v1082 = vadd.f32 %v1081, 1.0
    %v1083 = vrcp.pop %v1082
    %v1084 = vmul.f32 1.0, %v1083
    %v1085 = vmul.f32 %v1084, %v33
    %v1086 = vsub.f32 %v1085, %v32
    %v1087 = vmul.f32 %v1086, %v654
    %1089 = vrot.lane.b32.xlu0 %v1086, 64
    %v1090 = vpop.permute.xlu0 %1089
    %v1092 = vmul.f32 %v1086, %v1090
    %1094 = vrot.lane.b32.xlu0 %v1092, 32
    %v1095 = vpop.permute.xlu0 %1094
    %v1097 = vadd.f32 %v1087, %v1095
    %v1098 = vtanh.pop %v1097
    %1100 = vrot.lane.b32.xlu0 %v1098, 64
    %v1101 = vpop.permute.xlu0 %1100
    %v1103 = vmul.f32 %v1086, %v1101
    %1104 = vmatprep.subr.mxu0 0.0
    %1105 = vmatpush1.msra.mxu0 %v199
    %1106 = vmatprep.subr.mxu0 0.0
    %1107 = vmatpush1.msra.mxu0 %v200
    %1108 = vmatprep.subr.mxu0 0.0
    %1109 = vmatpush1.msra.mxu0 %v201
    %1110 = vmatprep.subr.mxu0 0.0
    %1111 = vmatpush1.msra.mxu0 %v202
    %1112 = vmatprep.subr.mxu0 0.0
    %1113 = vmatpush1.msra.mxu0 0.0
    %1114 = vmatprep.subr.mxu0 0.0
    %1115 = vmatpush1.msra.mxu0 0.0
    %1116 = vmatprep.subr.mxu0 0.0
    %1117 = vmatpush1.msra.mxu0 0.0
    %1118 = vmatprep.subr.mxu0 0.0
    %1119 = vmatpush1.msra.mxu0 0.0
    %1120 = vmatprep.subr.mxu0 0.0
    %1121 = vmatpush1.msra.mxu0 0.0
    %1122 = vmatprep.subr.mxu0 0.0
    %1123 = vmatpush1.msra.mxu0 0.0
    %1124 = vmatprep.subr.mxu0 0.0
    %1125 = vmatpush1.msra.mxu0 0.0
    %1126 = vmatprep.subr.mxu0 0.0
    %1127 = vmatpush1.msra.mxu0 0.0
    %1128 = vmatprep.subr.mxu0 0.0
    %1129 = vmatpush1.msra.mxu0 0.0
    %1130 = vmatprep.subr.mxu0 0.0
    %1131 = vmatpush1.msra.mxu0 0.0
    %1132 = vmatprep.subr.mxu0 0.0
    %1133 = vmatpush1.msra.mxu0 0.0
    %1134 = vmatprep.subr.mxu0 0.0
    %1135 = vmatpush1.msra.mxu0 0.0
    %1136 = vmatprep.subr.mxu0 0.0
    %1137 = vmatpush1.msra.mxu0 0.0
    %1138 = vmatprep.subr.mxu0 0.0
    %1139 = vmatpush1.msra.mxu0 0.0
    %1140 = vmatprep.subr.mxu0 0.0
    %1141 = vmatpush1.msra.mxu0 0.0
    %1142 = vmatprep.subr.mxu0 0.0
    %1143 = vmatpush1.msra.mxu0 0.0
    %1144 = vmatprep.subr.mxu0 0.0
    %1145 = vmatpush1.msra.mxu0 0.0
    %1146 = vmatprep.subr.mxu0 0.0
    %1147 = vmatpush1.msra.mxu0 0.0
    %1148 = vmatprep.subr.mxu0 0.0
    %1149 = vmatpush1.msra.mxu0 0.0
    %1150 = vmatprep.subr.mxu0 0.0
    %1151 = vmatpush1.msra.mxu0 0.0
    %1152 = vmatprep.subr.mxu0 0.0
    %1153 = vmatpush1.msra.mxu0 0.0
    %1154 = vmatprep.subr.mxu0 0.0
    %1155 = vmatpush1.msra.mxu0 0.0
    %1156 = vmatprep.subr.mxu0 0.0
    %1157 = vmatpush1.msra.mxu0 0.0
    %1158 = vmatprep.subr.mxu0 0.0
    %1159 = vmatpush1.msra.mxu0 0.0
    %1160 = vmatprep.subr.mxu0 0.0
    %1161 = vmatpush1.msra.mxu0 0.0
    %1162 = vmatprep.subr.mxu0 0.0
    %1163 = vmatpush1.msra.mxu0 0.0
    %1164 = vmatprep.subr.mxu0 0.0
    %1165 = vmatpush1.msra.mxu0 0.0
    %1166 = vmatprep.subr.mxu0 0.0
    %1167 = vmatpush1.msra.mxu0 0.0
    %1168 = vmatprep.mubr.f32.mxu0 0.0
    %1169 = vmatmul.mubr.f32.gmra.mrb[0].mxu0 %v910
    %v1170 = vpop.f32.mrb[0].mxu0
    %v1171 = vadd.f32 0.0, %v1170
    %v1172 = vpop.f32.mrb[0].mxu0
    %1173 = vdwg.mxu0
    %1175 = vrot.lane.b32.xlu0 %v1103, 32
    %v1176 = vpop.permute.xlu0 %1175
    %v1177 = vsel %vm99, %v1176, 0
    %1179 = vmatprep.subr.mxu0 0.0
    %1180 = vmatpush1.msra.mxu0 %v273
    %1181 = vmatprep.subr.mxu0 0.0
    %1182 = vmatpush1.msra.mxu0 %v274
    %1183 = vmatprep.subr.mxu0 0.0
    %1184 = vmatpush1.msra.mxu0 %v275
    %1185 = vmatprep.subr.mxu0 0.0
    %1186 = vmatpush1.msra.mxu0 %v276
    %1187 = vmatprep.subr.mxu0 0.0
    %1188 = vmatpush1.msra.mxu0 0.0
    %1189 = vmatprep.subr.mxu0 0.0
    %1190 = vmatpush1.msra.mxu0 0.0
    %1191 = vmatprep.subr.mxu0 0.0
    %1192 = vmatpush1.msra.mxu0 0.0
    %1193 = vmatprep.subr.mxu0 0.0
    %1194 = vmatpush1.msra.mxu0 0.0
    %1195 = vmatprep.subr.mxu0 0.0
    %1196 = vmatpush1.msra.mxu0 0.0
    %1197 = vmatprep.subr.mxu0 0.0
    %1198 = vmatpush1.msra.mxu0 0.0
    %1199 = vmatprep.subr.mxu0 0.0
    %1200 = vmatpush1.msra.mxu0 0.0
    %1201 = vmatprep.subr.mxu0 0.0
    %1202 = vmatpush1.msra.mxu0 0.0
    %1203 = vmatprep.subr.mxu0 0.0
    %1204 = vmatpush1.msra.mxu0 0.0
    %1205 = vmatprep.subr.mxu0 0.0
    %1206 = vmatpush1.msra.mxu0 0.0
    %1207 = vmatprep.subr.mxu0 0.0
    %1208 = vmatpush1.msra.mxu0 0.0
    %1209 = vmatprep.subr.mxu0 0.0
    %1210 = vmatpush1.msra.mxu0 0.0
    %1211 = vmatprep.subr.mxu0 0.0
    %1212 = vmatpush1.msra.mxu0 0.0
    %1213 = vmatprep.subr.mxu0 0.0
    %1214 = vmatpush1.msra.mxu0 0.0
    %1215 = vmatprep.subr.mxu0 0.0
    %1216 = vmatpush1.msra.mxu0 0.0
    %1217 = vmatprep.subr.mxu0 0.0
    %1218 = vmatpush1.msra.mxu0 0.0
    %1219 = vmatprep.subr.mxu0 0.0
    %1220 = vmatpush1.msra.mxu0 0.0
    %1221 = vmatprep.subr.mxu0 0.0
    %1222 = vmatpush1.msra.mxu0 0.0
    %1223 = vmatprep.subr.mxu0 0.0
    %1224 = vmatpush1.msra.mxu0 0.0
    %1225 = vmatprep.subr.mxu0 0.0
    %1226 = vmatpush1.msra.mxu0 0.0
    %1227 = vmatprep.subr.mxu0 0.0
    %1228 = vmatpush1.msra.mxu0 0.0
    %1229 = vmatprep.subr.mxu0 0.0
    %1230 = vmatpush1.msra.mxu0 0.0
    %1231 = vmatprep.subr.mxu0 0.0
    %1232 = vmatpush1.msra.mxu0 0.0
    %1233 = vmatprep.subr.mxu0 0.0
    %1234 = vmatpush1.msra.mxu0 0.0
    %1235 = vmatprep.subr.mxu0 0.0
    %1236 = vmatpush1.msra.mxu0 0.0
    %1237 = vmatprep.subr.mxu0 0.0
    %1238 = vmatpush1.msra.mxu0 0.0
    %1239 = vmatprep.subr.mxu0 0.0
    %1240 = vmatpush1.msra.mxu0 0.0
    %1241 = vmatprep.subr.mxu0 0.0
    %1242 = vmatpush1.msra.mxu0 0.0
    %1243 = vmatprep.mubr.f32.mxu0 0.0
    %1244 = vmatmul.mubr.f32.gmra.mrb[0].mxu0 %v1177
    %v1245 = vpop.f32.mrb[0].mxu0
    %v1246 = vadd.f32 %v1171, %v1245
    %v1247 = vpop.f32.mrb[0].mxu0
    %1248 = vdwg.mxu0
    %v1249 = vadd.f32 %v1246, %v355
    %v1250 = vxor.u32 %v1249, 2147483648
    %v1251 = vmul.f32 %v1250, 1.442695
    %v1252 = vpow.pop %v1251
    %v1253 = vadd.f32 %v1252, 1.0
    %v1254 = vrcp.pop %v1253
    %v1255 = vmul.f32 1.0, %v1254
    %v1256 = vmul.f32 %v1255, %v33
    %v1257 = vsub.f32 %v1256, %v32
    %v1258 = vmul.f32 %v1257, %v825
    %1260 = vrot.lane.b32.xlu0 %v1257, 64
    %v1261 = vpop.permute.xlu0 %1260
    %v1263 = vmul.f32 %v1257, %v1261
    %1265 = vrot.lane.b32.xlu0 %v1263, 32
    %v1266 = vpop.permute.xlu0 %1265
    %v1268 = vadd.f32 %v1258, %v1266
    %v1269 = vtanh.pop %v1268
    %1271 = vrot.lane.b32.xlu0 %v1269, 64
    %v1272 = vpop.permute.xlu0 %1271
    %v1274 = vmul.f32 %v1257, %v1272
    %1276 = vrot.lane.b32.xlu0 %v1007, 32
    %v1277 = vpop.permute.xlu0 %1276
    %v1278 = vsel %vm99, %v1277, 0
    %1280 = vmatprep.subr.mxu0 0.0
    %1281 = vmatpush1.msra.mxu0 %v382
    %1282 = vmatprep.subr.mxu0 0.0
    %1283 = vmatpush1.msra.mxu0 %v383
    %1284 = vmatprep.subr.mxu0 0.0
    %1285 = vmatpush1.msra.mxu0 %v384
    %1286 = vmatprep.subr.mxu0 0.0
    %1287 = vmatpush1.msra.mxu0 %v385
    %1288 = vmatprep.subr.mxu0 0.0
    %1289 = vmatpush1.msra.mxu0 0.0
    %1290 = vmatprep.subr.mxu0 0.0
    %1291 = vmatpush1.msra.mxu0 0.0
    %1292 = vmatprep.subr.mxu0 0.0
    %1293 = vmatpush1.msra.mxu0 0.0
    %1294 = vmatprep.subr.mxu0 0.0
    %1295 = vmatpush1.msra.mxu0 0.0
    %1296 = vmatprep.subr.mxu0 0.0
    %1297 = vmatpush1.msra.mxu0 0.0
    %1298 = vmatprep.subr.mxu0 0.0
    %1299 = vmatpush1.msra.mxu0 0.0
    %1300 = vmatprep.subr.mxu0 0.0
    %1301 = vmatpush1.msra.mxu0 0.0
    %1302 = vmatprep.subr.mxu0 0.0
    %1303 = vmatpush1.msra.mxu0 0.0
    %1304 = vmatprep.subr.mxu0 0.0
    %1305 = vmatpush1.msra.mxu0 0.0
    %1306 = vmatprep.subr.mxu0 0.0
    %1307 = vmatpush1.msra.mxu0 0.0
    %1308 = vmatprep.subr.mxu0 0.0
    %1309 = vmatpush1.msra.mxu0 0.0
    %1310 = vmatprep.subr.mxu0 0.0
    %1311 = vmatpush1.msra.mxu0 0.0
    %1312 = vmatprep.subr.mxu0 0.0
    %1313 = vmatpush1.msra.mxu0 0.0
    %1314 = vmatprep.subr.mxu0 0.0
    %1315 = vmatpush1.msra.mxu0 0.0
    %1316 = vmatprep.subr.mxu0 0.0
    %1317 = vmatpush1.msra.mxu0 0.0
    %1318 = vmatprep.subr.mxu0 0.0
    %1319 = vmatpush1.msra.mxu0 0.0
    %1320 = vmatprep.subr.mxu0 0.0
    %1321 = vmatpush1.msra.mxu0 0.0
    %1322 = vmatprep.subr.mxu0 0.0
    %1323 = vmatpush1.msra.mxu0 0.0
    %1324 = vmatprep.subr.mxu0 0.0
    %1325 = vmatpush1.msra.mxu0 0.0
    %1326 = vmatprep.subr.mxu0 0.0
    %1327 = vmatpush1.msra.mxu0 0.0
    %1328 = vmatprep.subr.mxu0 0.0
    %1329 = vmatpush1.msra.mxu0 0.0
    %1330 = vmatprep.subr.mxu0 0.0
    %1331 = vmatpush1.msra.mxu0 0.0
    %1332 = vmatprep.subr.mxu0 0.0
    %1333 = vmatpush1.msra.mxu0 0.0
    %1334 = vmatprep.subr.mxu0 0.0
    %1335 = vmatpush1.msra.mxu0 0.0
    %1336 = vmatprep.subr.mxu0 0.0
    %1337 = vmatpush1.msra.mxu0 0.0
    %1338 = vmatprep.subr.mxu0 0.0
    %1339 = vmatpush1.msra.mxu0 0.0
    %1340 = vmatprep.subr.mxu0 0.0
    %1341 = vmatpush1.msra.mxu0 0.0
    %1342 = vmatprep.subr.mxu0 0.0
    %1343 = vmatpush1.msra.mxu0 0.0
    %1344 = vmatprep.mubr.f32.mxu0 0.0
    %1345 = vmatmul.mubr.f32.gmra.mrb[0].mxu0 %v1278
    %v1346 = vpop.f32.mrb[0].mxu0
    %v1347 = vadd.f32 0.0, %v1346
    %v1348 = vpop.f32.mrb[0].mxu0
    %1349 = vdwg.mxu0
    %1351 = vrot.lane.b32.xlu0 %v1274, 32
    %v1352 = vpop.permute.xlu0 %1351
    %v1353 = vsel %vm99, %v1352, 0
    %1355 = vmatprep.subr.mxu0 0.0
    %1356 = vmatpush1.msra.mxu0 %v456
    %1357 = vmatprep.subr.mxu0 0.0
    %1358 = vmatpush1.msra.mxu0 %v457
    %1359 = vmatprep.subr.mxu0 0.0
    %1360 = vmatpush1.msra.mxu0 %v458
    %1361 = vmatprep.subr.mxu0 0.0
    %1362 = vmatpush1.msra.mxu0 %v459
    %1363 = vmatprep.subr.mxu0 0.0
    %1364 = vmatpush1.msra.mxu0 0.0
    %1365 = vmatprep.subr.mxu0 0.0
    %1366 = vmatpush1.msra.mxu0 0.0
    %1367 = vmatprep.subr.mxu0 0.0
    %1368 = vmatpush1.msra.mxu0 0.0
    %1369 = vmatprep.subr.mxu0 0.0
    %1370 = vmatpush1.msra.mxu0 0.0
    %1371 = vmatprep.subr.mxu0 0.0
    %1372 = vmatpush1.msra.mxu0 0.0
    %1373 = vmatprep.subr.mxu0 0.0
    %1374 = vmatpush1.msra.mxu0 0.0
    %1375 = vmatprep.subr.mxu0 0.0
    %1376 = vmatpush1.msra.mxu0 0.0
    %1377 = vmatprep.subr.mxu0 0.0
    %1378 = vmatpush1.msra.mxu0 0.0
    %1379 = vmatprep.subr.mxu0 0.0
    %1380 = vmatpush1.msra.mxu0 0.0
    %1381 = vmatprep.subr.mxu0 0.0
    %1382 = vmatpush1.msra.mxu0 0.0
    %1383 = vmatprep.subr.mxu0 0.0
    %1384 = vmatpush1.msra.mxu0 0.0
    %1385 = vmatprep.subr.mxu0 0.0
    %1386 = vmatpush1.msra.mxu0 0.0
    %1387 = vmatprep.subr.mxu0 0.0
    %1388 = vmatpush1.msra.mxu0 0.0
    %1389 = vmatprep.subr.mxu0 0.0
    %1390 = vmatpush1.msra.mxu0 0.0
    %1391 = vmatprep.subr.mxu0 0.0
    %1392 = vmatpush1.msra.mxu0 0.0
    %1393 = vmatprep.subr.mxu0 0.0
    %1394 = vmatpush1.msra.mxu0 0.0
    %1395 = vmatprep.subr.mxu0 0.0
    %1396 = vmatpush1.msra.mxu0 0.0
    %1397 = vmatprep.subr.mxu0 0.0
    %1398 = vmatpush1.msra.mxu0 0.0
    %1399 = vmatprep.subr.mxu0 0.0
    %1400 = vmatpush1.msra.mxu0 0.0
    %1401 = vmatprep.subr.mxu0 0.0
    %1402 = vmatpush1.msra.mxu0 0.0
    %1403 = vmatprep.subr.mxu0 0.0
    %1404 = vmatpush1.msra.mxu0 0.0
    %1405 = vmatprep.subr.mxu0 0.0
    %1406 = vmatpush1.msra.mxu0 0.0
    %1407 = vmatprep.subr.mxu0 0.0
    %1408 = vmatpush1.msra.mxu0 0.0
    %1409 = vmatprep.subr.mxu0 0.0
    %1410 = vmatpush1.msra.mxu0 0.0
    %1411 = vmatprep.subr.mxu0 0.0
    %1412 = vmatpush1.msra.mxu0 0.0
    %1413 = vmatprep.subr.mxu0 0.0
    %1414 = vmatpush1.msra.mxu0 0.0
    %1415 = vmatprep.subr.mxu0 0.0
    %1416 = vmatpush1.msra.mxu0 0.0
    %1417 = vmatprep.subr.mxu0 0.0
    %1418 = vmatpush1.msra.mxu0 0.0
    %1419 = vmatprep.mubr.f32.mxu0 0.0
    %1420 = vmatmul.mubr.f32.gmra.mrb[0].mxu0 %v1353
    %v1421 = vpop.f32.mrb[0].mxu0
    %v1422 = vadd.f32 %v1347, %v1421
    %v1423 = vpop.f32.mrb[0].mxu0
    %1424 = vdwg.mxu0
    %v1425 = vadd.f32 %v1422, %v538
    %v1426 = vxor.u32 %v1425, 2147483648
    %v1427 = vmul.f32 %v1426, 1.442695
    %v1428 = vpow.pop %v1427
    %v1429 = vadd.f32 %v1428, 1.0
    %v1430 = vrcp.pop %v1429
    %v1431 = vmul.f32 1.0, %v1430
    %v1432 = vmul.f32 %v1431, %v33
    %v1433 = vsub.f32 %v1432, %v32
    %v1434 = vmul.f32 %v1433, %v1001
    %1436 = vrot.lane.b32.xlu0 %v1433, 64
    %v1437 = vpop.permute.xlu0 %1436
    %v1439 = vmul.f32 %v1433, %v1437
    %1441 = vrot.lane.b32.xlu0 %v1439, 32
    %v1442 = vpop.permute.xlu0 %1441
    %v1444 = vadd.f32 %v1434, %v1442
    %v1445 = vtanh.pop %v1444
    %1447 = vrot.lane.b32.xlu0 %v1445, 64
    %v1448 = vpop.permute.xlu0 %1447
    %v1450 = vmul.f32 %v1433, %v1448
    %1451 = vmatprep.subr.mxu0 0.0
    %1452 = vmatpush1.msra.mxu0 %v95
    %1453 = vmatprep.subr.mxu0 0.0
    %1454 = vmatpush1.msra.mxu0 %v96
    %1455 = vmatprep.subr.mxu0 0.0
    %1456 = vmatpush1.msra.mxu0 %v97
    %1457 = vmatprep.subr.mxu0 0.0
    %1458 = vmatpush1.msra.mxu0 %v98
    %1459 = vmatprep.subr.mxu0 0.0
    %1460 = vmatpush1.msra.mxu0 0.0
    %1461 = vmatprep.subr.mxu0 0.0
    %1462 = vmatpush1.msra.mxu0 0.0
    %1463 = vmatprep.subr.mxu0 0.0
    %1464 = vmatpush1.msra.mxu0 0.0
    %1465 = vmatprep.subr.mxu0 0.0
    %1466 = vmatpush1.msra.mxu0 0.0
    %1467 = vmatprep.subr.mxu0 0.0
    %1468 = vmatpush1.msra.mxu0 0.0
    %1469 = vmatprep.subr.mxu0 0.0
    %1470 = vmatpush1.msra.mxu0 0.0
    %1471 = vmatprep.subr.mxu0 0.0
    %1472 = vmatpush1.msra.mxu0 0.0
    %1473 = vmatprep.subr.mxu0 0.0
    %1474 = vmatpush1.msra.mxu0 0.0
    %1475 = vmatprep.subr.mxu0 0.0
    %1476 = vmatpush1.msra.mxu0 0.0
    %1477 = vmatprep.subr.mxu0 0.0
    %1478 = vmatpush1.msra.mxu0 0.0
    %1479 = vmatprep.subr.mxu0 0.0
    %1480 = vmatpush1.msra.mxu0 0.0
    %1481 = vmatprep.subr.mxu0 0.0
    %1482 = vmatpush1.msra.mxu0 0.0
    %1483 = vmatprep.subr.mxu0 0.0
    %1484 = vmatpush1.msra.mxu0 0.0
    %1485 = vmatprep.subr.mxu0 0.0
    %1486 = vmatpush1.msra.mxu0 0.0
    %1487 = vmatprep.subr.mxu0 0.0
    %1488 = vmatpush1.msra.mxu0 0.0
    %1489 = vmatprep.subr.mxu0 0.0
    %1490 = vmatpush1.msra.mxu0 0.0
    %1491 = vmatprep.subr.mxu0 0.0
    %1492 = vmatpush1.msra.mxu0 0.0
    %1493 = vmatprep.subr.mxu0 0.0
    %1494 = vmatpush1.msra.mxu0 0.0
    %1495 = vmatprep.subr.mxu0 0.0
    %1496 = vmatpush1.msra.mxu0 0.0
    %1497 = vmatprep.subr.mxu0 0.0
    %1498 = vmatpush1.msra.mxu0 0.0
    %1499 = vmatprep.subr.mxu0 0.0
    %1500 = vmatpush1.msra.mxu0 0.0
    %1501 = vmatprep.subr.mxu0 0.0
    %1502 = vmatpush1.msra.mxu0 0.0
    %1503 = vmatprep.subr.mxu0 0.0
    %1504 = vmatpush1.msra.mxu0 0.0
    %1505 = vmatprep.subr.mxu0 0.0
    %1506 = vmatpush1.msra.mxu0 0.0
    %1507 = vmatprep.subr.mxu0 0.0
    %1508 = vmatpush1.msra.mxu0 0.0
    %1509 = vmatprep.subr.mxu0 0.0
    %1510 = vmatpush1.msra.mxu0 0.0
    %1511 = vmatprep.subr.mxu0 0.0
    %1512 = vmatpush1.msra.mxu0 0.0
    %1513 = vmatprep.subr.mxu0 0.0
    %1514 = vmatpush1.msra.mxu0 0.0
    %1515 = vmatprep.mubr.f32.mxu0 0.0
    %1516 = vmatmul.mubr.f32.gmra.mrb[0].mxu0 %v1177
    %v1517 = vpop.f32.mrb[0].mxu0
    %v1518 = vadd.f32 0.0, %v1517
    %v1519 = vpop.f32.mrb[0].mxu0
    %1520 = vdwg.mxu0
    %v1521 = vadd.f32 %v70, %v1518
    %v1522 = vxor.u32 %v1521, 2147483648
    %v1523 = vmul.f32 %v1522, 1.442695
    %v1524 = vpow.pop %v1523
    %v1525 = vadd.f32 %v1524, 1.0
    %v1526 = vrcp.pop %v1525
    %v1527 = vmul.f32 1.0, %v1526
    %v1528 = vmul.f32 %v1527, %v33
    %v1529 = vsub.f32 %v1528, %v32
    %v1530 = vmul.f32 %v1529, %v1097
    %1532 = vrot.lane.b32.xlu0 %v1529, 64
    %v1533 = vpop.permute.xlu0 %1532
    %v1535 = vmul.f32 %v1529, %v1533
    %1537 = vrot.lane.b32.xlu0 %v1535, 32
    %v1538 = vpop.permute.xlu0 %1537
    %v1540 = vadd.f32 %v1530, %v1538
    %v1541 = vtanh.pop %v1540
    %1543 = vrot.lane.b32.xlu0 %v1541, 64
    %v1544 = vpop.permute.xlu0 %1543
    %v1546 = vmul.f32 %v1529, %v1544
    %1547 = vmatprep.subr.mxu0 0.0
    %1548 = vmatpush1.msra.mxu0 %v199
    %1549 = vmatprep.subr.mxu0 0.0
    %1550 = vmatpush1.msra.mxu0 %v200
    %1551 = vmatprep.subr.mxu0 0.0
    %1552 = vmatpush1.msra.mxu0 %v201
    %1553 = vmatprep.subr.mxu0 0.0
    %1554 = vmatpush1.msra.mxu0 %v202
    %1555 = vmatprep.subr.mxu0 0.0
    %1556 = vmatpush1.msra.mxu0 0.0
    %1557 = vmatprep.subr.mxu0 0.0
    %1558 = vmatpush1.msra.mxu0 0.0
    %1559 = vmatprep.subr.mxu0 0.0
    %1560 = vmatpush1.msra.mxu0 0.0
    %1561 = vmatprep.subr.mxu0 0.0
    %1562 = vmatpush1.msra.mxu0 0.0
    %1563 = vmatprep.subr.mxu0 0.0
    %1564 = vmatpush1.msra.mxu0 0.0
    %1565 = vmatprep.subr.mxu0 0.0
    %1566 = vmatpush1.msra.mxu0 0.0
    %1567 = vmatprep.subr.mxu0 0.0
    %1568 = vmatpush1.msra.mxu0 0.0
    %1569 = vmatprep.subr.mxu0 0.0
    %1570 = vmatpush1.msra.mxu0 0.0
    %1571 = vmatprep.subr.mxu0 0.0
    %1572 = vmatpush1.msra.mxu0 0.0
    %1573 = vmatprep.subr.mxu0 0.0
    %1574 = vmatpush1.msra.mxu0 0.0
    %1575 = vmatprep.subr.mxu0 0.0
    %1576 = vmatpush1.msra.mxu0 0.0
    %1577 = vmatprep.subr.mxu0 0.0
    %1578 = vmatpush1.msra.mxu0 0.0
    %1579 = vmatprep.subr.mxu0 0.0
    %1580 = vmatpush1.msra.mxu0 0.0
    %1581 = vmatprep.subr.mxu0 0.0
    %1582 = vmatpush1.msra.mxu0 0.0
    %1583 = vmatprep.subr.mxu0 0.0
    %1584 = vmatpush1.msra.mxu0 0.0
    %1585 = vmatprep.subr.mxu0 0.0
    %1586 = vmatpush1.msra.mxu0 0.0
    %1587 = vmatprep.subr.mxu0 0.0
    %1588 = vmatpush1.msra.mxu0 0.0
    %1589 = vmatprep.subr.mxu0 0.0
    %1590 = vmatpush1.msra.mxu0 0.0
    %1591 = vmatprep.subr.mxu0 0.0
    %1592 = vmatpush1.msra.mxu0 0.0
    %1593 = vmatprep.subr.mxu0 0.0
    %1594 = vmatpush1.msra.mxu0 0.0
    %1595 = vmatprep.subr.mxu0 0.0
    %1596 = vmatpush1.msra.mxu0 0.0
    %1597 = vmatprep.subr.mxu0 0.0
    %1598 = vmatpush1.msra.mxu0 0.0
    %1599 = vmatprep.subr.mxu0 0.0
    %1600 = vmatpush1.msra.mxu0 0.0
    %1601 = vmatprep.subr.mxu0 0.0
    %1602 = vmatpush1.msra.mxu0 0.0
    %1603 = vmatprep.subr.mxu0 0.0
    %1604 = vmatpush1.msra.mxu0 0.0
    %1605 = vmatprep.subr.mxu0 0.0
    %1606 = vmatpush1.msra.mxu0 0.0
    %1607 = vmatprep.subr.mxu0 0.0
    %1608 = vmatpush1.msra.mxu0 0.0
    %1609 = vmatprep.subr.mxu0 0.0
    %1610 = vmatpush1.msra.mxu0 0.0
    %1611 = vmatprep.mubr.f32.mxu0 0.0
    %1612 = vmatmul.mubr.f32.gmra.mrb[0].mxu0 %v1353
    %v1613 = vpop.f32.mrb[0].mxu0
    %v1614 = vadd.f32 0.0, %v1613
    %v1615 = vpop.f32.mrb[0].mxu0
    %1616 = vdwg.mxu0
    %1618 = vrot.lane.b32.xlu0 %v1546, 32
    %v1619 = vpop.permute.xlu0 %1618
    %v1620 = vsel %vm99, %v1619, 0
    %1622 = vmatprep.subr.mxu0 0.0
    %1623 = vmatpush1.msra.mxu0 %v273
    %1624 = vmatprep.subr.mxu0 0.0
    %1625 = vmatpush1.msra.mxu0 %v274
    %1626 = vmatprep.subr.mxu0 0.0
    %1627 = vmatpush1.msra.mxu0 %v275
    %1628 = vmatprep.subr.mxu0 0.0
    %1629 = vmatpush1.msra.mxu0 %v276
    %1630 = vmatprep.subr.mxu0 0.0
    %1631 = vmatpush1.msra.mxu0 0.0
    %1632 = vmatprep.subr.mxu0 0.0
    %1633 = vmatpush1.msra.mxu0 0.0
    %1634 = vmatprep.subr.mxu0 0.0
    %1635 = vmatpush1.msra.mxu0 0.0
    %1636 = vmatprep.subr.mxu0 0.0
    %1637 = vmatpush1.msra.mxu0 0.0
    %1638 = vmatprep.subr.mxu0 0.0
    %1639 = vmatpush1.msra.mxu0 0.0
    %1640 = vmatprep.subr.mxu0 0.0
    %1641 = vmatpush1.msra.mxu0 0.0
    %1642 = vmatprep.subr.mxu0 0.0
    %1643 = vmatpush1.msra.mxu0 0.0
    %1644 = vmatprep.subr.mxu0 0.0
    %1645 = vmatpush1.msra.mxu0 0.0
    %1646 = vmatprep.subr.mxu0 0.0
    %1647 = vmatpush1.msra.mxu0 0.0
    %1648 = vmatprep.subr.mxu0 0.0
    %1649 = vmatpush1.msra.mxu0 0.0
    %1650 = vmatprep.subr.mxu0 0.0
    %1651 = vmatpush1.msra.mxu0 0.0
    %1652 = vmatprep.subr.mxu0 0.0
    %1653 = vmatpush1.msra.mxu0 0.0
    %1654 = vmatprep.subr.mxu0 0.0
    %1655 = vmatpush1.msra.mxu0 0.0
    %1656 = vmatprep.subr.mxu0 0.0
    %1657 = vmatpush1.msra.mxu0 0.0
    %1658 = vmatprep.subr.mxu0 0.0
    %1659 = vmatpush1.msra.mxu0 0.0
    %1660 = vmatprep.subr.mxu0 0.0
    %1661 = vmatpush1.msra.mxu0 0.0
    %1662 = vmatprep.subr.mxu0 0.0
    %1663 = vmatpush1.msra.mxu0 0.0
    %1664 = vmatprep.subr.mxu0 0.0
    %1665 = vmatpush1.msra.mxu0 0.0
    %1666 = vmatprep.subr.mxu0 0.0
    %1667 = vmatpush1.msra.mxu0 0.0
    %1668 = vmatprep.subr.mxu0 0.0
    %1669 = vmatpush1.msra.mxu0 0.0
    %1670 = vmatprep.subr.mxu0 0.0
    %1671 = vmatpush1.msra.mxu0 0.0
    %1672 = vmatprep.subr.mxu0 0.0
    %1673 = vmatpush1.msra.mxu0 0.0
    %1674 = vmatprep.subr.mxu0 0.0
    %1675 = vmatpush1.msra.mxu0 0.0
    %1676 = vmatprep.subr.mxu0 0.0
    %1677 = vmatpush1.msra.mxu0 0.0
    %1678 = vmatprep.subr.mxu0 0.0
    %1679 = vmatpush1.msra.mxu0 0.0
    %1680 = vmatprep.subr.mxu0 0.0
    %1681 = vmatpush1.msra.mxu0 0.0
    %1682 = vmatprep.subr.mxu0 0.0
    %1683 = vmatpush1.msra.mxu0 0.0
    %1684 = vmatprep.subr.mxu0 0.0
    %1685 = vmatpush1.msra.mxu0 0.0
    %1686 = vmatprep.mubr.f32.mxu0 0.0
    %1687 = vmatmul.mubr.f32.gmra.mrb[0].mxu0 %v1620
    %v1688 = vpop.f32.mrb[0].mxu0
    %v1689 = vadd.f32 %v1614, %v1688
    %v1690 = vpop.f32.mrb[0].mxu0
    %1691 = vdwg.mxu0
    %v1692 = vadd.f32 %v1689, %v355
    %v1693 = vxor.u32 %v1692, 2147483648
    %v1694 = vmul.f32 %v1693, 1.442695
    %v1695 = vpow.pop %v1694
    %v1696 = vadd.f32 %v1695, 1.0
    %v1697 = vrcp.pop %v1696
    %v1698 = vmul.f32 1.0, %v1697
    %v1699 = vmul.f32 %v1698, %v33
    %v1700 = vsub.f32 %v1699, %v32
    %v1701 = vmul.f32 %v1700, %v1268
    %1703 = vrot.lane.b32.xlu0 %v1700, 64
    %v1704 = vpop.permute.xlu0 %1703
    %v1706 = vmul.f32 %v1700, %v1704
    %1708 = vrot.lane.b32.xlu0 %v1706, 32
    %v1709 = vpop.permute.xlu0 %1708
    %v1711 = vadd.f32 %v1701, %v1709
    %v1712 = vtanh.pop %v1711
    %1714 = vrot.lane.b32.xlu0 %v1712, 64
    %v1715 = vpop.permute.xlu0 %1714
    %v1717 = vmul.f32 %v1700, %v1715
    %1719 = vrot.lane.b32.xlu0 %v1450, 32
    %v1720 = vpop.permute.xlu0 %1719
    %v1721 = vsel %vm99, %v1720, 0
    %1723 = vmatprep.subr.mxu0 0.0
    %1724 = vmatpush1.msra.mxu0 %v382
    %1725 = vmatprep.subr.mxu0 0.0
    %1726 = vmatpush1.msra.mxu0 %v383
    %1727 = vmatprep.subr.mxu0 0.0
    %1728 = vmatpush1.msra.mxu0 %v384
    %1729 = vmatprep.subr.mxu0 0.0
    %1730 = vmatpush1.msra.mxu0 %v385
    %1731 = vmatprep.subr.mxu0 0.0
    %1732 = vmatpush1.msra.mxu0 0.0
    %1733 = vmatprep.subr.mxu0 0.0
    %1734 = vmatpush1.msra.mxu0 0.0
    %1735 = vmatprep.subr.mxu0 0.0
    %1736 = vmatpush1.msra.mxu0 0.0
    %1737 = vmatprep.subr.mxu0 0.0
    %1738 = vmatpush1.msra.mxu0 0.0
    %1739 = vmatprep.subr.mxu0 0.0
    %1740 = vmatpush1.msra.mxu0 0.0
    %1741 = vmatprep.subr.mxu0 0.0
    %1742 = vmatpush1.msra.mxu0 0.0
    %1743 = vmatprep.subr.mxu0 0.0
    %1744 = vmatpush1.msra.mxu0 0.0
    %1745 = vmatprep.subr.mxu0 0.0
    %1746 = vmatpush1.msra.mxu0 0.0
    %1747 = vmatprep.subr.mxu0 0.0
    %1748 = vmatpush1.msra.mxu0 0.0
    %1749 = vmatprep.subr.mxu0 0.0
    %1750 = vmatpush1.msra.mxu0 0.0
    %1751 = vmatprep.subr.mxu0 0.0
    %1752 = vmatpush1.msra.mxu0 0.0
    %1753 = vmatprep.subr.mxu0 0.0
    %1754 = vmatpush1.msra.mxu0 0.0
    %1755 = vmatprep.subr.mxu0 0.0
    %1756 = vmatpush1.msra.mxu0 0.0
    %1757 = vmatprep.subr.mxu0 0.0
    %1758 = vmatpush1.msra.mxu0 0.0
    %1759 = vmatprep.subr.mxu0 0.0
    %1760 = vmatpush1.msra.mxu0 0.0
    %1761 = vmatprep.subr.mxu0 0.0
    %1762 = vmatpush1.msra.mxu0 0.0
    %1763 = vmatprep.subr.mxu0 0.0
    %1764 = vmatpush1.msra.mxu0 0.0
    %1765 = vmatprep.subr.mxu0 0.0
    %1766 = vmatpush1.msra.mxu0 0.0
    %1767 = vmatprep.subr.mxu0 0.0
    %1768 = vmatpush1.msra.mxu0 0.0
    %1769 = vmatprep.subr.mxu0 0.0
    %1770 = vmatpush1.msra.mxu0 0.0
    %1771 = vmatprep.subr.mxu0 0.0
    %1772 = vmatpush1.msra.mxu0 0.0
    %1773 = vmatprep.subr.mxu0 0.0
    %1774 = vmatpush1.msra.mxu0 0.0
    %1775 = vmatprep.subr.mxu0 0.0
    %1776 = vmatpush1.msra.mxu0 0.0
    %1777 = vmatprep.subr.mxu0 0.0
    %1778 = vmatpush1.msra.mxu0 0.0
    %1779 = vmatprep.subr.mxu0 0.0
    %1780 = vmatpush1.msra.mxu0 0.0
    %1781 = vmatprep.subr.mxu0 0.0
    %1782 = vmatpush1.msra.mxu0 0.0
    %1783 = vmatprep.subr.mxu0 0.0
    %1784 = vmatpush1.msra.mxu0 0.0
    %1785 = vmatprep.subr.mxu0 0.0
    %1786 = vmatpush1.msra.mxu0 0.0
    %1787 = vmatprep.mubr.f32.mxu0 0.0
    %1788 = vmatmul.mubr.f32.gmra.mrb[0].mxu0 %v1721
    %v1789 = vpop.f32.mrb[0].mxu0
    %v1790 = vadd.f32 0.0, %v1789
    %v1791 = vpop.f32.mrb[0].mxu0
    %1792 = vdwg.mxu0
    %1794 = vrot.lane.b32.xlu0 %v1717, 32
    %v1795 = vpop.permute.xlu0 %1794
    %v1796 = vsel %vm99, %v1795, 0
    %1798 = vmatprep.subr.mxu0 0.0
    %1799 = vmatpush1.msra.mxu0 %v456
    %1800 = vmatprep.subr.mxu0 0.0
    %1801 = vmatpush1.msra.mxu0 %v457
    %1802 = vmatprep.subr.mxu0 0.0
    %1803 = vmatpush1.msra.mxu0 %v458
    %1804 = vmatprep.subr.mxu0 0.0
    %1805 = vmatpush1.msra.mxu0 %v459
    %1806 = vmatprep.subr.mxu0 0.0
    %1807 = vmatpush1.msra.mxu0 0.0
    %1808 = vmatprep.subr.mxu0 0.0
    %1809 = vmatpush1.msra.mxu0 0.0
    %1810 = vmatprep.subr.mxu0 0.0
    %1811 = vmatpush1.msra.mxu0 0.0
    %1812 = vmatprep.subr.mxu0 0.0
    %1813 = vmatpush1.msra.mxu0 0.0
    %1814 = vmatprep.subr.mxu0 0.0
    %1815 = vmatpush1.msra.mxu0 0.0
    %1816 = vmatprep.subr.mxu0 0.0
    %1817 = vmatpush1.msra.mxu0 0.0
    %1818 = vmatprep.subr.mxu0 0.0
    %1819 = vmatpush1.msra.mxu0 0.0
    %1820 = vmatprep.subr.mxu0 0.0
    %1821 = vmatpush1.msra.mxu0 0.0
    %1822 = vmatprep.subr.mxu0 0.0
    %1823 = vmatpush1.msra.mxu0 0.0
    %1824 = vmatprep.subr.mxu0 0.0
    %1825 = vmatpush1.msra.mxu0 0.0
    %1826 = vmatprep.subr.mxu0 0.0
    %1827 = vmatpush1.msra.mxu0 0.0
    %1828 = vmatprep.subr.mxu0 0.0
    %1829 = vmatpush1.msra.mxu0 0.0
    %1830 = vmatprep.subr.mxu0 0.0
    %1831 = vmatpush1.msra.mxu0 0.0
    %1832 = vmatprep.subr.mxu0 0.0
    %1833 = vmatpush1.msra.mxu0 0.0
    %1834 = vmatprep.subr.mxu0 0.0
    %1835 = vmatpush1.msra.mxu0 0.0
    %1836 = vmatprep.subr.mxu0 0.0
    %1837 = vmatpush1.msra.mxu0 0.0
    %1838 = vmatprep.subr.mxu0 0.0
    %1839 = vmatpush1.msra.mxu0 0.0
    %1840 = vmatprep.subr.mxu0 0.0
    %1841 = vmatpush1.msra.mxu0 0.0
    %1842 = vmatprep.subr.mxu0 0.0
    %1843 = vmatpush1.msra.mxu0 0.0
    %1844 = vmatprep.subr.mxu0 0.0
    %1845 = vmatpush1.msra.mxu0 0.0
    %1846 = vmatprep.subr.mxu0 0.0
    %1847 = vmatpush1.msra.mxu0 0.0
    %1848 = vmatprep.subr.mxu0 0.0
    %1849 = vmatpush1.msra.mxu0 0.0
    %1850 = vmatprep.subr.mxu0 0.0
    %1851 = vmatpush1.msra.mxu0 0.0
    %1852 = vmatprep.subr.mxu0 0.0
    %1853 = vmatpush1.msra.mxu0 0.0
    %1854 = vmatprep.subr.mxu0 0.0
    %1855 = vmatpush1.msra.mxu0 0.0
    %1856 = vmatprep.subr.mxu0 0.0
    %1857 = vmatpush1.msra.mxu0 0.0
    %1858 = vmatprep.subr.mxu0 0.0
    %1859 = vmatpush1.msra.mxu0 0.0
    %1860 = vmatprep.subr.mxu0 0.0
    %1861 = vmatpush1.msra.mxu0 0.0
    %1862 = vmatprep.mubr.f32.mxu0 0.0
    %1863 = vmatmul.mubr.f32.gmra.mrb[0].mxu0 %v1796
    %v1864 = vpop.f32.mrb[0].mxu0
    %v1865 = vadd.f32 %v1790, %v1864
    %v1866 = vpop.f32.mrb[0].mxu0
    %1867 = vdwg.mxu0
    %v1868 = vadd.f32 %v1865, %v538
    %v1869 = vxor.u32 %v1868, 2147483648
    %v1870 = vmul.f32 %v1869, 1.442695
    %v1871 = vpow.pop %v1870
    %v1872 = vadd.f32 %v1871, 1.0
    %v1873 = vrcp.pop %v1872
    %v1874 = vmul.f32 1.0, %v1873
    %v1875 = vmul.f32 %v1874, %v33
    %v1876 = vsub.f32 %v1875, %v32
    %v1877 = vmul.f32 %v1876, %v1444
    %1879 = vrot.lane.b32.xlu0 %v1876, 64
    %v1880 = vpop.permute.xlu0 %1879
    %v1882 = vmul.f32 %v1876, %v1880
    %1884 = vrot.lane.b32.xlu0 %v1882, 32
    %v1885 = vpop.permute.xlu0 %1884
    %v1887 = vadd.f32 %v1877, %v1885
    %v1888 = vtanh.pop %v1887
    %1890 = vrot.lane.b32.xlu0 %v1888, 64
    %v1891 = vpop.permute.xlu0 %1890
    %v1893 = vmul.f32 %v1876, %v1891
    %1894 = vmatprep.subr.mxu0 0.0
    %1895 = vmatpush1.msra.mxu0 %v95
    %1896 = vmatprep.subr.mxu0 0.0
    %1897 = vmatpush1.msra.mxu0 %v96
    %1898 = vmatprep.subr.mxu0 0.0
    %1899 = vmatpush1.msra.mxu0 %v97
    %1900 = vmatprep.subr.mxu0 0.0
    %1901 = vmatpush1.msra.mxu0 %v98
    %1902 = vmatprep.subr.mxu0 0.0
    %1903 = vmatpush1.msra.mxu0 0.0
    %1904 = vmatprep.subr.mxu0 0.0
    %1905 = vmatpush1.msra.mxu0 0.0
    %1906 = vmatprep.subr.mxu0 0.0
    %1907 = vmatpush1.msra.mxu0 0.0
    %1908 = vmatprep.subr.mxu0 0.0
    %1909 = vmatpush1.msra.mxu0 0.0
    %1910 = vmatprep.subr.mxu0 0.0
    %1911 = vmatpush1.msra.mxu0 0.0
    %1912 = vmatprep.subr.mxu0 0.0
    %1913 = vmatpush1.msra.mxu0 0.0
    %1914 = vmatprep.subr.mxu0 0.0
    %1915 = vmatpush1.msra.mxu0 0.0
    %1916 = vmatprep.subr.mxu0 0.0
    %1917 = vmatpush1.msra.mxu0 0.0
    %1918 = vmatprep.subr.mxu0 0.0
    %1919 = vmatpush1.msra.mxu0 0.0
    %1920 = vmatprep.subr.mxu0 0.0
    %1921 = vmatpush1.msra.mxu0 0.0
    %1922 = vmatprep.subr.mxu0 0.0
    %1923 = vmatpush1.msra.mxu0 0.0
    %1924 = vmatprep.subr.mxu0 0.0
    %1925 = vmatpush1.msra.mxu0 0.0
    %1926 = vmatprep.subr.mxu0 0.0
    %1927 = vmatpush1.msra.mxu0 0.0
    %1928 = vmatprep.subr.mxu0 0.0
    %1929 = vmatpush1.msra.mxu0 0.0
    %1930 = vmatprep.subr.mxu0 0.0
    %1931 = vmatpush1.msra.mxu0 0.0
    %1932 = vmatprep.subr.mxu0 0.0
    %1933 = vmatpush1.msra.mxu0 0.0
    %1934 = vmatprep.subr.mxu0 0.0
    %1935 = vmatpush1.msra.mxu0 0.0
    %1936 = vmatprep.subr.mxu0 0.0
    %1937 = vmatpush1.msra.mxu0 0.0
    %1938 = vmatprep.subr.mxu0 0.0
    %1939 = vmatpush1.msra.mxu0 0.0
    %1940 = vmatprep.subr.mxu0 0.0
    %1941 = vmatpush1.msra.mxu0 0.0
    %1942 = vmatprep.subr.mxu0 0.0
    %1943 = vmatpush1.msra.mxu0 0.0
    %1944 = vmatprep.subr.mxu0 0.0
    %1945 = vmatpush1.msra.mxu0 0.0
    %1946 = vmatprep.subr.mxu0 0.0
    %1947 = vmatpush1.msra.mxu0 0.0
    %1948 = vmatprep.subr.mxu0 0.0
    %1949 = vmatpush1.msra.mxu0 0.0
    %1950 = vmatprep.subr.mxu0 0.0
    %1951 = vmatpush1.msra.mxu0 0.0
    %1952 = vmatprep.subr.mxu0 0.0
    %1953 = vmatpush1.msra.mxu0 0.0
    %1954 = vmatprep.subr.mxu0 0.0
    %1955 = vmatpush1.msra.mxu0 0.0
    %1956 = vmatprep.subr.mxu0 0.0
    %1957 = vmatpush1.msra.mxu0 0.0
    %1958 = vmatprep.mubr.f32.mxu0 0.0
    %1959 = vmatmul.mubr.f32.gmra.mrb[0].mxu0 %v1620
    %v1960 = vpop.f32.mrb[0].mxu0
    %v1961 = vadd.f32 0.0, %v1960
    %v1962 = vpop.f32.mrb[0].mxu0
    %1963 = vdwg.mxu0
    %v1964 = vadd.f32 %v76, %v1961
    %v1965 = vxor.u32 %v1964, 2147483648
    %v1966 = vmul.f32 %v1965, 1.442695
    %v1967 = vpow.pop %v1966
    %v1968 = vadd.f32 %v1967, 1.0
    %v1969 = vrcp.pop %v1968
    %v1970 = vmul.f32 1.0, %v1969
    %v1971 = vmul.f32 %v1970, %v33
    %v1972 = vsub.f32 %v1971, %v32
    %v1973 = vmul.f32 %v1972, %v1540
    %1975 = vrot.lane.b32.xlu0 %v1972, 64
    %v1976 = vpop.permute.xlu0 %1975
    %v1978 = vmul.f32 %v1972, %v1976
    %1980 = vrot.lane.b32.xlu0 %v1978, 32
    %v1981 = vpop.permute.xlu0 %1980
    %v1983 = vadd.f32 %v1973, %v1981
    %v1984 = vtanh.pop %v1983
    %1986 = vrot.lane.b32.xlu0 %v1984, 64
    %v1987 = vpop.permute.xlu0 %1986
    %v1989 = vmul.f32 %v1972, %v1987
    %1990 = vmatprep.subr.mxu0 0.0
    %1991 = vmatpush1.msra.mxu0 %v199
    %1992 = vmatprep.subr.mxu0 0.0
    %1993 = vmatpush1.msra.mxu0 %v200
    %1994 = vmatprep.subr.mxu0 0.0
    %1995 = vmatpush1.msra.mxu0 %v201
    %1996 = vmatprep.subr.mxu0 0.0
    %1997 = vmatpush1.msra.mxu0 %v202
    %1998 = vmatprep.subr.mxu0 0.0
    %1999 = vmatpush1.msra.mxu0 0.0
    %2000 = vmatprep.subr.mxu0 0.0
    %2001 = vmatpush1.msra.mxu0 0.0
    %2002 = vmatprep.subr.mxu0 0.0
    %2003 = vmatpush1.msra.mxu0 0.0
    %2004 = vmatprep.subr.mxu0 0.0
    %2005 = vmatpush1.msra.mxu0 0.0
    %2006 = vmatprep.subr.mxu0 0.0
    %2007 = vmatpush1.msra.mxu0 0.0
    %2008 = vmatprep.subr.mxu0 0.0
    %2009 = vmatpush1.msra.mxu0 0.0
    %2010 = vmatprep.subr.mxu0 0.0
    %2011 = vmatpush1.msra.mxu0 0.0
    %2012 = vmatprep.subr.mxu0 0.0
    %2013 = vmatpush1.msra.mxu0 0.0
    %2014 = vmatprep.subr.mxu0 0.0
    %2015 = vmatpush1.msra.mxu0 0.0
    %2016 = vmatprep.subr.mxu0 0.0
    %2017 = vmatpush1.msra.mxu0 0.0
    %2018 = vmatprep.subr.mxu0 0.0
    %2019 = vmatpush1.msra.mxu0 0.0
    %2020 = vmatprep.subr.mxu0 0.0
    %2021 = vmatpush1.msra.mxu0 0.0
    %2022 = vmatprep.subr.mxu0 0.0
    %2023 = vmatpush1.msra.mxu0 0.0
    %2024 = vmatprep.subr.mxu0 0.0
    %2025 = vmatpush1.msra.mxu0 0.0
    %2026 = vmatprep.subr.mxu0 0.0
    %2027 = vmatpush1.msra.mxu0 0.0
    %2028 = vmatprep.subr.mxu0 0.0
    %2029 = vmatpush1.msra.mxu0 0.0
    %2030 = vmatprep.subr.mxu0 0.0
    %2031 = vmatpush1.msra.mxu0 0.0
    %2032 = vmatprep.subr.mxu0 0.0
    %2033 = vmatpush1.msra.mxu0 0.0
    %2034 = vmatprep.subr.mxu0 0.0
    %2035 = vmatpush1.msra.mxu0 0.0
    %2036 = vmatprep.subr.mxu0 0.0
    %2037 = vmatpush1.msra.mxu0 0.0
    %2038 = vmatprep.subr.mxu0 0.0
    %2039 = vmatpush1.msra.mxu0 0.0
    %2040 = vmatprep.subr.mxu0 0.0
    %2041 = vmatpush1.msra.mxu0 0.0
    %2042 = vmatprep.subr.mxu0 0.0
    %2043 = vmatpush1.msra.mxu0 0.0
    %2044 = vmatprep.subr.mxu0 0.0
    %2045 = vmatpush1.msra.mxu0 0.0
    %2046 = vmatprep.subr.mxu0 0.0
    %2047 = vmatpush1.msra.mxu0 0.0
    %2048 = vmatprep.subr.mxu0 0.0
    %2049 = vmatpush1.msra.mxu0 0.0
    %2050 = vmatprep.subr.mxu0 0.0
    %2051 = vmatpush1.msra.mxu0 0.0
    %2052 = vmatprep.subr.mxu0 0.0
    %2053 = vmatpush1.msra.mxu0 0.0
    %2054 = vmatprep.mubr.f32.mxu0 0.0
    %2055 = vmatmul.mubr.f32.gmra.mrb[0].mxu0 %v1796
    %v2056 = vpop.f32.mrb[0].mxu0
    %v2057 = vadd.f32 0.0, %v2056
    %v2058 = vpop.f32.mrb[0].mxu0
    %2059 = vdwg.mxu0
    %2061 = vrot.lane.b32.xlu0 %v1989, 32
    %v2062 = vpop.permute.xlu0 %2061
    %v2063 = vsel %vm99, %v2062, 0
    %2065 = vmatprep.subr.mxu0 0.0
    %2066 = vmatpush1.msra.mxu0 %v273
    %2067 = vmatprep.subr.mxu0 0.0
    %2068 = vmatpush1.msra.mxu0 %v274
    %2069 = vmatprep.subr.mxu0 0.0
    %2070 = vmatpush1.msra.mxu0 %v275
    %2071 = vmatprep.subr.mxu0 0.0
    %2072 = vmatpush1.msra.mxu0 %v276
    %2073 = vmatprep.subr.mxu0 0.0
    %2074 = vmatpush1.msra.mxu0 0.0
    %2075 = vmatprep.subr.mxu0 0.0
    %2076 = vmatpush1.msra.mxu0 0.0
    %2077 = vmatprep.subr.mxu0 0.0
    %2078 = vmatpush1.msra.mxu0 0.0
    %2079 = vmatprep.subr.mxu0 0.0
    %2080 = vmatpush1.msra.mxu0 0.0
    %2081 = vmatprep.subr.mxu0 0.0
    %2082 = vmatpush1.msra.mxu0 0.0
    %2083 = vmatprep.subr.mxu0 0.0
    %2084 = vmatpush1.msra.mxu0 0.0
    %2085 = vmatprep.subr.mxu0 0.0
    %2086 = vmatpush1.msra.mxu0 0.0
    %2087 = vmatprep.subr.mxu0 0.0
    %2088 = vmatpush1.msra.mxu0 0.0
    %2089 = vmatprep.subr.mxu0 0.0
    %2090 = vmatpush1.msra.mxu0 0.0
    %2091 = vmatprep.subr.mxu0 0.0
    %2092 = vmatpush1.msra.mxu0 0.0
    %2093 = vmatprep.subr.mxu0 0.0
    %2094 = vmatpush1.msra.mxu0 0.0
    %2095 = vmatprep.subr.mxu0 0.0
    %2096 = vmatpush1.msra.mxu0 0.0
    %2097 = vmatprep.subr.mxu0 0.0
    %2098 = vmatpush1.msra.mxu0 0.0
    %2099 = vmatprep.subr.mxu0 0.0
    %2100 = vmatpush1.msra.mxu0 0.0
    %2101 = vmatprep.subr.mxu0 0.0
    %2102 = vmatpush1.msra.mxu0 0.0
    %2103 = vmatprep.subr.mxu0 0.0
    %2104 = vmatpush1.msra.mxu0 0.0
    %2105 = vmatprep.subr.mxu0 0.0
    %2106 = vmatpush1.msra.mxu0 0.0
    %2107 = vmatprep.subr.mxu0 0.0
    %2108 = vmatpush1.msra.mxu0 0.0
    %2109 = vmatprep.subr.mxu0 0.0
    %2110 = vmatpush1.msra.mxu0 0.0
    %2111 = vmatprep.subr.mxu0 0.0
    %2112 = vmatpush1.msra.mxu0 0.0
    %2113 = vmatprep.subr.mxu0 0.0
    %2114 = vmatpush1.msra.mxu0 0.0
    %2115 = vmatprep.subr.mxu0 0.0
    %2116 = vmatpush1.msra.mxu0 0.0
    %2117 = vmatprep.subr.mxu0 0.0
    %2118 = vmatpush1.msra.mxu0 0.0
    %2119 = vmatprep.subr.mxu0 0.0
    %2120 = vmatpush1.msra.mxu0 0.0
    %2121 = vmatprep.subr.mxu0 0.0
    %2122 = vmatpush1.msra.mxu0 0.0
    %2123 = vmatprep.subr.mxu0 0.0
    %2124 = vmatpush1.msra.mxu0 0.0
    %2125 = vmatprep.subr.mxu0 0.0
    %2126 = vmatpush1.msra.mxu0 0.0
    %2127 = vmatprep.subr.mxu0 0.0
    %2128 = vmatpush1.msra.mxu0 0.0
    %2129 = vmatprep.mubr.f32.mxu0 0.0
    %2130 = vmatmul.mubr.f32.gmra.mrb[0].mxu0 %v2063
    %v2131 = vpop.f32.mrb[0].mxu0
    %v2132 = vadd.f32 %v2057, %v2131
    %v2133 = vpop.f32.mrb[0].mxu0
    %2134 = vdwg.mxu0
    %v2135 = vadd.f32 %v2132, %v355
    %v2136 = vxor.u32 %v2135, 2147483648
    %v2137 = vmul.f32 %v2136, 1.442695
    %v2138 = vpow.pop %v2137
    %v2139 = vadd.f32 %v2138, 1.0
    %v2140 = vrcp.pop %v2139
    %v2141 = vmul.f32 1.0, %v2140
    %v2142 = vmul.f32 %v2141, %v33
    %v2143 = vsub.f32 %v2142, %v32
    %v2144 = vmul.f32 %v2143, %v1711
    %2146 = vrot.lane.b32.xlu0 %v2143, 64
    %v2147 = vpop.permute.xlu0 %2146
    %v2149 = vmul.f32 %v2143, %v2147
    %2151 = vrot.lane.b32.xlu0 %v2149, 32
    %v2152 = vpop.permute.xlu0 %2151
    %v2154 = vadd.f32 %v2144, %v2152
    %v2155 = vtanh.pop %v2154
    %2157 = vrot.lane.b32.xlu0 %v2155, 64
    %v2158 = vpop.permute.xlu0 %2157
    %v2160 = vmul.f32 %v2143, %v2158
    %2162 = vrot.lane.b32.xlu0 %v1893, 32
    %v2163 = vpop.permute.xlu0 %2162
    %v2164 = vsel %vm99, %v2163, 0
    %2166 = vmatprep.subr.mxu0 0.0
    %2167 = vmatpush1.msra.mxu0 %v382
    %2168 = vmatprep.subr.mxu0 0.0
    %2169 = vmatpush1.msra.mxu0 %v383
    %2170 = vmatprep.subr.mxu0 0.0
    %2171 = vmatpush1.msra.mxu0 %v384
    %2172 = vmatprep.subr.mxu0 0.0
    %2173 = vmatpush1.msra.mxu0 %v385
    %2174 = vmatprep.subr.mxu0 0.0
    %2175 = vmatpush1.msra.mxu0 0.0
    %2176 = vmatprep.subr.mxu0 0.0
    %2177 = vmatpush1.msra.mxu0 0.0
    %2178 = vmatprep.subr.mxu0 0.0
    %2179 = vmatpush1.msra.mxu0 0.0
    %2180 = vmatprep.subr.mxu0 0.0
    %2181 = vmatpush1.msra.mxu0 0.0
    %2182 = vmatprep.subr.mxu0 0.0
    %2183 = vmatpush1.msra.mxu0 0.0
    %2184 = vmatprep.subr.mxu0 0.0
    %2185 = vmatpush1.msra.mxu0 0.0
    %2186 = vmatprep.subr.mxu0 0.0
    %2187 = vmatpush1.msra.mxu0 0.0
    %2188 = vmatprep.subr.mxu0 0.0
    %2189 = vmatpush1.msra.mxu0 0.0
    %2190 = vmatprep.subr.mxu0 0.0
    %2191 = vmatpush1.msra.mxu0 0.0
    %2192 = vmatprep.subr.mxu0 0.0
    %2193 = vmatpush1.msra.mxu0 0.0
    %2194 = vmatprep.subr.mxu0 0.0
    %2195 = vmatpush1.msra.mxu0 0.0
    %2196 = vmatprep.subr.mxu0 0.0
    %2197 = vmatpush1.msra.mxu0 0.0
    %2198 = vmatprep.subr.mxu0 0.0
    %2199 = vmatpush1.msra.mxu0 0.0
    %2200 = vmatprep.subr.mxu0 0.0
    %2201 = vmatpush1.msra.mxu0 0.0
    %2202 = vmatprep.subr.mxu0 0.0
    %2203 = vmatpush1.msra.mxu0 0.0
    %2204 = vmatprep.subr.mxu0 0.0
    %2205 = vmatpush1.msra.mxu0 0.0
    %2206 = vmatprep.subr.mxu0 0.0
    %2207 = vmatpush1.msra.mxu0 0.0
    %2208 = vmatprep.subr.mxu0 0.0
    %2209 = vmatpush1.msra.mxu0 0.0
    %2210 = vmatprep.subr.mxu0 0.0
    %2211 = vmatpush1.msra.mxu0 0.0
    %2212 = vmatprep.subr.mxu0 0.0
    %2213 = vmatpush1.msra.mxu0 0.0
    %2214 = vmatprep.subr.mxu0 0.0
    %2215 = vmatpush1.msra.mxu0 0.0
    %2216 = vmatprep.subr.mxu0 0.0
    %2217 = vmatpush1.msra.mxu0 0.0
    %2218 = vmatprep.subr.mxu0 0.0
    %2219 = vmatpush1.msra.mxu0 0.0
    %2220 = vmatprep.subr.mxu0 0.0
    %2221 = vmatpush1.msra.mxu0 0.0
    %2222 = vmatprep.subr.mxu0 0.0
    %2223 = vmatpush1.msra.mxu0 0.0
    %2224 = vmatprep.subr.mxu0 0.0
    %2225 = vmatpush1.msra.mxu0 0.0
    %2226 = vmatprep.subr.mxu0 0.0
    %2227 = vmatpush1.msra.mxu0 0.0
    %2228 = vmatprep.subr.mxu0 0.0
    %2229 = vmatpush1.msra.mxu0 0.0
    %2230 = vmatprep.mubr.f32.mxu0 0.0
    %2231 = vmatmul.mubr.f32.gmra.mrb[0].mxu0 %v2164
    %v2232 = vpop.f32.mrb[0].mxu0
    %v2233 = vadd.f32 0.0, %v2232
    %v2234 = vpop.f32.mrb[0].mxu0
    %2235 = vdwg.mxu0
    %2237 = vrot.lane.b32.xlu0 %v2160, 32
    %v2238 = vpop.permute.xlu0 %2237
    %v2239 = vsel %vm99, %v2238, 0
    %2241 = vmatprep.subr.mxu0 0.0
    %2242 = vmatpush1.msra.mxu0 %v456
    %2243 = vmatprep.subr.mxu0 0.0
    %2244 = vmatpush1.msra.mxu0 %v457
    %2245 = vmatprep.subr.mxu0 0.0
    %2246 = vmatpush1.msra.mxu0 %v458
    %2247 = vmatprep.subr.mxu0 0.0
    %2248 = vmatpush1.msra.mxu0 %v459
    %2249 = vmatprep.subr.mxu0 0.0
    %2250 = vmatpush1.msra.mxu0 0.0
    %2251 = vmatprep.subr.mxu0 0.0
    %2252 = vmatpush1.msra.mxu0 0.0
    %2253 = vmatprep.subr.mxu0 0.0
    %2254 = vmatpush1.msra.mxu0 0.0
    %2255 = vmatprep.subr.mxu0 0.0
    %2256 = vmatpush1.msra.mxu0 0.0
    %2257 = vmatprep.subr.mxu0 0.0
    %2258 = vmatpush1.msra.mxu0 0.0
    %2259 = vmatprep.subr.mxu0 0.0
    %2260 = vmatpush1.msra.mxu0 0.0
    %2261 = vmatprep.subr.mxu0 0.0
    %2262 = vmatpush1.msra.mxu0 0.0
    %2263 = vmatprep.subr.mxu0 0.0
    %2264 = vmatpush1.msra.mxu0 0.0
    %2265 = vmatprep.subr.mxu0 0.0
    %2266 = vmatpush1.msra.mxu0 0.0
    %2267 = vmatprep.subr.mxu0 0.0
    %2268 = vmatpush1.msra.mxu0 0.0
    %2269 = vmatprep.subr.mxu0 0.0
    %2270 = vmatpush1.msra.mxu0 0.0
    %2271 = vmatprep.subr.mxu0 0.0
    %2272 = vmatpush1.msra.mxu0 0.0
    %2273 = vmatprep.subr.mxu0 0.0
    %2274 = vmatpush1.msra.mxu0 0.0
    %2275 = vmatprep.subr.mxu0 0.0
    %2276 = vmatpush1.msra.mxu0 0.0
    %2277 = vmatprep.subr.mxu0 0.0
    %2278 = vmatpush1.msra.mxu0 0.0
    %2279 = vmatprep.subr.mxu0 0.0
    %2280 = vmatpush1.msra.mxu0 0.0
    %2281 = vmatprep.subr.mxu0 0.0
    %2282 = vmatpush1.msra.mxu0 0.0
    %2283 = vmatprep.subr.mxu0 0.0
    %2284 = vmatpush1.msra.mxu0 0.0
    %2285 = vmatprep.subr.mxu0 0.0
    %2286 = vmatpush1.msra.mxu0 0.0
    %2287 = vmatprep.subr.mxu0 0.0
    %2288 = vmatpush1.msra.mxu0 0.0
    %2289 = vmatprep.subr.mxu0 0.0
    %2290 = vmatpush1.msra.mxu0 0.0
    %2291 = vmatprep.subr.mxu0 0.0
    %2292 = vmatpush1.msra.mxu0 0.0
    %2293 = vmatprep.subr.mxu0 0.0
    %2294 = vmatpush1.msra.mxu0 0.0
    %2295 = vmatprep.subr.mxu0 0.0
    %2296 = vmatpush1.msra.mxu0 0.0
    %2297 = vmatprep.subr.mxu0 0.0
    %2298 = vmatpush1.msra.mxu0 0.0
    %2299 = vmatprep.subr.mxu0 0.0
    %2300 = vmatpush1.msra.mxu0 0.0
    %2301 = vmatprep.subr.mxu0 0.0
    %2302 = vmatpush1.msra.mxu0 0.0
    %2303 = vmatprep.subr.mxu0 0.0
    %2304 = vmatpush1.msra.mxu0 0.0
    %2305 = vmatprep.mubr.f32.mxu0 0.0
    %2306 = vmatmul.mubr.f32.gmra.mrb[0].mxu0 %v2239
    %v2307 = vpop.f32.mrb[0].mxu0
    %v2308 = vadd.f32 %v2233, %v2307
    %v2309 = vpop.f32.mrb[0].mxu0
    %2310 = vdwg.mxu0
    %v2311 = vadd.f32 %v2308, %v538
    %v2312 = vxor.u32 %v2311, 2147483648
    %v2313 = vmul.f32 %v2312, 1.442695
    %v2314 = vpow.pop %v2313
    %v2315 = vadd.f32 %v2314, 1.0
    %v2316 = vrcp.pop %v2315
    %v2317 = vmul.f32 1.0, %v2316
    %v2318 = vmul.f32 %v2317, %v33
    %v2319 = vsub.f32 %v2318, %v32
    %v2320 = vmul.f32 %v2319, %v1887
    %2322 = vrot.lane.b32.xlu0 %v2319, 64
    %v2323 = vpop.permute.xlu0 %2322
    %v2325 = vmul.f32 %v2319, %v2323
    %2327 = vrot.lane.b32.xlu0 %v2325, 32
    %v2328 = vpop.permute.xlu0 %2327
    %v2330 = vadd.f32 %v2320, %v2328
    %v2331 = vtanh.pop %v2330
    %2333 = vrot.lane.b32.xlu0 %v2331, 64
    %v2334 = vpop.permute.xlu0 %2333
    %v2336 = vmul.f32 %v2319, %v2334
    %2337 = vmatprep.subr.mxu0 0.0
    %2338 = vmatpush1.msra.mxu0 %v95
    %2339 = vmatprep.subr.mxu0 0.0
    %2340 = vmatpush1.msra.mxu0 %v96
    %2341 = vmatprep.subr.mxu0 0.0
    %2342 = vmatpush1.msra.mxu0 %v97
    %2343 = vmatprep.subr.mxu0 0.0
    %2344 = vmatpush1.msra.mxu0 %v98
    %2345 = vmatprep.subr.mxu0 0.0
    %2346 = vmatpush1.msra.mxu0 0.0
    %2347 = vmatprep.subr.mxu0 0.0
    %2348 = vmatpush1.msra.mxu0 0.0
    %2349 = vmatprep.subr.mxu0 0.0
    %2350 = vmatpush1.msra.mxu0 0.0
    %2351 = vmatprep.subr.mxu0 0.0
    %2352 = vmatpush1.msra.mxu0 0.0
    %2353 = vmatprep.subr.mxu0 0.0
    %2354 = vmatpush1.msra.mxu0 0.0
    %2355 = vmatprep.subr.mxu0 0.0
    %2356 = vmatpush1.msra.mxu0 0.0
    %2357 = vmatprep.subr.mxu0 0.0
    %2358 = vmatpush1.msra.mxu0 0.0
    %2359 = vmatprep.subr.mxu0 0.0
    %2360 = vmatpush1.msra.mxu0 0.0
    %2361 = vmatprep.subr.mxu0 0.0
    %2362 = vmatpush1.msra.mxu0 0.0
    %2363 = vmatprep.subr.mxu0 0.0
    %2364 = vmatpush1.msra.mxu0 0.0
    %2365 = vmatprep.subr.mxu0 0.0
    %2366 = vmatpush1.msra.mxu0 0.0
    %2367 = vmatprep.subr.mxu0 0.0
    %2368 = vmatpush1.msra.mxu0 0.0
    %2369 = vmatprep.subr.mxu0 0.0
    %2370 = vmatpush1.msra.mxu0 0.0
    %2371 = vmatprep.subr.mxu0 0.0
    %2372 = vmatpush1.msra.mxu0 0.0
    %2373 = vmatprep.subr.mxu0 0.0
    %2374 = vmatpush1.msra.mxu0 0.0
    %2375 = vmatprep.subr.mxu0 0.0
    %2376 = vmatpush1.msra.mxu0 0.0
    %2377 = vmatprep.subr.mxu0 0.0
    %2378 = vmatpush1.msra.mxu0 0.0
    %2379 = vmatprep.subr.mxu0 0.0
    %2380 = vmatpush1.msra.mxu0 0.0
    %2381 = vmatprep.subr.mxu0 0.0
    %2382 = vmatpush1.msra.mxu0 0.0
    %2383 = vmatprep.subr.mxu0 0.0
    %2384 = vmatpush1.msra.mxu0 0.0
    %2385 = vmatprep.subr.mxu0 0.0
    %2386 = vmatpush1.msra.mxu0 0.0
    %2387 = vmatprep.subr.mxu0 0.0
    %2388 = vmatpush1.msra.mxu0 0.0
    %2389 = vmatprep.subr.mxu0 0.0
    %2390 = vmatpush1.msra.mxu0 0.0
    %2391 = vmatprep.subr.mxu0 0.0
    %2392 = vmatpush1.msra.mxu0 0.0
    %2393 = vmatprep.subr.mxu0 0.0
    %2394 = vmatpush1.msra.mxu0 0.0
    %2395 = vmatprep.subr.mxu0 0.0
    %2396 = vmatpush1.msra.mxu0 0.0
    %2397 = vmatprep.subr.mxu0 0.0
    %2398 = vmatpush1.msra.mxu0 0.0
    %2399 = vmatprep.subr.mxu0 0.0
    %2400 = vmatpush1.msra.mxu0 0.0
    %2401 = vmatprep.mubr.f32.mxu0 0.0
    %2402 = vmatmul.mubr.f32.gmra.mrb[0].mxu0 %v2063
    %v2403 = vpop.f32.mrb[0].mxu0
    %v2404 = vadd.f32 0.0, %v2403
    %v2405 = vpop.f32.mrb[0].mxu0
    %2406 = vdwg.mxu0
    %v2407 = vadd.f32 %v82, %v2404
    %v2408 = vxor.u32 %v2407, 2147483648
    %v2409 = vmul.f32 %v2408, 1.442695
    %v2410 = vpow.pop %v2409
    %v2411 = vadd.f32 %v2410, 1.0
    %v2412 = vrcp.pop %v2411
    %v2413 = vmul.f32 1.0, %v2412
    %v2414 = vmul.f32 %v2413, %v33
    %v2415 = vsub.f32 %v2414, %v32
    %v2416 = vmul.f32 %v2415, %v1983
    %2418 = vrot.lane.b32.xlu0 %v2415, 64
    %v2419 = vpop.permute.xlu0 %2418
    %v2421 = vmul.f32 %v2415, %v2419
    %2423 = vrot.lane.b32.xlu0 %v2421, 32
    %v2424 = vpop.permute.xlu0 %2423
    %v2426 = vadd.f32 %v2416, %v2424
    %v2427 = vtanh.pop %v2426
    %2429 = vrot.lane.b32.xlu0 %v2427, 64
    %v2430 = vpop.permute.xlu0 %2429
    %v2432 = vmul.f32 %v2415, %v2430
    %2433 = vmatprep.subr.mxu0 0.0
    %2434 = vmatpush1.msra.mxu0 %v199
    %2435 = vmatprep.subr.mxu0 0.0
    %2436 = vmatpush1.msra.mxu0 %v200
    %2437 = vmatprep.subr.mxu0 0.0
    %2438 = vmatpush1.msra.mxu0 %v201
    %2439 = vmatprep.subr.mxu0 0.0
    %2440 = vmatpush1.msra.mxu0 %v202
    %2441 = vmatprep.subr.mxu0 0.0
    %2442 = vmatpush1.msra.mxu0 0.0
    %2443 = vmatprep.subr.mxu0 0.0
    %2444 = vmatpush1.msra.mxu0 0.0
    %2445 = vmatprep.subr.mxu0 0.0
    %2446 = vmatpush1.msra.mxu0 0.0
    %2447 = vmatprep.subr.mxu0 0.0
    %2448 = vmatpush1.msra.mxu0 0.0
    %2449 = vmatprep.subr.mxu0 0.0
    %2450 = vmatpush1.msra.mxu0 0.0
    %2451 = vmatprep.subr.mxu0 0.0
    %2452 = vmatpush1.msra.mxu0 0.0
    %2453 = vmatprep.subr.mxu0 0.0
    %2454 = vmatpush1.msra.mxu0 0.0
    %2455 = vmatprep.subr.mxu0 0.0
    %2456 = vmatpush1.msra.mxu0 0.0
    %2457 = vmatprep.subr.mxu0 0.0
    %2458 = vmatpush1.msra.mxu0 0.0
    %2459 = vmatprep.subr.mxu0 0.0
    %2460 = vmatpush1.msra.mxu0 0.0
    %2461 = vmatprep.subr.mxu0 0.0
    %2462 = vmatpush1.msra.mxu0 0.0
    %2463 = vmatprep.subr.mxu0 0.0
    %2464 = vmatpush1.msra.mxu0 0.0
    %2465 = vmatprep.subr.mxu0 0.0
    %2466 = vmatpush1.msra.mxu0 0.0
    %2467 = vmatprep.subr.mxu0 0.0
    %2468 = vmatpush1.msra.mxu0 0.0
    %2469 = vmatprep.subr.mxu0 0.0
    %2470 = vmatpush1.msra.mxu0 0.0
    %2471 = vmatprep.subr.mxu0 0.0
    %2472 = vmatpush1.msra.mxu0 0.0
    %2473 = vmatprep.subr.mxu0 0.0
    %2474 = vmatpush1.msra.mxu0 0.0
    %2475 = vmatprep.subr.mxu0 0.0
    %2476 = vmatpush1.msra.mxu0 0.0
    %2477 = vmatprep.subr.mxu0 0.0
    %2478 = vmatpush1.msra.mxu0 0.0
    %2479 = vmatprep.subr.mxu0 0.0
    %2480 = vmatpush1.msra.mxu0 0.0
    %2481 = vmatprep.subr.mxu0 0.0
    %2482 = vmatpush1.msra.mxu0 0.0
    %2483 = vmatprep.subr.mxu0 0.0
    %2484 = vmatpush1.msra.mxu0 0.0
    %2485 = vmatprep.subr.mxu0 0.0
    %2486 = vmatpush1.msra.mxu0 0.0
    %2487 = vmatprep.subr.mxu0 0.0
    %2488 = vmatpush1.msra.mxu0 0.0
    %2489 = vmatprep.subr.mxu0 0.0
    %2490 = vmatpush1.msra.mxu0 0.0
    %2491 = vmatprep.subr.mxu0 0.0
    %2492 = vmatpush1.msra.mxu0 0.0
    %2493 = vmatprep.subr.mxu0 0.0
    %2494 = vmatpush1.msra.mxu0 0.0
    %2495 = vmatprep.subr.mxu0 0.0
    %2496 = vmatpush1.msra.mxu0 0.0
    %2497 = vmatprep.mubr.f32.mxu0 0.0
    %2498 = vmatmul.mubr.f32.gmra.mrb[0].mxu0 %v2239
    %v2499 = vpop.f32.mrb[0].mxu0
    %v2500 = vadd.f32 0.0, %v2499
    %v2501 = vpop.f32.mrb[0].mxu0
    %2502 = vdwg.mxu0
    %2504 = vrot.lane.b32.xlu0 %v2432, 32
    %v2505 = vpop.permute.xlu0 %2504
    %v2506 = vsel %vm99, %v2505, 0
    %2508 = vmatprep.subr.mxu0 0.0
    %2509 = vmatpush1.msra.mxu0 %v273
    %2510 = vmatprep.subr.mxu0 0.0
    %2511 = vmatpush1.msra.mxu0 %v274
    %2512 = vmatprep.subr.mxu0 0.0
    %2513 = vmatpush1.msra.mxu0 %v275
    %2514 = vmatprep.subr.mxu0 0.0
    %2515 = vmatpush1.msra.mxu0 %v276
    %2516 = vmatprep.subr.mxu0 0.0
    %2517 = vmatpush1.msra.mxu0 0.0
    %2518 = vmatprep.subr.mxu0 0.0
    %2519 = vmatpush1.msra.mxu0 0.0
    %2520 = vmatprep.subr.mxu0 0.0
    %2521 = vmatpush1.msra.mxu0 0.0
    %2522 = vmatprep.subr.mxu0 0.0
    %2523 = vmatpush1.msra.mxu0 0.0
    %2524 = vmatprep.subr.mxu0 0.0
    %2525 = vmatpush1.msra.mxu0 0.0
    %2526 = vmatprep.subr.mxu0 0.0
    %2527 = vmatpush1.msra.mxu0 0.0
    %2528 = vmatprep.subr.mxu0 0.0
    %2529 = vmatpush1.msra.mxu0 0.0
    %2530 = vmatprep.subr.mxu0 0.0
    %2531 = vmatpush1.msra.mxu0 0.0
    %2532 = vmatprep.subr.mxu0 0.0
    %2533 = vmatpush1.msra.mxu0 0.0
    %2534 = vmatprep.subr.mxu0 0.0
    %2535 = vmatpush1.msra.mxu0 0.0
    %2536 = vmatprep.subr.mxu0 0.0
    %2537 = vmatpush1.msra.mxu0 0.0
    %2538 = vmatprep.subr.mxu0 0.0
    %2539 = vmatpush1.msra.mxu0 0.0
    %2540 = vmatprep.subr.mxu0 0.0
    %2541 = vmatpush1.msra.mxu0 0.0
    %2542 = vmatprep.subr.mxu0 0.0
    %2543 = vmatpush1.msra.mxu0 0.0
    %2544 = vmatprep.subr.mxu0 0.0
    %2545 = vmatpush1.msra.mxu0 0.0
    %2546 = vmatprep.subr.mxu0 0.0
    %2547 = vmatpush1.msra.mxu0 0.0
    %2548 = vmatprep.subr.mxu0 0.0
    %2549 = vmatpush1.msra.mxu0 0.0
    %2550 = vmatprep.subr.mxu0 0.0
    %2551 = vmatpush1.msra.mxu0 0.0
    %2552 = vmatprep.subr.mxu0 0.0
    %2553 = vmatpush1.msra.mxu0 0.0
    %2554 = vmatprep.subr.mxu0 0.0
    %2555 = vmatpush1.msra.mxu0 0.0
    %2556 = vmatprep.subr.mxu0 0.0
    %2557 = vmatpush1.msra.mxu0 0.0
    %2558 = vmatprep.subr.mxu0 0.0
    %2559 = vmatpush1.msra.mxu0 0.0
    %2560 = vmatprep.subr.mxu0 0.0
    %2561 = vmatpush1.msra.mxu0 0.0
    %2562 = vmatprep.subr.mxu0 0.0
    %2563 = vmatpush1.msra.mxu0 0.0
    %2564 = vmatprep.subr.mxu0 0.0
    %2565 = vmatpush1.msra.mxu0 0.0
    %2566 = vmatprep.subr.mxu0 0.0
    %2567 = vmatpush1.msra.mxu0 0.0
    %2568 = vmatprep.subr.mxu0 0.0
    %2569 = vmatpush1.msra.mxu0 0.0
    %2570 = vmatprep.subr.mxu0 0.0
    %2571 = vmatpush1.msra.mxu0 0.0
    %2572 = vmatprep.mubr.f32.mxu0 0.0
    %2573 = vmatmul.mubr.f32.gmra.mrb[0].mxu0 %v2506
    %v2574 = vpop.f32.mrb[0].mxu0
    %v2575 = vadd.f32 %v2500, %v2574
    %v2576 = vpop.f32.mrb[0].mxu0
    %2577 = vdwg.mxu0
    %v2578 = vadd.f32 %v2575, %v355
    %v2579 = vxor.u32 %v2578, 2147483648
    %v2580 = vmul.f32 %v2579, 1.442695
    %v2581 = vpow.pop %v2580
    %v2582 = vadd.f32 %v2581, 1.0
    %v2583 = vrcp.pop %v2582
    %v2584 = vmul.f32 1.0, %v2583
    %v2585 = vmul.f32 %v2584, %v33
    %v2586 = vsub.f32 %v2585, %v32
    %v2587 = vmul.f32 %v2586, %v2154
    %2589 = vrot.lane.b32.xlu0 %v2586, 64
    %v2590 = vpop.permute.xlu0 %2589
    %v2592 = vmul.f32 %v2586, %v2590
    %2594 = vrot.lane.b32.xlu0 %v2592, 32
    %v2595 = vpop.permute.xlu0 %2594
    %v2597 = vadd.f32 %v2587, %v2595
    %v2598 = vtanh.pop %v2597
    %2600 = vrot.lane.b32.xlu0 %v2598, 64
    %v2601 = vpop.permute.xlu0 %2600
    %v2603 = vmul.f32 %v2586, %v2601
    %2605 = vrot.lane.b32.xlu0 %v2336, 32
    %v2606 = vpop.permute.xlu0 %2605
    %v2607 = vsel %vm99, %v2606, 0
    %2609 = vmatprep.subr.mxu0 0.0
    %2610 = vmatpush1.msra.mxu0 %v382
    %2611 = vmatprep.subr.mxu0 0.0
    %2612 = vmatpush1.msra.mxu0 %v383
    %2613 = vmatprep.subr.mxu0 0.0
    %2614 = vmatpush1.msra.mxu0 %v384
    %2615 = vmatprep.subr.mxu0 0.0
    %2616 = vmatpush1.msra.mxu0 %v385
    %2617 = vmatprep.subr.mxu0 0.0
    %2618 = vmatpush1.msra.mxu0 0.0
    %2619 = vmatprep.subr.mxu0 0.0
    %2620 = vmatpush1.msra.mxu0 0.0
    %2621 = vmatprep.subr.mxu0 0.0
    %2622 = vmatpush1.msra.mxu0 0.0
    %2623 = vmatprep.subr.mxu0 0.0
    %2624 = vmatpush1.msra.mxu0 0.0
    %2625 = vmatprep.subr.mxu0 0.0
    %2626 = vmatpush1.msra.mxu0 0.0
    %2627 = vmatprep.subr.mxu0 0.0
    %2628 = vmatpush1.msra.mxu0 0.0
    %2629 = vmatprep.subr.mxu0 0.0
    %2630 = vmatpush1.msra.mxu0 0.0
    %2631 = vmatprep.subr.mxu0 0.0
    %2632 = vmatpush1.msra.mxu0 0.0
    %2633 = vmatprep.subr.mxu0 0.0
    %2634 = vmatpush1.msra.mxu0 0.0
    %2635 = vmatprep.subr.mxu0 0.0
    %2636 = vmatpush1.msra.mxu0 0.0
    %2637 = vmatprep.subr.mxu0 0.0
    %2638 = vmatpush1.msra.mxu0 0.0
    %2639 = vmatprep.subr.mxu0 0.0
    %2640 = vmatpush1.msra.mxu0 0.0
    %2641 = vmatprep.subr.mxu0 0.0
    %2642 = vmatpush1.msra.mxu0 0.0
    %2643 = vmatprep.subr.mxu0 0.0
    %2644 = vmatpush1.msra.mxu0 0.0
    %2645 = vmatprep.subr.mxu0 0.0
    %2646 = vmatpush1.msra.mxu0 0.0
    %2647 = vmatprep.subr.mxu0 0.0
    %2648 = vmatpush1.msra.mxu0 0.0
    %2649 = vmatprep.subr.mxu0 0.0
    %2650 = vmatpush1.msra.mxu0 0.0
    %2651 = vmatprep.subr.mxu0 0.0
    %2652 = vmatpush1.msra.mxu0 0.0
    %2653 = vmatprep.subr.mxu0 0.0
    %2654 = vmatpush1.msra.mxu0 0.0
    %2655 = vmatprep.subr.mxu0 0.0
    %2656 = vmatpush1.msra.mxu0 0.0
    %2657 = vmatprep.subr.mxu0 0.0
    %2658 = vmatpush1.msra.mxu0 0.0
    %2659 = vmatprep.subr.mxu0 0.0
    %2660 = vmatpush1.msra.mxu0 0.0
    %2661 = vmatprep.subr.mxu0 0.0
    %2662 = vmatpush1.msra.mxu0 0.0
    %2663 = vmatprep.subr.mxu0 0.0
    %2664 = vmatpush1.msra.mxu0 0.0
    %2665 = vmatprep.subr.mxu0 0.0
    %2666 = vmatpush1.msra.mxu0 0.0
    %2667 = vmatprep.subr.mxu0 0.0
    %2668 = vmatpush1.msra.mxu0 0.0
    %2669 = vmatprep.subr.mxu0 0.0
    %2670 = vmatpush1.msra.mxu0 0.0
    %2671 = vmatprep.subr.mxu0 0.0
    %2672 = vmatpush1.msra.mxu0 0.0
    %2673 = vmatprep.mubr.f32.mxu0 0.0
    %2674 = vmatmul.mubr.f32.gmra.mrb[0].mxu0 %v2607
    %v2675 = vpop.f32.mrb[0].mxu0
    %v2676 = vadd.f32 0.0, %v2675
    %v2677 = vpop.f32.mrb[0].mxu0
    %2678 = vdwg.mxu0
    %2680 = vrot.lane.b32.xlu0 %v2603, 32
    %v2681 = vpop.permute.xlu0 %2680
    %v2682 = vsel %vm99, %v2681, 0
    %2684 = vmatprep.subr.mxu0 0.0
    %2685 = vmatpush1.msra.mxu0 %v456
    %2686 = vmatprep.subr.mxu0 0.0
    %2687 = vmatpush1.msra.mxu0 %v457
    %2688 = vmatprep.subr.mxu0 0.0
    %2689 = vmatpush1.msra.mxu0 %v458
    %2690 = vmatprep.subr.mxu0 0.0
    %2691 = vmatpush1.msra.mxu0 %v459
    %2692 = vmatprep.subr.mxu0 0.0
    %2693 = vmatpush1.msra.mxu0 0.0
    %2694 = vmatprep.subr.mxu0 0.0
    %2695 = vmatpush1.msra.mxu0 0.0
    %2696 = vmatprep.subr.mxu0 0.0
    %2697 = vmatpush1.msra.mxu0 0.0
    %2698 = vmatprep.subr.mxu0 0.0
    %2699 = vmatpush1.msra.mxu0 0.0
    %2700 = vmatprep.subr.mxu0 0.0
    %2701 = vmatpush1.msra.mxu0 0.0
    %2702 = vmatprep.subr.mxu0 0.0
    %2703 = vmatpush1.msra.mxu0 0.0
    %2704 = vmatprep.subr.mxu0 0.0
    %2705 = vmatpush1.msra.mxu0 0.0
    %2706 = vmatprep.subr.mxu0 0.0
    %2707 = vmatpush1.msra.mxu0 0.0
    %2708 = vmatprep.subr.mxu0 0.0
    %2709 = vmatpush1.msra.mxu0 0.0
    %2710 = vmatprep.subr.mxu0 0.0
    %2711 = vmatpush1.msra.mxu0 0.0
    %2712 = vmatprep.subr.mxu0 0.0
    %2713 = vmatpush1.msra.mxu0 0.0
    %2714 = vmatprep.subr.mxu0 0.0
    %2715 = vmatpush1.msra.mxu0 0.0
    %2716 = vmatprep.subr.mxu0 0.0
    %2717 = vmatpush1.msra.mxu0 0.0
    %2718 = vmatprep.subr.mxu0 0.0
    %2719 = vmatpush1.msra.mxu0 0.0
    %2720 = vmatprep.subr.mxu0 0.0
    %2721 = vmatpush1.msra.mxu0 0.0
    %2722 = vmatprep.subr.mxu0 0.0
    %2723 = vmatpush1.msra.mxu0 0.0
    %2724 = vmatprep.subr.mxu0 0.0
    %2725 = vmatpush1.msra.mxu0 0.0
    %2726 = vmatprep.subr.mxu0 0.0
    %2727 = vmatpush1.msra.mxu0 0.0
    %2728 = vmatprep.subr.mxu0 0.0
    %2729 = vmatpush1.msra.mxu0 0.0
    %2730 = vmatprep.subr.mxu0 0.0
    %2731 = vmatpush1.msra.mxu0 0.0
    %2732 = vmatprep.subr.mxu0 0.0
    %2733 = vmatpush1.msra.mxu0 0.0
    %2734 = vmatprep.subr.mxu0 0.0
    %2735 = vmatpush1.msra.mxu0 0.0
    %2736 = vmatprep.subr.mxu0 0.0
    %2737 = vmatpush1.msra.mxu0 0.0
    %2738 = vmatprep.subr.mxu0 0.0
    %2739 = vmatpush1.msra.mxu0 0.0
    %2740 = vmatprep.subr.mxu0 0.0
    %2741 = vmatpush1.msra.mxu0 0.0
    %2742 = vmatprep.subr.mxu0 0.0
    %2743 = vmatpush1.msra.mxu0 0.0
    %2744 = vmatprep.subr.mxu0 0.0
    %2745 = vmatpush1.msra.mxu0 0.0
    %2746 = vmatprep.subr.mxu0 0.0
    %2747 = vmatpush1.msra.mxu0 0.0
    %2748 = vmatprep.mubr.f32.mxu0 0.0
    %2749 = vmatmul.mubr.f32.gmra.mrb[0].mxu0 %v2682
    %v2750 = vpop.f32.mrb[0].mxu0
    %v2751 = vadd.f32 %v2676, %v2750
    %v2752 = vpop.f32.mrb[0].mxu0
    %2753 = vdwg.mxu0
    %v2754 = vadd.f32 %v2751, %v538
    %v2755 = vxor.u32 %v2754, 2147483648
    %v2756 = vmul.f32 %v2755, 1.442695
    %v2757 = vpow.pop %v2756
    %v2758 = vadd.f32 %v2757, 1.0
    %v2759 = vrcp.pop %v2758
    %v2760 = vmul.f32 1.0, %v2759
    %v2761 = vmul.f32 %v2760, %v33
    %v2762 = vsub.f32 %v2761, %v32
    %v2763 = vmul.f32 %v2762, %v2330
    %2765 = vrot.lane.b32.xlu0 %v2762, 64
    %v2766 = vpop.permute.xlu0 %2765
    %v2768 = vmul.f32 %v2762, %v2766
    %2770 = vrot.lane.b32.xlu0 %v2768, 32
    %v2771 = vpop.permute.xlu0 %2770
    %v2773 = vadd.f32 %v2763, %v2771
    %v2774 = vtanh.pop %v2773
    %2776 = vrot.lane.b32.xlu0 %v2774, 64
    %v2777 = vpop.permute.xlu0 %2776
    %v2779 = vmul.f32 %v2762, %v2777
    %2780 = vmatprep.subr.mxu0 0.0
    %2781 = vmatpush1.msra.mxu0 %v95
    %2782 = vmatprep.subr.mxu0 0.0
    %2783 = vmatpush1.msra.mxu0 %v96
    %2784 = vmatprep.subr.mxu0 0.0
    %2785 = vmatpush1.msra.mxu0 %v97
    %2786 = vmatprep.subr.mxu0 0.0
    %2787 = vmatpush1.msra.mxu0 %v98
    %2788 = vmatprep.subr.mxu0 0.0
    %2789 = vmatpush1.msra.mxu0 0.0
    %2790 = vmatprep.subr.mxu0 0.0
    %2791 = vmatpush1.msra.mxu0 0.0
    %2792 = vmatprep.subr.mxu0 0.0
    %2793 = vmatpush1.msra.mxu0 0.0
    %2794 = vmatprep.subr.mxu0 0.0
    %2795 = vmatpush1.msra.mxu0 0.0
    %2796 = vmatprep.subr.mxu0 0.0
    %2797 = vmatpush1.msra.mxu0 0.0
    %2798 = vmatprep.subr.mxu0 0.0
    %2799 = vmatpush1.msra.mxu0 0.0
    %2800 = vmatprep.subr.mxu0 0.0
    %2801 = vmatpush1.msra.mxu0 0.0
    %2802 = vmatprep.subr.mxu0 0.0
    %2803 = vmatpush1.msra.mxu0 0.0
    %2804 = vmatprep.subr.mxu0 0.0
    %2805 = vmatpush1.msra.mxu0 0.0
    %2806 = vmatprep.subr.mxu0 0.0
    %2807 = vmatpush1.msra.mxu0 0.0
    %2808 = vmatprep.subr.mxu0 0.0
    %2809 = vmatpush1.msra.mxu0 0.0
    %2810 = vmatprep.subr.mxu0 0.0
    %2811 = vmatpush1.msra.mxu0 0.0
    %2812 = vmatprep.subr.mxu0 0.0
    %2813 = vmatpush1.msra.mxu0 0.0
    %2814 = vmatprep.subr.mxu0 0.0
    %2815 = vmatpush1.msra.mxu0 0.0
    %2816 = vmatprep.subr.mxu0 0.0
    %2817 = vmatpush1.msra.mxu0 0.0
    %2818 = vmatprep.subr.mxu0 0.0
    %2819 = vmatpush1.msra.mxu0 0.0
    %2820 = vmatprep.subr.mxu0 0.0
    %2821 = vmatpush1.msra.mxu0 0.0
    %2822 = vmatprep.subr.mxu0 0.0
    %2823 = vmatpush1.msra.mxu0 0.0
    %2824 = vmatprep.subr.mxu0 0.0
    %2825 = vmatpush1.msra.mxu0 0.0
    %2826 = vmatprep.subr.mxu0 0.0
    %2827 = vmatpush1.msra.mxu0 0.0
    %2828 = vmatprep.subr.mxu0 0.0
    %2829 = vmatpush1.msra.mxu0 0.0
    %2830 = vmatprep.subr.mxu0 0.0
    %2831 = vmatpush1.msra.mxu0 0.0
    %2832 = vmatprep.subr.mxu0 0.0
    %2833 = vmatpush1.msra.mxu0 0.0
    %2834 = vmatprep.subr.mxu0 0.0
    %2835 = vmatpush1.msra.mxu0 0.0
    %2836 = vmatprep.subr.mxu0 0.0
    %2837 = vmatpush1.msra.mxu0 0.0
    %2838 = vmatprep.subr.mxu0 0.0
    %2839 = vmatpush1.msra.mxu0 0.0
    %2840 = vmatprep.subr.mxu0 0.0
    %2841 = vmatpush1.msra.mxu0 0.0
    %2842 = vmatprep.subr.mxu0 0.0
    %2843 = vmatpush1.msra.mxu0 0.0
    %2844 = vmatprep.mubr.f32.mxu0 0.0
    %2845 = vmatmul.mubr.f32.gmra.mrb[0].mxu0 %v2506
    %v2846 = vpop.f32.mrb[0].mxu0
    %v2847 = vadd.f32 0.0, %v2846
    %v2848 = vpop.f32.mrb[0].mxu0
    %2849 = vdwg.mxu0
    %v2850 = vadd.f32 %v88, %v2847
    %v2851 = vxor.u32 %v2850, 2147483648
    %v2852 = vmul.f32 %v2851, 1.442695
    %v2853 = vpow.pop %v2852
    %v2854 = vadd.f32 %v2853, 1.0
    %v2855 = vrcp.pop %v2854
    %v2856 = vmul.f32 1.0, %v2855
    %v2857 = vmul.f32 %v2856, %v33
    %v2858 = vsub.f32 %v2857, %v32
    %v2859 = vmul.f32 %v2858, %v2426
    %2861 = vrot.lane.b32.xlu0 %v2858, 64
    %v2862 = vpop.permute.xlu0 %2861
    %v2864 = vmul.f32 %v2858, %v2862
    %2866 = vrot.lane.b32.xlu0 %v2864, 32
    %v2867 = vpop.permute.xlu0 %2866
    %v2869 = vadd.f32 %v2859, %v2867
    %v2870 = vtanh.pop %v2869
    %2872 = vrot.lane.b32.xlu0 %v2870, 64
    %v2873 = vpop.permute.xlu0 %2872
    %v2875 = vmul.f32 %v2858, %v2873
    %2876 = vmatprep.subr.mxu0 0.0
    %2877 = vmatpush1.msra.mxu0 %v199
    %2878 = vmatprep.subr.mxu0 0.0
    %2879 = vmatpush1.msra.mxu0 %v200
    %2880 = vmatprep.subr.mxu0 0.0
    %2881 = vmatpush1.msra.mxu0 %v201
    %2882 = vmatprep.subr.mxu0 0.0
    %2883 = vmatpush1.msra.mxu0 %v202
    %2884 = vmatprep.subr.mxu0 0.0
    %2885 = vmatpush1.msra.mxu0 0.0
    %2886 = vmatprep.subr.mxu0 0.0
    %2887 = vmatpush1.msra.mxu0 0.0
    %2888 = vmatprep.subr.mxu0 0.0
    %2889 = vmatpush1.msra.mxu0 0.0
    %2890 = vmatprep.subr.mxu0 0.0
    %2891 = vmatpush1.msra.mxu0 0.0
    %2892 = vmatprep.subr.mxu0 0.0
    %2893 = vmatpush1.msra.mxu0 0.0
    %2894 = vmatprep.subr.mxu0 0.0
    %2895 = vmatpush1.msra.mxu0 0.0
    %2896 = vmatprep.subr.mxu0 0.0
    %2897 = vmatpush1.msra.mxu0 0.0
    %2898 = vmatprep.subr.mxu0 0.0
    %2899 = vmatpush1.msra.mxu0 0.0
    %2900 = vmatprep.subr.mxu0 0.0
    %2901 = vmatpush1.msra.mxu0 0.0
    %2902 = vmatprep.subr.mxu0 0.0
    %2903 = vmatpush1.msra.mxu0 0.0
    %2904 = vmatprep.subr.mxu0 0.0
    %2905 = vmatpush1.msra.mxu0 0.0
    %2906 = vmatprep.subr.mxu0 0.0
    %2907 = vmatpush1.msra.mxu0 0.0
    %2908 = vmatprep.subr.mxu0 0.0
    %2909 = vmatpush1.msra.mxu0 0.0
    %2910 = vmatprep.subr.mxu0 0.0
    %2911 = vmatpush1.msra.mxu0 0.0
    %2912 = vmatprep.subr.mxu0 0.0
    %2913 = vmatpush1.msra.mxu0 0.0
    %2914 = vmatprep.subr.mxu0 0.0
    %2915 = vmatpush1.msra.mxu0 0.0
    %2916 = vmatprep.subr.mxu0 0.0
    %2917 = vmatpush1.msra.mxu0 0.0
    %2918 = vmatprep.subr.mxu0 0.0
    %2919 = vmatpush1.msra.mxu0 0.0
    %2920 = vmatprep.subr.mxu0 0.0
    %2921 = vmatpush1.msra.mxu0 0.0
    %2922 = vmatprep.subr.mxu0 0.0
    %2923 = vmatpush1.msra.mxu0 0.0
    %2924 = vmatprep.subr.mxu0 0.0
    %2925 = vmatpush1.msra.mxu0 0.0
    %2926 = vmatprep.subr.mxu0 0.0
    %2927 = vmatpush1.msra.mxu0 0.0
    %2928 = vmatprep.subr.mxu0 0.0
    %2929 = vmatpush1.msra.mxu0 0.0
    %2930 = vmatprep.subr.mxu0 0.0
    %2931 = vmatpush1.msra.mxu0 0.0
    %2932 = vmatprep.subr.mxu0 0.0
    %2933 = vmatpush1.msra.mxu0 0.0
    %2934 = vmatprep.subr.mxu0 0.0
    %2935 = vmatpush1.msra.mxu0 0.0
    %2936 = vmatprep.subr.mxu0 0.0
    %2937 = vmatpush1.msra.mxu0 0.0
    %2938 = vmatprep.subr.mxu0 0.0
    %2939 = vmatpush1.msra.mxu0 0.0
    %2940 = vmatprep.mubr.f32.mxu0 0.0
    %2941 = vmatmul.mubr.f32.gmra.mrb[0].mxu0 %v2682
    %v2942 = vpop.f32.mrb[0].mxu0
    %v2943 = vadd.f32 0.0, %v2942
    %v2944 = vpop.f32.mrb[0].mxu0
    %2945 = vdwg.mxu0
    %2947 = vrot.lane.b32.xlu0 %v2875, 32
    %v2948 = vpop.permute.xlu0 %2947
    %v2949 = vsel %vm99, %v2948, 0
    %2951 = vmatprep.subr.mxu0 0.0
    %2952 = vmatpush1.msra.mxu0 %v273
    %2953 = vmatprep.subr.mxu0 0.0
    %2954 = vmatpush1.msra.mxu0 %v274
    %2955 = vmatprep.subr.mxu0 0.0
    %2956 = vmatpush1.msra.mxu0 %v275
    %2957 = vmatprep.subr.mxu0 0.0
    %2958 = vmatpush1.msra.mxu0 %v276
    %2959 = vmatprep.subr.mxu0 0.0
    %2960 = vmatpush1.msra.mxu0 0.0
    %2961 = vmatprep.subr.mxu0 0.0
    %2962 = vmatpush1.msra.mxu0 0.0
    %2963 = vmatprep.subr.mxu0 0.0
    %2964 = vmatpush1.msra.mxu0 0.0
    %2965 = vmatprep.subr.mxu0 0.0
    %2966 = vmatpush1.msra.mxu0 0.0
    %2967 = vmatprep.subr.mxu0 0.0
    %2968 = vmatpush1.msra.mxu0 0.0
    %2969 = vmatprep.subr.mxu0 0.0
    %2970 = vmatpush1.msra.mxu0 0.0
    %2971 = vmatprep.subr.mxu0 0.0
    %2972 = vmatpush1.msra.mxu0 0.0
    %2973 = vmatprep.subr.mxu0 0.0
    %2974 = vmatpush1.msra.mxu0 0.0
    %2975 = vmatprep.subr.mxu0 0.0
    %2976 = vmatpush1.msra.mxu0 0.0
    %2977 = vmatprep.subr.mxu0 0.0
    %2978 = vmatpush1.msra.mxu0 0.0
    %2979 = vmatprep.subr.mxu0 0.0
    %2980 = vmatpush1.msra.mxu0 0.0
    %2981 = vmatprep.subr.mxu0 0.0
    %2982 = vmatpush1.msra.mxu0 0.0
    %2983 = vmatprep.subr.mxu0 0.0
    %2984 = vmatpush1.msra.mxu0 0.0
    %2985 = vmatprep.subr.mxu0 0.0
    %2986 = vmatpush1.msra.mxu0 0.0
    %2987 = vmatprep.subr.mxu0 0.0
    %2988 = vmatpush1.msra.mxu0 0.0
    %2989 = vmatprep.subr.mxu0 0.0
    %2990 = vmatpush1.msra.mxu0 0.0
    %2991 = vmatprep.subr.mxu0 0.0
    %2992 = vmatpush1.msra.mxu0 0.0
    %2993 = vmatprep.subr.mxu0 0.0
    %2994 = vmatpush1.msra.mxu0 0.0
    %2995 = vmatprep.subr.mxu0 0.0
    %2996 = vmatpush1.msra.mxu0 0.0
    %2997 = vmatprep.subr.mxu0 0.0
    %2998 = vmatpush1.msra.mxu0 0.0
    %2999 = vmatprep.subr.mxu0 0.0
    %3000 = vmatpush1.msra.mxu0 0.0
    %3001 = vmatprep.subr.mxu0 0.0
    %3002 = vmatpush1.msra.mxu0 0.0
    %3003 = vmatprep.subr.mxu0 0.0
    %3004 = vmatpush1.msra.mxu0 0.0
    %3005 = vmatprep.subr.mxu0 0.0
    %3006 = vmatpush1.msra.mxu0 0.0
    %3007 = vmatprep.subr.mxu0 0.0
    %3008 = vmatpush1.msra.mxu0 0.0
    %3009 = vmatprep.subr.mxu0 0.0
    %3010 = vmatpush1.msra.mxu0 0.0
    %3011 = vmatprep.subr.mxu0 0.0
    %3012 = vmatpush1.msra.mxu0 0.0
    %3013 = vmatprep.subr.mxu0 0.0
    %3014 = vmatpush1.msra.mxu0 0.0
    %3015 = vmatprep.mubr.f32.mxu0 0.0
    %3016 = vmatmul.mubr.f32.gmra.mrb[0].mxu0 %v2949
    %v3017 = vpop.f32.mrb[0].mxu0
    %v3018 = vadd.f32 %v2943, %v3017
    %v3019 = vpop.f32.mrb[0].mxu0
    %3020 = vdwg.mxu0
    %v3021 = vadd.f32 %v3018, %v355
    %v3022 = vxor.u32 %v3021, 2147483648
    %v3023 = vmul.f32 %v3022, 1.442695
    %v3024 = vpow.pop %v3023
    %v3025 = vadd.f32 %v3024, 1.0
    %v3026 = vrcp.pop %v3025
    %v3027 = vmul.f32 1.0, %v3026
    %v3028 = vmul.f32 %v3027, %v33
    %v3029 = vsub.f32 %v3028, %v32
    %v3030 = vmul.f32 %v3029, %v2597
    %3032 = vrot.lane.b32.xlu0 %v3029, 64
    %v3033 = vpop.permute.xlu0 %3032
    %v3035 = vmul.f32 %v3029, %v3033
    %3037 = vrot.lane.b32.xlu0 %v3035, 32
    %v3038 = vpop.permute.xlu0 %3037
    %v3040 = vadd.f32 %v3030, %v3038
    %v3041 = vtanh.pop %v3040
    %3043 = vrot.lane.b32.xlu0 %v3041, 64
    %v3044 = vpop.permute.xlu0 %3043
    %v3046 = vmul.f32 %v3029, %v3044
    %3048 = vrot.lane.b32.xlu0 %v2779, 32
    %v3049 = vpop.permute.xlu0 %3048
    %v3050 = vsel %vm99, %v3049, 0
    %3052 = vmatprep.subr.mxu0 0.0
    %3053 = vmatpush1.msra.mxu0 %v382
    %3054 = vmatprep.subr.mxu0 0.0
    %3055 = vmatpush1.msra.mxu0 %v383
    %3056 = vmatprep.subr.mxu0 0.0
    %3057 = vmatpush1.msra.mxu0 %v384
    %3058 = vmatprep.subr.mxu0 0.0
    %3059 = vmatpush1.msra.mxu0 %v385
    %3060 = vmatprep.subr.mxu0 0.0
    %3061 = vmatpush1.msra.mxu0 0.0
    %3062 = vmatprep.subr.mxu0 0.0
    %3063 = vmatpush1.msra.mxu0 0.0
    %3064 = vmatprep.subr.mxu0 0.0
    %3065 = vmatpush1.msra.mxu0 0.0
    %3066 = vmatprep.subr.mxu0 0.0
    %3067 = vmatpush1.msra.mxu0 0.0
    %3068 = vmatprep.subr.mxu0 0.0
    %3069 = vmatpush1.msra.mxu0 0.0
    %3070 = vmatprep.subr.mxu0 0.0
    %3071 = vmatpush1.msra.mxu0 0.0
    %3072 = vmatprep.subr.mxu0 0.0
    %3073 = vmatpush1.msra.mxu0 0.0
    %3074 = vmatprep.subr.mxu0 0.0
    %3075 = vmatpush1.msra.mxu0 0.0
    %3076 = vmatprep.subr.mxu0 0.0
    %3077 = vmatpush1.msra.mxu0 0.0
    %3078 = vmatprep.subr.mxu0 0.0
    %3079 = vmatpush1.msra.mxu0 0.0
    %3080 = vmatprep.subr.mxu0 0.0
    %3081 = vmatpush1.msra.mxu0 0.0
    %3082 = vmatprep.subr.mxu0 0.0
    %3083 = vmatpush1.msra.mxu0 0.0
    %3084 = vmatprep.subr.mxu0 0.0
    %3085 = vmatpush1.msra.mxu0 0.0
    %3086 = vmatprep.subr.mxu0 0.0
    %3087 = vmatpush1.msra.mxu0 0.0
    %3088 = vmatprep.subr.mxu0 0.0
    %3089 = vmatpush1.msra.mxu0 0.0
    %3090 = vmatprep.subr.mxu0 0.0
    %3091 = vmatpush1.msra.mxu0 0.0
    %3092 = vmatprep.subr.mxu0 0.0
    %3093 = vmatpush1.msra.mxu0 0.0
    %3094 = vmatprep.subr.mxu0 0.0
    %3095 = vmatpush1.msra.mxu0 0.0
    %3096 = vmatprep.subr.mxu0 0.0
    %3097 = vmatpush1.msra.mxu0 0.0
    %3098 = vmatprep.subr.mxu0 0.0
    %3099 = vmatpush1.msra.mxu0 0.0
    %3100 = vmatprep.subr.mxu0 0.0
    %3101 = vmatpush1.msra.mxu0 0.0
    %3102 = vmatprep.subr.mxu0 0.0
    %3103 = vmatpush1.msra.mxu0 0.0
    %3104 = vmatprep.subr.mxu0 0.0
    %3105 = vmatpush1.msra.mxu0 0.0
    %3106 = vmatprep.subr.mxu0 0.0
    %3107 = vmatpush1.msra.mxu0 0.0
    %3108 = vmatprep.subr.mxu0 0.0
    %3109 = vmatpush1.msra.mxu0 0.0
    %3110 = vmatprep.subr.mxu0 0.0
    %3111 = vmatpush1.msra.mxu0 0.0
    %3112 = vmatprep.subr.mxu0 0.0
    %3113 = vmatpush1.msra.mxu0 0.0
    %3114 = vmatprep.subr.mxu0 0.0
    %3115 = vmatpush1.msra.mxu0 0.0
    %3116 = vmatprep.mubr.f32.mxu0 0.0
    %3117 = vmatmul.mubr.f32.gmra.mrb[0].mxu0 %v3050
    %v3118 = vpop.f32.mrb[0].mxu0
    %v3119 = vadd.f32 0.0, %v3118
    %v3120 = vpop.f32.mrb[0].mxu0
    %3121 = vdwg.mxu0
    %3123 = vrot.lane.b32.xlu0 %v3046, 32
    %v3124 = vpop.permute.xlu0 %3123
    %v3125 = vsel %vm99, %v3124, 0
    %3127 = vmatprep.subr.mxu0 0.0
    %3128 = vmatpush1.msra.mxu0 %v456
    %3129 = vmatprep.subr.mxu0 0.0
    %3130 = vmatpush1.msra.mxu0 %v457
    %3131 = vmatprep.subr.mxu0 0.0
    %3132 = vmatpush1.msra.mxu0 %v458
    %3133 = vmatprep.subr.mxu0 0.0
    %3134 = vmatpush1.msra.mxu0 %v459
    %3135 = vmatprep.subr.mxu0 0.0
    %3136 = vmatpush1.msra.mxu0 0.0
    %3137 = vmatprep.subr.mxu0 0.0
    %3138 = vmatpush1.msra.mxu0 0.0
    %3139 = vmatprep.subr.mxu0 0.0
    %3140 = vmatpush1.msra.mxu0 0.0
    %3141 = vmatprep.subr.mxu0 0.0
    %3142 = vmatpush1.msra.mxu0 0.0
    %3143 = vmatprep.subr.mxu0 0.0
    %3144 = vmatpush1.msra.mxu0 0.0
    %3145 = vmatprep.subr.mxu0 0.0
    %3146 = vmatpush1.msra.mxu0 0.0
    %3147 = vmatprep.subr.mxu0 0.0
    %3148 = vmatpush1.msra.mxu0 0.0
    %3149 = vmatprep.subr.mxu0 0.0
    %3150 = vmatpush1.msra.mxu0 0.0
    %3151 = vmatprep.subr.mxu0 0.0
    %3152 = vmatpush1.msra.mxu0 0.0
    %3153 = vmatprep.subr.mxu0 0.0
    %3154 = vmatpush1.msra.mxu0 0.0
    %3155 = vmatprep.subr.mxu0 0.0
    %3156 = vmatpush1.msra.mxu0 0.0
    %3157 = vmatprep.subr.mxu0 0.0
    %3158 = vmatpush1.msra.mxu0 0.0
    %3159 = vmatprep.subr.mxu0 0.0
    %3160 = vmatpush1.msra.mxu0 0.0
    %3161 = vmatprep.subr.mxu0 0.0
    %3162 = vmatpush1.msra.mxu0 0.0
    %3163 = vmatprep.subr.mxu0 0.0
    %3164 = vmatpush1.msra.mxu0 0.0
    %3165 = vmatprep.subr.mxu0 0.0
    %3166 = vmatpush1.msra.mxu0 0.0
    %3167 = vmatprep.subr.mxu0 0.0
    %3168 = vmatpush1.msra.mxu0 0.0
    %3169 = vmatprep.subr.mxu0 0.0
    %3170 = vmatpush1.msra.mxu0 0.0
    %3171 = vmatprep.subr.mxu0 0.0
    %3172 = vmatpush1.msra.mxu0 0.0
    %3173 = vmatprep.subr.mxu0 0.0
    %3174 = vmatpush1.msra.mxu0 0.0
    %3175 = vmatprep.subr.mxu0 0.0
    %3176 = vmatpush1.msra.mxu0 0.0
    %3177 = vmatprep.subr.mxu0 0.0
    %3178 = vmatpush1.msra.mxu0 0.0
    %3179 = vmatprep.subr.mxu0 0.0
    %3180 = vmatpush1.msra.mxu0 0.0
    %3181 = vmatprep.subr.mxu0 0.0
    %3182 = vmatpush1.msra.mxu0 0.0
    %3183 = vmatprep.subr.mxu0 0.0
    %3184 = vmatpush1.msra.mxu0 0.0
    %3185 = vmatprep.subr.mxu0 0.0
    %3186 = vmatpush1.msra.mxu0 0.0
    %3187 = vmatprep.subr.mxu0 0.0
    %3188 = vmatpush1.msra.mxu0 0.0
    %3189 = vmatprep.subr.mxu0 0.0
    %3190 = vmatpush1.msra.mxu0 0.0
    %3191 = vmatprep.mubr.f32.mxu0 0.0
    %3192 = vmatmul.mubr.f32.gmra.mrb[0].mxu0 %v3125
    %v3193 = vpop.f32.mrb[0].mxu0
    %v3194 = vadd.f32 %v3119, %v3193
    %v3195 = vpop.f32.mrb[0].mxu0
    %3196 = vdwg.mxu0
    %v3197 = vadd.f32 %v3194, %v538
    %v3198 = vxor.u32 %v3197, 2147483648
    %v3199 = vmul.f32 %v3198, 1.442695
    %v3200 = vpow.pop %v3199
    %v3201 = vadd.f32 %v3200, 1.0
    %v3202 = vrcp.pop %v3201
    %v3203 = vmul.f32 1.0, %v3202
    %v3204 = vmul.f32 %v3203, %v33
    %v3205 = vsub.f32 %v3204, %v32
    %v3206 = vmul.f32 %v3205, %v2773
    %3208 = vrot.lane.b32.xlu0 %v3205, 64
    %v3209 = vpop.permute.xlu0 %3208
    %v3211 = vmul.f32 %v3205, %v3209
    %3213 = vrot.lane.b32.xlu0 %v3211, 32
    %v3214 = vpop.permute.xlu0 %3213
    %v3216 = vadd.f32 %v3206, %v3214
    %v3217 = vtanh.pop %v3216
    %3219 = vrot.lane.b32.xlu0 %v3217, 64
    %v3220 = vpop.permute.xlu0 %3219
    %v3222 = vmul.f32 %v3205, %v3220
    %3223 = vmatprep.subr.mxu0 0.0
    %3224 = vmatpush1.msra.mxu0 %v95
    %3225 = vmatprep.subr.mxu0 0.0
    %3226 = vmatpush1.msra.mxu0 %v96
    %3227 = vmatprep.subr.mxu0 0.0
    %3228 = vmatpush1.msra.mxu0 %v97
    %3229 = vmatprep.subr.mxu0 0.0
    %3230 = vmatpush1.msra.mxu0 %v98
    %3231 = vmatprep.subr.mxu0 0.0
    %3232 = vmatpush1.msra.mxu0 0.0
    %3233 = vmatprep.subr.mxu0 0.0
    %3234 = vmatpush1.msra.mxu0 0.0
    %3235 = vmatprep.subr.mxu0 0.0
    %3236 = vmatpush1.msra.mxu0 0.0
    %3237 = vmatprep.subr.mxu0 0.0
    %3238 = vmatpush1.msra.mxu0 0.0
    %3239 = vmatprep.subr.mxu0 0.0
    %3240 = vmatpush1.msra.mxu0 0.0
    %3241 = vmatprep.subr.mxu0 0.0
    %3242 = vmatpush1.msra.mxu0 0.0
    %3243 = vmatprep.subr.mxu0 0.0
    %3244 = vmatpush1.msra.mxu0 0.0
    %3245 = vmatprep.subr.mxu0 0.0
    %3246 = vmatpush1.msra.mxu0 0.0
    %3247 = vmatprep.subr.mxu0 0.0
    %3248 = vmatpush1.msra.mxu0 0.0
    %3249 = vmatprep.subr.mxu0 0.0
    %3250 = vmatpush1.msra.mxu0 0.0
    %3251 = vmatprep.subr.mxu0 0.0
    %3252 = vmatpush1.msra.mxu0 0.0
    %3253 = vmatprep.subr.mxu0 0.0
    %3254 = vmatpush1.msra.mxu0 0.0
    %3255 = vmatprep.subr.mxu0 0.0
    %3256 = vmatpush1.msra.mxu0 0.0
    %3257 = vmatprep.subr.mxu0 0.0
    %3258 = vmatpush1.msra.mxu0 0.0
    %3259 = vmatprep.subr.mxu0 0.0
    %3260 = vmatpush1.msra.mxu0 0.0
    %3261 = vmatprep.subr.mxu0 0.0
    %3262 = vmatpush1.msra.mxu0 0.0
    %3263 = vmatprep.subr.mxu0 0.0
    %3264 = vmatpush1.msra.mxu0 0.0
    %3265 = vmatprep.subr.mxu0 0.0
    %3266 = vmatpush1.msra.mxu0 0.0
    %3267 = vmatprep.subr.mxu0 0.0
    %3268 = vmatpush1.msra.mxu0 0.0
    %3269 = vmatprep.subr.mxu0 0.0
    %3270 = vmatpush1.msra.mxu0 0.0
    %3271 = vmatprep.subr.mxu0 0.0
    %3272 = vmatpush1.msra.mxu0 0.0
    %3273 = vmatprep.subr.mxu0 0.0
    %3274 = vmatpush1.msra.mxu0 0.0
    %3275 = vmatprep.subr.mxu0 0.0
    %3276 = vmatpush1.msra.mxu0 0.0
    %3277 = vmatprep.subr.mxu0 0.0
    %3278 = vmatpush1.msra.mxu0 0.0
    %3279 = vmatprep.subr.mxu0 0.0
    %3280 = vmatpush1.msra.mxu0 0.0
    %3281 = vmatprep.subr.mxu0 0.0
    %3282 = vmatpush1.msra.mxu0 0.0
    %3283 = vmatprep.subr.mxu0 0.0
    %3284 = vmatpush1.msra.mxu0 0.0
    %3285 = vmatprep.subr.mxu0 0.0
    %3286 = vmatpush1.msra.mxu0 0.0
    %3287 = vmatprep.mubr.f32.mxu0 0.0
    %3288 = vmatmul.mubr.f32.gmra.mrb[0].mxu0 %v2949
    %v3289 = vpop.f32.mrb[0].mxu0
    %v3290 = vadd.f32 0.0, %v3289
    %v3291 = vpop.f32.mrb[0].mxu0
    %3292 = vdwg.mxu0
    %v3293 = vadd.f32 %v94, %v3290
    %v3294 = vxor.u32 %v3293, 2147483648
    %v3295 = vmul.f32 %v3294, 1.442695
    %v3296 = vpow.pop %v3295
    %v3297 = vadd.f32 %v3296, 1.0
    %v3298 = vrcp.pop %v3297
    %v3299 = vmul.f32 1.0, %v3298
    %v3300 = vmul.f32 %v3299, %v33
    %v3301 = vsub.f32 %v3300, %v32
    %v3302 = vmul.f32 %v3301, %v2869
    %3304 = vrot.lane.b32.xlu0 %v3301, 64
    %v3305 = vpop.permute.xlu0 %3304
    %v3307 = vmul.f32 %v3301, %v3305
    %3309 = vrot.lane.b32.xlu0 %v3307, 32
    %v3310 = vpop.permute.xlu0 %3309
    %v3312 = vadd.f32 %v3302, %v3310
    %v3313 = vtanh.pop %v3312
    %3315 = vrot.lane.b32.xlu0 %v3313, 64
    %v3316 = vpop.permute.xlu0 %3315
    %v3318 = vmul.f32 %v3301, %v3316
    %3319 = vmatprep.subr.mxu0 0.0
    %3320 = vmatpush1.msra.mxu0 %v199
    %3321 = vmatprep.subr.mxu0 0.0
    %3322 = vmatpush1.msra.mxu0 %v200
    %3323 = vmatprep.subr.mxu0 0.0
    %3324 = vmatpush1.msra.mxu0 %v201
    %3325 = vmatprep.subr.mxu0 0.0
    %3326 = vmatpush1.msra.mxu0 %v202
    %3327 = vmatprep.subr.mxu0 0.0
    %3328 = vmatpush1.msra.mxu0 0.0
    %3329 = vmatprep.subr.mxu0 0.0
    %3330 = vmatpush1.msra.mxu0 0.0
    %3331 = vmatprep.subr.mxu0 0.0
    %3332 = vmatpush1.msra.mxu0 0.0
    %3333 = vmatprep.subr.mxu0 0.0
    %3334 = vmatpush1.msra.mxu0 0.0
    %3335 = vmatprep.subr.mxu0 0.0
    %3336 = vmatpush1.msra.mxu0 0.0
    %3337 = vmatprep.subr.mxu0 0.0
    %3338 = vmatpush1.msra.mxu0 0.0
    %3339 = vmatprep.subr.mxu0 0.0
    %3340 = vmatpush1.msra.mxu0 0.0
    %3341 = vmatprep.subr.mxu0 0.0
    %3342 = vmatpush1.msra.mxu0 0.0
    %3343 = vmatprep.subr.mxu0 0.0
    %3344 = vmatpush1.msra.mxu0 0.0
    %3345 = vmatprep.subr.mxu0 0.0
    %3346 = vmatpush1.msra.mxu0 0.0
    %3347 = vmatprep.subr.mxu0 0.0
    %3348 = vmatpush1.msra.mxu0 0.0
    %3349 = vmatprep.subr.mxu0 0.0
    %3350 = vmatpush1.msra.mxu0 0.0
    %3351 = vmatprep.subr.mxu0 0.0
    %3352 = vmatpush1.msra.mxu0 0.0
    %3353 = vmatprep.subr.mxu0 0.0
    %3354 = vmatpush1.msra.mxu0 0.0
    %3355 = vmatprep.subr.mxu0 0.0
    %3356 = vmatpush1.msra.mxu0 0.0
    %3357 = vmatprep.subr.mxu0 0.0
    %3358 = vmatpush1.msra.mxu0 0.0
    %3359 = vmatprep.subr.mxu0 0.0
    %3360 = vmatpush1.msra.mxu0 0.0
    %3361 = vmatprep.subr.mxu0 0.0
    %3362 = vmatpush1.msra.mxu0 0.0
    %3363 = vmatprep.subr.mxu0 0.0
    %3364 = vmatpush1.msra.mxu0 0.0
    %3365 = vmatprep.subr.mxu0 0.0
    %3366 = vmatpush1.msra.mxu0 0.0
    %3367 = vmatprep.subr.mxu0 0.0
    %3368 = vmatpush1.msra.mxu0 0.0
    %3369 = vmatprep.subr.mxu0 0.0
    %3370 = vmatpush1.msra.mxu0 0.0
    %3371 = vmatprep.subr.mxu0 0.0
    %3372 = vmatpush1.msra.mxu0 0.0
    %3373 = vmatprep.subr.mxu0 0.0
    %3374 = vmatpush1.msra.mxu0 0.0
    %3375 = vmatprep.subr.mxu0 0.0
    %3376 = vmatpush1.msra.mxu0 0.0
    %3377 = vmatprep.subr.mxu0 0.0
    %3378 = vmatpush1.msra.mxu0 0.0
    %3379 = vmatprep.subr.mxu0 0.0
    %3380 = vmatpush1.msra.mxu0 0.0
    %3381 = vmatprep.subr.mxu0 0.0
    %3382 = vmatpush1.msra.mxu0 0.0
    %3383 = vmatprep.mubr.f32.mxu0 0.0
    %3384 = vmatmul.mubr.f32.gmra.mrb[0].mxu0 %v3125
    %v3385 = vpop.f32.mrb[0].mxu0
    %v3386 = vadd.f32 0.0, %v3385
    %v3387 = vpop.f32.mrb[0].mxu0
    %3388 = vdwg.mxu0
    %3390 = vrot.lane.b32.xlu0 %v3318, 32
    %v3391 = vpop.permute.xlu0 %3390
    %v3392 = vsel %vm99, %v3391, 0
    %3394 = vmatprep.subr.mxu0 0.0
    %3395 = vmatpush1.msra.mxu0 %v273
    %3396 = vmatprep.subr.mxu0 0.0
    %3397 = vmatpush1.msra.mxu0 %v274
    %3398 = vmatprep.subr.mxu0 0.0
    %3399 = vmatpush1.msra.mxu0 %v275
    %3400 = vmatprep.subr.mxu0 0.0
    %3401 = vmatpush1.msra.mxu0 %v276
    %3402 = vmatprep.subr.mxu0 0.0
    %3403 = vmatpush1.msra.mxu0 0.0
    %3404 = vmatprep.subr.mxu0 0.0
    %3405 = vmatpush1.msra.mxu0 0.0
    %3406 = vmatprep.subr.mxu0 0.0
    %3407 = vmatpush1.msra.mxu0 0.0
    %3408 = vmatprep.subr.mxu0 0.0
    %3409 = vmatpush1.msra.mxu0 0.0
    %3410 = vmatprep.subr.mxu0 0.0
    %3411 = vmatpush1.msra.mxu0 0.0
    %3412 = vmatprep.subr.mxu0 0.0
    %3413 = vmatpush1.msra.mxu0 0.0
    %3414 = vmatprep.subr.mxu0 0.0
    %3415 = vmatpush1.msra.mxu0 0.0
    %3416 = vmatprep.subr.mxu0 0.0
    %3417 = vmatpush1.msra.mxu0 0.0
    %3418 = vmatprep.subr.mxu0 0.0
    %3419 = vmatpush1.msra.mxu0 0.0
    %3420 = vmatprep.subr.mxu0 0.0
    %3421 = vmatpush1.msra.mxu0 0.0
    %3422 = vmatprep.subr.mxu0 0.0
    %3423 = vmatpush1.msra.mxu0 0.0
    %3424 = vmatprep.subr.mxu0 0.0
    %3425 = vmatpush1.msra.mxu0 0.0
    %3426 = vmatprep.subr.mxu0 0.0
    %3427 = vmatpush1.msra.mxu0 0.0
    %3428 = vmatprep.subr.mxu0 0.0
    %3429 = vmatpush1.msra.mxu0 0.0
    %3430 = vmatprep.subr.mxu0 0.0
    %3431 = vmatpush1.msra.mxu0 0.0
    %3432 = vmatprep.subr.mxu0 0.0
    %3433 = vmatpush1.msra.mxu0 0.0
    %3434 = vmatprep.subr.mxu0 0.0
    %3435 = vmatpush1.msra.mxu0 0.0
    %3436 = vmatprep.subr.mxu0 0.0
    %3437 = vmatpush1.msra.mxu0 0.0
    %3438 = vmatprep.subr.mxu0 0.0
    %3439 = vmatpush1.msra.mxu0 0.0
    %3440 = vmatprep.subr.mxu0 0.0
    %3441 = vmatpush1.msra.mxu0 0.0
    %3442 = vmatprep.subr.mxu0 0.0
    %3443 = vmatpush1.msra.mxu0 0.0
    %3444 = vmatprep.subr.mxu0 0.0
    %3445 = vmatpush1.msra.mxu0 0.0
    %3446 = vmatprep.subr.mxu0 0.0
    %3447 = vmatpush1.msra.mxu0 0.0
    %3448 = vmatprep.subr.mxu0 0.0
    %3449 = vmatpush1.msra.mxu0 0.0
    %3450 = vmatprep.subr.mxu0 0.0
    %3451 = vmatpush1.msra.mxu0 0.0
    %3452 = vmatprep.subr.mxu0 0.0
    %3453 = vmatpush1.msra.mxu0 0.0
    %3454 = vmatprep.subr.mxu0 0.0
    %3455 = vmatpush1.msra.mxu0 0.0
    %3456 = vmatprep.subr.mxu0 0.0
    %3457 = vmatpush1.msra.mxu0 0.0
    %3458 = vmatprep.mubr.f32.mxu0 0.0
    %3459 = vmatmul.mubr.f32.gmra.mrb[0].mxu0 %v3392
    %v3460 = vpop.f32.mrb[0].mxu0
    %v3461 = vadd.f32 %v3386, %v3460
    %v3462 = vpop.f32.mrb[0].mxu0
    %3463 = vdwg.mxu0
    %v3464 = vadd.f32 %v3461, %v355
    %v3465 = vxor.u32 %v3464, 2147483648
    %v3466 = vmul.f32 %v3465, 1.442695
    %v3467 = vpow.pop %v3466
    %v3468 = vadd.f32 %v3467, 1.0
    %v3469 = vrcp.pop %v3468
    %v3470 = vmul.f32 1.0, %v3469
    %v3471 = vmul.f32 %v3470, %v33
    %v3472 = vsub.f32 %v3471, %v32
    %v3473 = vmul.f32 %v3472, %v3040
    %3475 = vrot.lane.b32.xlu0 %v3472, 64
    %v3476 = vpop.permute.xlu0 %3475
    %v3478 = vmul.f32 %v3472, %v3476
    %3480 = vrot.lane.b32.xlu0 %v3478, 32
    %v3481 = vpop.permute.xlu0 %3480
    %v3483 = vadd.f32 %v3473, %v3481
    %v3484 = vtanh.pop %v3483
    %3486 = vrot.lane.b32.xlu0 %v3484, 64
    %v3487 = vpop.permute.xlu0 %3486
    %v3489 = vmul.f32 %v3472, %v3487
    %3491 = vrot.lane.b32.xlu0 %v3222, 32
    %v3492 = vpop.permute.xlu0 %3491
    %v3493 = vsel %vm99, %v3492, 0
    %3495 = vmatprep.subr.mxu0 0.0
    %3496 = vmatpush1.msra.mxu0 %v382
    %3497 = vmatprep.subr.mxu0 0.0
    %3498 = vmatpush1.msra.mxu0 %v383
    %3499 = vmatprep.subr.mxu0 0.0
    %3500 = vmatpush1.msra.mxu0 %v384
    %3501 = vmatprep.subr.mxu0 0.0
    %3502 = vmatpush1.msra.mxu0 %v385
    %3503 = vmatprep.subr.mxu0 0.0
    %3504 = vmatpush1.msra.mxu0 0.0
    %3505 = vmatprep.subr.mxu0 0.0
    %3506 = vmatpush1.msra.mxu0 0.0
    %3507 = vmatprep.subr.mxu0 0.0
    %3508 = vmatpush1.msra.mxu0 0.0
    %3509 = vmatprep.subr.mxu0 0.0
    %3510 = vmatpush1.msra.mxu0 0.0
    %3511 = vmatprep.subr.mxu0 0.0
    %3512 = vmatpush1.msra.mxu0 0.0
    %3513 = vmatprep.subr.mxu0 0.0
    %3514 = vmatpush1.msra.mxu0 0.0
    %3515 = vmatprep.subr.mxu0 0.0
    %3516 = vmatpush1.msra.mxu0 0.0
    %3517 = vmatprep.subr.mxu0 0.0
    %3518 = vmatpush1.msra.mxu0 0.0
    %3519 = vmatprep.subr.mxu0 0.0
    %3520 = vmatpush1.msra.mxu0 0.0
    %3521 = vmatprep.subr.mxu0 0.0
    %3522 = vmatpush1.msra.mxu0 0.0
    %3523 = vmatprep.subr.mxu0 0.0
    %3524 = vmatpush1.msra.mxu0 0.0
    %3525 = vmatprep.subr.mxu0 0.0
    %3526 = vmatpush1.msra.mxu0 0.0
    %3527 = vmatprep.subr.mxu0 0.0
    %3528 = vmatpush1.msra.mxu0 0.0
    %3529 = vmatprep.subr.mxu0 0.0
    %3530 = vmatpush1.msra.mxu0 0.0
    %3531 = vmatprep.subr.mxu0 0.0
    %3532 = vmatpush1.msra.mxu0 0.0
    %3533 = vmatprep.subr.mxu0 0.0
    %3534 = vmatpush1.msra.mxu0 0.0
    %3535 = vmatprep.subr.mxu0 0.0
    %3536 = vmatpush1.msra.mxu0 0.0
    %3537 = vmatprep.subr.mxu0 0.0
    %3538 = vmatpush1.msra.mxu0 0.0
    %3539 = vmatprep.subr.mxu0 0.0
    %3540 = vmatpush1.msra.mxu0 0.0
    %3541 = vmatprep.subr.mxu0 0.0
    %3542 = vmatpush1.msra.mxu0 0.0
    %3543 = vmatprep.subr.mxu0 0.0
    %3544 = vmatpush1.msra.mxu0 0.0
    %3545 = vmatprep.subr.mxu0 0.0
    %3546 = vmatpush1.msra.mxu0 0.0
    %3547 = vmatprep.subr.mxu0 0.0
    %3548 = vmatpush1.msra.mxu0 0.0
    %3549 = vmatprep.subr.mxu0 0.0
    %3550 = vmatpush1.msra.mxu0 0.0
    %3551 = vmatprep.subr.mxu0 0.0
    %3552 = vmatpush1.msra.mxu0 0.0
    %3553 = vmatprep.subr.mxu0 0.0
    %3554 = vmatpush1.msra.mxu0 0.0
    %3555 = vmatprep.subr.mxu0 0.0
    %3556 = vmatpush1.msra.mxu0 0.0
    %3557 = vmatprep.subr.mxu0 0.0
    %3558 = vmatpush1.msra.mxu0 0.0
    %3559 = vmatprep.mubr.f32.mxu0 0.0
    %3560 = vmatmul.mubr.f32.gmra.mrb[0].mxu0 %v3493
    %v3561 = vpop.f32.mrb[0].mxu0
    %v3562 = vadd.f32 0.0, %v3561
    %v3563 = vpop.f32.mrb[0].mxu0
    %3564 = vdwg.mxu0
    %3566 = vrot.lane.b32.xlu0 %v3489, 32
    %v3567 = vpop.permute.xlu0 %3566
    %v3568 = vsel %vm99, %v3567, 0
    %3570 = vmatprep.subr.mxu0 0.0
    %3571 = vmatpush1.msra.mxu0 %v456
    %3572 = vmatprep.subr.mxu0 0.0
    %3573 = vmatpush1.msra.mxu0 %v457
    %3574 = vmatprep.subr.mxu0 0.0
    %3575 = vmatpush1.msra.mxu0 %v458
    %3576 = vmatprep.subr.mxu0 0.0
    %3577 = vmatpush1.msra.mxu0 %v459
    %3578 = vmatprep.subr.mxu0 0.0
    %3579 = vmatpush1.msra.mxu0 0.0
    %3580 = vmatprep.subr.mxu0 0.0
    %3581 = vmatpush1.msra.mxu0 0.0
    %3582 = vmatprep.subr.mxu0 0.0
    %3583 = vmatpush1.msra.mxu0 0.0
    %3584 = vmatprep.subr.mxu0 0.0
    %3585 = vmatpush1.msra.mxu0 0.0
    %3586 = vmatprep.subr.mxu0 0.0
    %3587 = vmatpush1.msra.mxu0 0.0
    %3588 = vmatprep.subr.mxu0 0.0
    %3589 = vmatpush1.msra.mxu0 0.0
    %3590 = vmatprep.subr.mxu0 0.0
    %3591 = vmatpush1.msra.mxu0 0.0
    %3592 = vmatprep.subr.mxu0 0.0
    %3593 = vmatpush1.msra.mxu0 0.0
    %3594 = vmatprep.subr.mxu0 0.0
    %3595 = vmatpush1.msra.mxu0 0.0
    %3596 = vmatprep.subr.mxu0 0.0
    %3597 = vmatpush1.msra.mxu0 0.0
    %3598 = vmatprep.subr.mxu0 0.0
    %3599 = vmatpush1.msra.mxu0 0.0
    %3600 = vmatprep.subr.mxu0 0.0
    %3601 = vmatpush1.msra.mxu0 0.0
    %3602 = vmatprep.subr.mxu0 0.0
    %3603 = vmatpush1.msra.mxu0 0.0
    %3604 = vmatprep.subr.mxu0 0.0
    %3605 = vmatpush1.msra.mxu0 0.0
    %3606 = vmatprep.subr.mxu0 0.0
    %3607 = vmatpush1.msra.mxu0 0.0
    %3608 = vmatprep.subr.mxu0 0.0
    %3609 = vmatpush1.msra.mxu0 0.0
    %3610 = vmatprep.subr.mxu0 0.0
    %3611 = vmatpush1.msra.mxu0 0.0
    %3612 = vmatprep.subr.mxu0 0.0
    %3613 = vmatpush1.msra.mxu0 0.0
    %3614 = vmatprep.subr.mxu0 0.0
    %3615 = vmatpush1.msra.mxu0 0.0
    %3616 = vmatprep.subr.mxu0 0.0
    %3617 = vmatpush1.msra.mxu0 0.0
    %3618 = vmatprep.subr.mxu0 0.0
    %3619 = vmatpush1.msra.mxu0 0.0
    %3620 = vmatprep.subr.mxu0 0.0
    %3621 = vmatpush1.msra.mxu0 0.0
    %3622 = vmatprep.subr.mxu0 0.0
    %3623 = vmatpush1.msra.mxu0 0.0
    %3624 = vmatprep.subr.mxu0 0.0
    %3625 = vmatpush1.msra.mxu0 0.0
    %3626 = vmatprep.subr.mxu0 0.0
    %3627 = vmatpush1.msra.mxu0 0.0
    %3628 = vmatprep.subr.mxu0 0.0
    %3629 = vmatpush1.msra.mxu0 0.0
    %3630 = vmatprep.subr.mxu0 0.0
    %3631 = vmatpush1.msra.mxu0 0.0
    %3632 = vmatprep.subr.mxu0 0.0
    %3633 = vmatpush1.msra.mxu0 0.0
    %3634 = vmatprep.mubr.f32.mxu0 0.0
    %3635 = vmatmul.mubr.f32.gmra.mrb[0].mxu0 %v3568
    %v3636 = vpop.f32.mrb[0].mxu0
    %v3637 = vadd.f32 %v3562, %v3636
    %v3638 = vpop.f32.mrb[0].mxu0
    %3639 = vdwg.mxu0
    %v3640 = vadd.f32 %v3637, %v538
    %v3641 = vxor.u32 %v3640, 2147483648
    %v3642 = vmul.f32 %v3641, 1.442695
    %v3643 = vpow.pop %v3642
    %v3644 = vadd.f32 %v3643, 1.0
    %v3645 = vrcp.pop %v3644
    %v3646 = vmul.f32 1.0, %v3645
    %v3647 = vmul.f32 %v3646, %v33
    %v3648 = vsub.f32 %v3647, %v32
    %v3649 = vmul.f32 %v3648, %v3216
    %3651 = vrot.lane.b32.xlu0 %v3648, 64
    %v3652 = vpop.permute.xlu0 %3651
    %v3654 = vmul.f32 %v3648, %v3652
    %3656 = vrot.lane.b32.xlu0 %v3654, 32
    %v3657 = vpop.permute.xlu0 %3656
    %v3659 = vadd.f32 %v3649, %v3657
    %v3660 = vtanh.pop %v3659
    %3662 = vrot.lane.b32.xlu0 %v3660, 64
    %v3663 = vpop.permute.xlu0 %3662
    %v3665 = vmul.f32 %v3648, %v3663
    %v3666 = vld [vmem:[#allocation2 + $0x4] sm:$0x1]
    %v3667 = vld [vmem:[#allocation2 + $0x5] sm:$0x1]
    %v3668 = vlaneseq
    %v3669 = vshrl.u32 %v3668, 7
    %v3670 = vsub.s32 0, %v3669
    %v3671 = vrot.slane %v3666, %v3670
    %3673 = vrot.lane.b32.xlu0 %v3671, 96
    %v3674 = vpop.permute.xlu0 %3673
    %v3676 = vmul.f32 %v3665, %v3674
    %3678 = vrot.lane.b32.xlu0 %v3676, 32
    %v3679 = vpop.permute.xlu0 %3678
    %vm3681 = vcmask 254976
    %v3682 = vsel %vm3681, %v3679, 0.0
    %3683 = vadd.xlane.f32.xlu0 %v3682
    %v3684 = vpop.xlane.xlu0 %3683
    %v3685 = vlaneseq
    %v3686 = vshrl.u32 %v3685, 7
    %v3687 = vsub.s32 0, %v3686
    %v3688 = vrot.slane %v3667, %v3687
    %v3689 = vadd.f32 %v3684, %v3688
    %vm3690 = vcmask 1024
    %3691 = vst.msk [vmem:[%s2] sm:$0x3] %vm3690, %v3689
    // Predicated region
    $region14: #{lstm_forward.1} parent=1 // pred_check
      _
    $region15: #{lstm_forward.1} parent=1 // pred_check_branch
      %3693 = sbr.rel (0) target = $region17
    $region16: #{lstm_forward.1} parent=1 // pred_region
      _
    $region17: #{lstm_forward.1} parent=1 // pred_fallthru
      _
    // Predicated region
    $region18: #{lstm_forward.1} parent=1 // pred_check
      _
    $region19: #{lstm_forward.1} parent=1 // pred_check_branch
      %3695 = sbr.rel (0) target = $region21
    $region20: #{lstm_forward.1} parent=1 // pred_region
      _
    $region21: #{lstm_forward.1} parent=1 // pred_fallthru
      _
    %3696 = vsyncpa [#allocation3], 1

</llo_original>
